<compile_context>
chip_gen: v6e
topology: v6e:2x2x1
jax: 0.10.0
libtpu: 0.0.40
codegen_flags: <defaults>
</compile_context>

<pallas_src>
import functools

import jax
import jax.numpy as jnp
from jax import lax
from jax.experimental import pallas as pl
from jax.experimental.pallas import tpu as pltpu

_EPS = 1e-5  # nn.LayerNorm default eps


def _residual_block_kernel(
    x_ref,      # (C, BL)   f32 activations, lane index = n*L + l
    lnp_ref,    # (R, BL)   f32: rows 0..5 = (g1,b1,g2,b2,g3,b3); rows 6.. = tap masks
    selT_ref,   # (BL, Bp)  bf16 0/1 lane->segment selector
    sel_ref,    # (Bp, BL)  bf16 0/1 segment->lane selector
    w1_ref,     # (interm, C+8)          bf16, bias folded into first augmented column
    w2_ref,     # (interm, k*interm+8)   bf16, dilated taps stacked along K, bias folded
    w3_ref,     # (out, interm+8)        bf16, bias folded
    o_ref,      # (C, BL)
    *, kernel_size, dilation, causal, inv_len,
):
    x = x_ref[...]
    lnp = lnp_ref[...]
    selT = selT_ref[...]
    sel = sel_ref[...]
    bl = x.shape[1]

    # Augmentation block used to fold the conv biases into the matmuls:
    # row 0 = ones (picks up the bias column), rows 1..7 = zeros (keeps K % 8 == 0).
    aug = (lax.broadcasted_iota(jnp.int32, (8, bl), 0) == 0).astype(jnp.bfloat16)

    def split(a):
        # 2-term bf16 hi/lo decomposition (captures ~16 mantissa bits of the f32).
        hi = a.astype(jnp.bfloat16)
        lo = (a - hi.astype(jnp.float32)).astype(jnp.bfloat16)
        return hi, lo

    def ln_relu(h, g, b):
        # LayerNorm over each length-L lane segment, fused with the ReLU.
        # Mean and E[h^2] come from ONE factored reduce-dot against the 0/1
        # segment selector (exact in bf16); the hi/lo split keeps the statistic
        # at ~f32 accuracy using plain single-pass bf16 MXU dots.
        c = h.shape[0]
        hh = jnp.concatenate([h, h * h], axis=0)                       # (2c, BL)
        hh_hi, hh_lo = split(hh)
        sums = (jnp.dot(hh_hi, selT, preferred_element_type=jnp.float32)
                + jnp.dot(hh_lo, selT, preferred_element_type=jnp.float32))  # (2c, Bp)
        means = sums * inv_len
        mu = means[:c]
        var = means[c:] - mu * mu
        inv = lax.rsqrt(var + _EPS)                                    # per-segment (tiny EUP cost)
        coef = jnp.concatenate([inv, mu * inv], axis=0)                # (2c, Bp)
        co_hi, co_lo = split(coef)
        bc = (jnp.dot(co_hi, sel, preferred_element_type=jnp.float32)
              + jnp.dot(co_lo, sel, preferred_element_type=jnp.float32))     # (2c, BL)
        out = (h * bc[:c] - bc[c:]) * g + b
        return jnp.maximum(out, 0.0)

    # --- layernorm1 -> relu -> conv1 (1x1 conv == channel matmul, bf16 on MXU) ---
    a1 = ln_relu(x, lnp[0:1], lnp[1:2]).astype(jnp.bfloat16)
    h1 = jnp.dot(w1_ref[...], jnp.concatenate([a1, aug], axis=0),
                 preferred_element_type=jnp.float32)                   # (interm, BL)

    # --- layernorm2 -> relu -> MaskedConv1d: k dilated/causal taps fused in one dot ---
    a2 = ln_relu(h1, lnp[2:3], lnp[3:4])
    pad = (kernel_size - 1) * dilation
    if not causal:
        pad //= 2
    taps = []
    mrow = 6
    for j in range(kernel_size):                                       # static taps
        s = pad - j * dilation                                         # shift along l inside each segment
        if s == 0:
            t = a2
        else:
            rolled = pltpu.roll(a2, shift=s % bl, axis=1)              # wraparound lands on masked lanes
            t = rolled * lnp[mrow:mrow + 1]                            # precomputed 0/1 validity mask
            mrow += 1
        taps.append(t.astype(jnp.bfloat16))
    a2s = jnp.concatenate(taps + [aug], axis=0)                        # (k*interm+8, BL)
    h2 = jnp.dot(w2_ref[...], a2s, preferred_element_type=jnp.float32)  # (interm, BL)

    # --- layernorm3 -> relu -> conv3 (1x1) ---
    a3 = ln_relu(h2, lnp[4:5], lnp[5:6]).astype(jnp.bfloat16)
    h3 = jnp.dot(w3_ref[...], jnp.concatenate([a3, aug], axis=0),
                 preferred_element_type=jnp.float32)                   # (out, BL)

    # --- residual add (lane-dense, full-width store) ---
    o_ref[...] = (h3 + x).astype(o_ref.dtype)


def residual_block(x, params, *, kernel_size=3, dilation=1, causal=True, block_batch=None):
    (g1, b1, w1, cb1, g2, b2, w2, cb2, g3, b3, w3, cb3) = params
    N, C, L = x.shape
    interm = w1.shape[0]
    out_ch = w3.shape[0]

    # Constraints implied by the literal PyTorch module (LayerNorm over last axis of NCL).
    assert C == w1.shape[1], "conv1 expects dim 1 == in_channels"
    assert L == g1.shape[0] == g2.shape[0] == g3.shape[0], \
        "literal module requires seq_len == in_channels == interm_channels"
    assert out_ch == C, "residual add requires out_channels == in_channels"
    assert w2.shape == (interm, interm, kernel_size) and w3.shape[1] == interm

    # --- pick how many batch elements to pack into the lane axis per grid step ---
    if block_batch is None:
        cands = [b for b in range(1, N + 1)
                 if N % b == 0 and (N // b == 1 or (b * L) % 128 == 0)]

        def score(b):
            bl = b * L
            steps = N // b
            # Prefer: >=2 grid steps (v7x megacore can split the parallel axis),
            # then a lane block <= 1024, then the fattest such block.
            return (steps >= 2, bl <= 1024, bl if bl <= 1024 else -bl)

        B = max(cands, key=score)
    else:
        B = block_batch
        assert N % B == 0 and (N // B == 1 or (B * L) % 128 == 0)
    BL = B * L
    n_steps = N // B

    # --- layout plumbing (wrapper side, no compute): (N, C, L) -> (C, N*L), lane = n*L + l ---
    x2 = jnp.transpose(x, (1, 0, 2)).reshape(C, N * L)

    # --- LN affine params tiled over the packed batch + precomputed per-tap masks ---
    l_idx = jnp.tile(jnp.arange(L), B)
    rows = [jnp.tile(g1, B), jnp.tile(b1, B),
            jnp.tile(g2, B), jnp.tile(b2, B),
            jnp.tile(g3, B), jnp.tile(b3, B)]
    pad = (kernel_size - 1) * dilation
    if not causal:
        pad //= 2
    # TODO(synk): non-causal even-kernel configs follow PyTorch's asymmetric pad/truncate
    # convention only where it coincides with the symmetric one; causal odd-k is exact.
    for j in range(kernel_size):
        s = pad - j * dilation
        if s == 0:
            continue
        rows.append((l_idx >= s) if s > 0 else (l_idx < L + s))
    while len(rows) % 8:
        rows.append(jnp.zeros((BL,)))
    lnp = jnp.stack([r.astype(jnp.float32) for r in rows])              # (R, BL)

    # --- factored segment selector (entries 0/1, exact in bf16) ---
    Bp = max(8, ((B + 7) // 8) * 8)
    seg = jnp.arange(BL) // L
    sel = (jnp.arange(Bp)[:, None] == seg[None, :]).astype(jnp.bfloat16)  # (Bp, BL)
    selT = sel.T                                                          # (BL, Bp)

    # --- conv weights: 1x1 convs as 2-D mats; conv2 taps stacked along K; biases folded ---
    def fold_bias(wmat, bias):
        o = wmat.shape[0]
        extra = jnp.zeros((o, 8), wmat.dtype).at[:, 0].set(bias)
        return jnp.concatenate([wmat, extra], axis=1).astype(jnp.bfloat16)

    w2m = jnp.transpose(w2, (0, 2, 1)).reshape(interm, kernel_size * interm)
    w1a = fold_bias(w1[:, :, 0], cb1)        # (interm, C+8)
    w2a = fold_bias(w2m, cb2)                # (interm, k*interm+8)
    w3a = fold_bias(w3[:, :, 0], cb3)        # (out,    interm+8)

    kernel = functools.partial(
        _residual_block_kernel, kernel_size=kernel_size, dilation=dilation,
        causal=causal, inv_len=1.0 / L)

    def rep(shape):   # parameter broadcast to every grid step (full block)
        nd = len(shape)
        return pl.BlockSpec(shape, lambda i: (0,) * nd)

    out2 = pl.pallas_call(
        kernel,
        out_shape=jax.ShapeDtypeStruct((C, N * L), x.dtype),
        grid=(n_steps,),
        in_specs=[
            pl.BlockSpec((C, BL), lambda i: (0, i)),
            rep(lnp.shape), rep(selT.shape), rep(sel.shape),
            rep(w1a.shape), rep(w2a.shape), rep(w3a.shape),
        ],
        out_specs=pl.BlockSpec((C, BL), lambda i: (0, i)),
        compiler_params=pltpu.CompilerParams(dimension_semantics=("parallel",)),
    )(x2, lnp, selT, sel, w1a, w2a, w3a)

    # Layout plumbing back to NCL.
    return out2.reshape(C, N, L).transpose(1, 0, 2)


def residual_block_reference(x, params, *, kernel_size=3, dilation=1, causal=True):
    # Pure-JAX f32 reference mirroring the PyTorch forward literally.
    (g1, b1, w1, cb1, g2, b2, w2, cb2, g3, b3, w3, cb3) = params
    N, C, L = x.shape
    relu = jax.nn.relu

    def ln(h, g, b):
        mu = h.mean(-1, keepdims=True)
        var = ((h - mu) ** 2).mean(-1, keepdims=True)
        return (h - mu) / jnp.sqrt(var + _EPS) * g + b

    out = relu(ln(x, g1, b1))
    out = jnp.einsum('oc,ncl->nol', w1[:, :, 0], out,
                     precision=lax.Precision.HIGHEST) + cb1[None, :, None]
    out = relu(ln(out, g2, b2))
    pad = (kernel_size - 1) * dilation
    if not causal:
        pad = pad // 2
    conv = lax.conv_general_dilated(
        out, w2, window_strides=(1,), padding=[(pad, pad)],
        rhs_dilation=(dilation,), dimension_numbers=('NCH', 'OIH', 'NCH'),
        precision=lax.Precision.HIGHEST)
    out = conv[:, :, :L] + cb2[None, :, None]     # MaskedConv1d truncation
    out = relu(ln(out, g3, b3))
    out = jnp.einsum('oc,ncl->nol', w3[:, :, 0], out,
                     precision=lax.Precision.HIGHEST) + cb3[None, :, None]
    return out + x


if __name__ == "__main__":
    key = jax.random.PRNGKey(0)
    N = 64                                           # 32 packed per grid step -> 2 parallel 512-lane steps
    in_channels = interm_channels = out_channels = 16
    L = 16                                           # literal module: seq_len == channels
    kernel_size, dilation, causal = 3, 1, True

    keys = jax.random.split(key, 13)
    x = jax.random.normal(keys[0], (N, in_channels, L), jnp.float32)

    def uinit(k, shape, fan_in):   # PyTorch conv default: U(-1/sqrt(fan_in), 1/sqrt(fan_in))
        bound = 1.0 / (fan_in ** 0.5)
        return jax.random.uniform(k, shape, jnp.float32, -bound, bound)

    # LayerNorm affine randomized slightly so the affine path is exercised.
    g1 = 1.0 + 0.1 * jax.random.normal(keys[1], (in_channels,), jnp.float32)
    b1 = 0.1 * jax.random.normal(keys[2], (in_channels,), jnp.float32)
    g2 = 1.0 + 0.1 * jax.random.normal(keys[3], (interm_channels,), jnp.float32)
    b2 = 0.1 * jax.random.normal(keys[4], (interm_channels,), jnp.float32)
    g3 = 1.0 + 0.1 * jax.random.normal(keys[5], (interm_channels,), jnp.float32)
    b3 = 0.1 * jax.random.normal(keys[6], (interm_channels,), jnp.float32)

    w1 = uinit(keys[7], (interm_channels, in_channels, 1), in_channels)
    cb1 = uinit(keys[8], (interm_channels,), in_channels)
    w2 = uinit(keys[9], (interm_channels, interm_channels, kernel_size),
               interm_channels * kernel_size)
    cb2 = uinit(keys[10], (interm_channels,), interm_channels * kernel_size)
    w3 = uinit(keys[11], (out_channels, interm_channels, 1), interm_channels)
    cb3 = uinit(keys[12], (out_channels,), interm_channels)

    params = (g1, b1, w1, cb1, g2, b2, w2, cb2, g3, b3, w3, cb3)

    out = residual_block(x, params, kernel_size=kernel_size, dilation=dilation, causal=causal)
    out = jax.block_until_ready(out)

    ref = residual_block_reference(x, params, kernel_size=kernel_size,
                                   dilation=dilation, causal=causal)
    assert out.shape == ref.shape and out.dtype == ref.dtype
    err = jnp.abs(out - ref)
    max_err = float(jnp.max(err))
    mean_err = float(jnp.mean(err))
    # Kernel uses bf16-multiply / f32-accumulate conv matmuls (LN stats are ~f32 via the
    # hi/lo split) vs an f32 HIGHEST reference: tight on average, looser on the worst element.
    assert mean_err < 2e-2 and max_err < 1e-1, f"mean {mean_err:.3e}, max {max_err:.3e}"
    print("KERNEL_OK")
</pallas_src>

<mosaic_0001>
module attributes {stable_mosaic.version = 11 : i64} {
  func.func @_residual_block_kernel(%arg0: i32, %arg1: memref<16x512xf32, #tpu.memory_space<vmem>>, %arg2: memref<8x512xf32, #tpu.memory_space<vmem>>, %arg3: memref<512x32xbf16, #tpu.memory_space<vmem>>, %arg4: memref<32x512xbf16, #tpu.memory_space<vmem>>, %arg5: memref<16x24xbf16, #tpu.memory_space<vmem>>, %arg6: memref<16x56xbf16, #tpu.memory_space<vmem>>, %arg7: memref<16x24xbf16, #tpu.memory_space<vmem>>, %arg8: memref<16x512xf32, #tpu.memory_space<vmem>>) attributes {dimension_semantics = [#tpu.dimension_semantics<parallel>], iteration_bounds = array<i64: 2>, scalar_prefetch = 0 : i64, scratch_operands = 0 : i64, tpu.core_type = #tpu.core_type<tc>, window_params = [{transform_indices = @transform_0, window_bounds = array<i64: 16, 512>}, {pipeline_mode = #tpu.pipeline_mode<synchronous>, transform_indices = @transform_1, window_bounds = array<i64: 8, 512>}, {pipeline_mode = #tpu.pipeline_mode<synchronous>, transform_indices = @transform_2, window_bounds = array<i64: 512, 32>}, {pipeline_mode = #tpu.pipeline_mode<synchronous>, transform_indices = @transform_3, window_bounds = array<i64: 32, 512>}, {pipeline_mode = #tpu.pipeline_mode<synchronous>, transform_indices = @transform_4, window_bounds = array<i64: 16, 24>}, {pipeline_mode = #tpu.pipeline_mode<synchronous>, transform_indices = @transform_5, window_bounds = array<i64: 16, 56>}, {pipeline_mode = #tpu.pipeline_mode<synchronous>, transform_indices = @transform_6, window_bounds = array<i64: 16, 24>}, {transform_indices = @transform_7, window_bounds = array<i64: 16, 512>}]} {
    %c0 = arith.constant 0 : index
    %c0_0 = arith.constant 0 : index
    %0 = vector.load %arg1[%c0, %c0_0] : memref<16x512xf32, #tpu.memory_space<vmem>>, vector<16x512xf32>
    %c0_1 = arith.constant 0 : index
    %c0_2 = arith.constant 0 : index
    %1 = vector.load %arg2[%c0_1, %c0_2] : memref<8x512xf32, #tpu.memory_space<vmem>>, vector<8x512xf32>
    %c0_3 = arith.constant 0 : index
    %c0_4 = arith.constant 0 : index
    %2 = vector.load %arg3[%c0_3, %c0_4] : memref<512x32xbf16, #tpu.memory_space<vmem>>, vector<512x32xbf16>
    %c0_5 = arith.constant 0 : index
    %c0_6 = arith.constant 0 : index
    %3 = vector.load %arg4[%c0_5, %c0_6] : memref<32x512xbf16, #tpu.memory_space<vmem>>, vector<32x512xbf16>
    %4 = tpu.iota {dimensions = array<i32: 0>} : vector<8x512xi32>
    %c0_i32 = arith.constant 0 : i32
    %5 = vector.broadcast %c0_i32 : i32 to vector<8x512xi32>
    %6 = arith.cmpi eq, %4, %5 : vector<8x512xi32>
    %7 = arith.extui %6 : vector<8x512xi1> to vector<8x512xi32>
    %8 = arith.sitofp %7 : vector<8x512xi32> to vector<8x512xf32>
    %9 = arith.truncf %8 : vector<8x512xf32> to vector<8x512xbf16>
    %10 = vector.extract_strided_slice %1 {offsets = [0, 0], sizes = [1, 512], strides = [1, 1]} : vector<8x512xf32> to vector<1x512xf32>
    %11 = vector.extract_strided_slice %1 {offsets = [1, 0], sizes = [1, 512], strides = [1, 1]} : vector<8x512xf32> to vector<1x512xf32>
    %12 = arith.mulf %0, %0 : vector<16x512xf32>
    %13 = tpu.concatenate %0, %12 in 0 : vector<16x512xf32>, vector<16x512xf32> -> vector<32x512xf32>
    %14 = arith.truncf %13 : vector<32x512xf32> to vector<32x512xbf16>
    %15 = arith.extf %14 : vector<32x512xbf16> to vector<32x512xf32>
    %16 = arith.subf %13, %15 : vector<32x512xf32>
    %17 = arith.truncf %16 : vector<32x512xf32> to vector<32x512xbf16>
    %cst = arith.constant dense<0.000000e+00> : vector<32x32xf32>
    %18 = tpu.matmul %14, %2, %cst {dimension_numbers = #tpu.dot_dimension_numbers<[1], [0], [0], [1], [0, 0, 1, 1], [], []>} : vector<32x512xbf16>, vector<512x32xbf16>, vector<32x32xf32> -> vector<32x32xf32>
    %cst_7 = arith.constant dense<0.000000e+00> : vector<32x32xf32>
    %19 = tpu.matmul %17, %2, %cst_7 {dimension_numbers = #tpu.dot_dimension_numbers<[1], [0], [0], [1], [0, 0, 1, 1], [], []>} : vector<32x512xbf16>, vector<512x32xbf16>, vector<32x32xf32> -> vector<32x32xf32>
    %20 = arith.addf %18, %19 : vector<32x32xf32>
    %cst_8 = arith.constant 6.250000e-02 : f32
    %21 = vector.broadcast %cst_8 : f32 to vector<32x32xf32>
    %22 = arith.mulf %20, %21 : vector<32x32xf32>
    %23 = vector.extract_strided_slice %22 {offsets = [0, 0], sizes = [16, 32], strides = [1, 1]} : vector<32x32xf32> to vector<16x32xf32>
    %24 = vector.extract_strided_slice %22 {offsets = [16, 0], sizes = [16, 32], strides = [1, 1]} : vector<32x32xf32> to vector<16x32xf32>
    %25 = arith.mulf %23, %23 : vector<16x32xf32>
    %26 = arith.subf %24, %25 : vector<16x32xf32>
    %cst_9 = arith.constant 9.99999974E-6 : f32
    %27 = vector.broadcast %cst_9 : f32 to vector<16x32xf32>
    %28 = arith.addf %26, %27 : vector<16x32xf32>
    %29 = math.rsqrt %28 : vector<16x32xf32>
    %30 = arith.mulf %23, %29 : vector<16x32xf32>
    %31 = tpu.concatenate %29, %30 in 0 : vector<16x32xf32>, vector<16x32xf32> -> vector<32x32xf32>
    %32 = arith.truncf %31 : vector<32x32xf32> to vector<32x32xbf16>
    %33 = arith.extf %32 : vector<32x32xbf16> to vector<32x32xf32>
    %34 = arith.subf %31, %33 : vector<32x32xf32>
    %35 = arith.truncf %34 : vector<32x32xf32> to vector<32x32xbf16>
    %cst_10 = arith.constant dense<0.000000e+00> : vector<32x512xf32>
    %36 = tpu.matmul %32, %3, %cst_10 {dimension_numbers = #tpu.dot_dimension_numbers<[1], [0], [0], [1], [0, 0, 1, 1], [], []>} : vector<32x32xbf16>, vector<32x512xbf16>, vector<32x512xf32> -> vector<32x512xf32>
    %cst_11 = arith.constant dense<0.000000e+00> : vector<32x512xf32>
    %37 = tpu.matmul %35, %3, %cst_11 {dimension_numbers = #tpu.dot_dimension_numbers<[1], [0], [0], [1], [0, 0, 1, 1], [], []>} : vector<32x32xbf16>, vector<32x512xbf16>, vector<32x512xf32> -> vector<32x512xf32>
    %38 = arith.addf %36, %37 : vector<32x512xf32>
    %39 = vector.extract_strided_slice %38 {offsets = [0, 0], sizes = [16, 512], strides = [1, 1]} : vector<32x512xf32> to vector<16x512xf32>
    %40 = arith.mulf %0, %39 : vector<16x512xf32>
    %41 = vector.extract_strided_slice %38 {offsets = [16, 0], sizes = [16, 512], strides = [1, 1]} : vector<32x512xf32> to vector<16x512xf32>
    %42 = arith.subf %40, %41 : vector<16x512xf32>
    %43 = vector.broadcast %10 : vector<1x512xf32> to vector<16x512xf32>
    %44 = arith.mulf %42, %43 : vector<16x512xf32>
    %45 = vector.broadcast %11 : vector<1x512xf32> to vector<16x512xf32>
    %46 = arith.addf %44, %45 : vector<16x512xf32>
    %cst_12 = arith.constant 0.000000e+00 : f32
    %47 = vector.broadcast %cst_12 : f32 to vector<16x512xf32>
    %48 = arith.maximumf %46, %47 : vector<16x512xf32>
    %49 = arith.truncf %48 : vector<16x512xf32> to vector<16x512xbf16>
    %c0_13 = arith.constant 0 : index
    %c0_14 = arith.constant 0 : index
    %50 = vector.load %arg5[%c0_13, %c0_14] : memref<16x24xbf16, #tpu.memory_space<vmem>>, vector<16x24xbf16>
    %51 = tpu.concatenate %49, %9 in 0 : vector<16x512xbf16>, vector<8x512xbf16> -> vector<24x512xbf16>
    %cst_15 = arith.constant dense<0.000000e+00> : vector<16x512xf32>
    %52 = tpu.matmul %50, %51, %cst_15 {dimension_numbers = #tpu.dot_dimension_numbers<[1], [0], [0], [1], [0, 0, 1, 1], [], []>} : vector<16x24xbf16>, vector<24x512xbf16>, vector<16x512xf32> -> vector<16x512xf32>
    %53 = vector.extract_strided_slice %1 {offsets = [2, 0], sizes = [1, 512], strides = [1, 1]} : vector<8x512xf32> to vector<1x512xf32>
    %54 = vector.extract_strided_slice %1 {offsets = [3, 0], sizes = [1, 512], strides = [1, 1]} : vector<8x512xf32> to vector<1x512xf32>
    %55 = arith.mulf %52, %52 : vector<16x512xf32>
    %56 = tpu.concatenate %52, %55 in 0 : vector<16x512xf32>, vector<16x512xf32> -> vector<32x512xf32>
    %57 = arith.truncf %56 : vector<32x512xf32> to vector<32x512xbf16>
    %58 = arith.extf %57 : vector<32x512xbf16> to vector<32x512xf32>
    %59 = arith.subf %56, %58 : vector<32x512xf32>
    %60 = arith.truncf %59 : vector<32x512xf32> to vector<32x512xbf16>
    %cst_16 = arith.constant dense<0.000000e+00> : vector<32x32xf32>
    %61 = tpu.matmul %57, %2, %cst_16 {dimension_numbers = #tpu.dot_dimension_numbers<[1], [0], [0], [1], [0, 0, 1, 1], [], []>} : vector<32x512xbf16>, vector<512x32xbf16>, vector<32x32xf32> -> vector<32x32xf32>
    %cst_17 = arith.constant dense<0.000000e+00> : vector<32x32xf32>
    %62 = tpu.matmul %60, %2, %cst_17 {dimension_numbers = #tpu.dot_dimension_numbers<[1], [0], [0], [1], [0, 0, 1, 1], [], []>} : vector<32x512xbf16>, vector<512x32xbf16>, vector<32x32xf32> -> vector<32x32xf32>
    %63 = arith.addf %61, %62 : vector<32x32xf32>
    %cst_18 = arith.constant 6.250000e-02 : f32
    %64 = vector.broadcast %cst_18 : f32 to vector<32x32xf32>
    %65 = arith.mulf %63, %64 : vector<32x32xf32>
    %66 = vector.extract_strided_slice %65 {offsets = [0, 0], sizes = [16, 32], strides = [1, 1]} : vector<32x32xf32> to vector<16x32xf32>
    %67 = vector.extract_strided_slice %65 {offsets = [16, 0], sizes = [16, 32], strides = [1, 1]} : vector<32x32xf32> to vector<16x32xf32>
    %68 = arith.mulf %66, %66 : vector<16x32xf32>
    %69 = arith.subf %67, %68 : vector<16x32xf32>
    %cst_19 = arith.constant 9.99999974E-6 : f32
    %70 = vector.broadcast %cst_19 : f32 to vector<16x32xf32>
    %71 = arith.addf %69, %70 : vector<16x32xf32>
    %72 = math.rsqrt %71 : vector<16x32xf32>
    %73 = arith.mulf %66, %72 : vector<16x32xf32>
    %74 = tpu.concatenate %72, %73 in 0 : vector<16x32xf32>, vector<16x32xf32> -> vector<32x32xf32>
    %75 = arith.truncf %74 : vector<32x32xf32> to vector<32x32xbf16>
    %76 = arith.extf %75 : vector<32x32xbf16> to vector<32x32xf32>
    %77 = arith.subf %74, %76 : vector<32x32xf32>
    %78 = arith.truncf %77 : vector<32x32xf32> to vector<32x32xbf16>
    %cst_20 = arith.constant dense<0.000000e+00> : vector<32x512xf32>
    %79 = tpu.matmul %75, %3, %cst_20 {dimension_numbers = #tpu.dot_dimension_numbers<[1], [0], [0], [1], [0, 0, 1, 1], [], []>} : vector<32x32xbf16>, vector<32x512xbf16>, vector<32x512xf32> -> vector<32x512xf32>
    %cst_21 = arith.constant dense<0.000000e+00> : vector<32x512xf32>
    %80 = tpu.matmul %78, %3, %cst_21 {dimension_numbers = #tpu.dot_dimension_numbers<[1], [0], [0], [1], [0, 0, 1, 1], [], []>} : vector<32x32xbf16>, vector<32x512xbf16>, vector<32x512xf32> -> vector<32x512xf32>
    %81 = arith.addf %79, %80 : vector<32x512xf32>
    %82 = vector.extract_strided_slice %81 {offsets = [0, 0], sizes = [16, 512], strides = [1, 1]} : vector<32x512xf32> to vector<16x512xf32>
    %83 = arith.mulf %52, %82 : vector<16x512xf32>
    %84 = vector.extract_strided_slice %81 {offsets = [16, 0], sizes = [16, 512], strides = [1, 1]} : vector<32x512xf32> to vector<16x512xf32>
    %85 = arith.subf %83, %84 : vector<16x512xf32>
    %86 = vector.broadcast %53 : vector<1x512xf32> to vector<16x512xf32>
    %87 = arith.mulf %85, %86 : vector<16x512xf32>
    %88 = vector.broadcast %54 : vector<1x512xf32> to vector<16x512xf32>
    %89 = arith.addf %87, %88 : vector<16x512xf32>
    %cst_22 = arith.constant 0.000000e+00 : f32
    %90 = vector.broadcast %cst_22 : f32 to vector<16x512xf32>
    %91 = arith.maximumf %89, %90 : vector<16x512xf32>
    %c2_i32 = arith.constant 2 : i32
    %92 = tpu.dynamic_rotate %91 by %c2_i32 dim 1 : vector<16x512xf32>, i32 -> vector<16x512xf32>
    %93 = vector.extract_strided_slice %1 {offsets = [6, 0], sizes = [1, 512], strides = [1, 1]} : vector<8x512xf32> to vector<1x512xf32>
    %94 = vector.broadcast %93 : vector<1x512xf32> to vector<16x512xf32>
    %95 = arith.mulf %92, %94 : vector<16x512xf32>
    %96 = arith.truncf %95 : vector<16x512xf32> to vector<16x512xbf16>
    %c1_i32 = arith.constant 1 : i32
    %97 = tpu.dynamic_rotate %91 by %c1_i32 dim 1 : vector<16x512xf32>, i32 -> vector<16x512xf32>
    %98 = vector.extract_strided_slice %1 {offsets = [7, 0], sizes = [1, 512], strides = [1, 1]} : vector<8x512xf32> to vector<1x512xf32>
    %99 = vector.broadcast %98 : vector<1x512xf32> to vector<16x512xf32>
    %100 = arith.mulf %97, %99 : vector<16x512xf32>
    %101 = arith.truncf %100 : vector<16x512xf32> to vector<16x512xbf16>
    %102 = arith.truncf %91 : vector<16x512xf32> to vector<16x512xbf16>
    %103 = tpu.concatenate %96, %101, %102, %9 in 0 : vector<16x512xbf16>, vector<16x512xbf16>, vector<16x512xbf16>, vector<8x512xbf16> -> vector<56x512xbf16>
    %c0_23 = arith.constant 0 : index
    %c0_24 = arith.constant 0 : index
    %104 = vector.load %arg6[%c0_23, %c0_24] : memref<16x56xbf16, #tpu.memory_space<vmem>>, vector<16x56xbf16>
    %cst_25 = arith.constant dense<0.000000e+00> : vector<16x512xf32>
    %105 = tpu.matmul %104, %103, %cst_25 {dimension_numbers = #tpu.dot_dimension_numbers<[1], [0], [0], [1], [0, 0, 1, 1], [], []>} : vector<16x56xbf16>, vector<56x512xbf16>, vector<16x512xf32> -> vector<16x512xf32>
    %106 = vector.extract_strided_slice %1 {offsets = [4, 0], sizes = [1, 512], strides = [1, 1]} : vector<8x512xf32> to vector<1x512xf32>
    %107 = vector.extract_strided_slice %1 {offsets = [5, 0], sizes = [1, 512], strides = [1, 1]} : vector<8x512xf32> to vector<1x512xf32>
    %108 = arith.mulf %105, %105 : vector<16x512xf32>
    %109 = tpu.concatenate %105, %108 in 0 : vector<16x512xf32>, vector<16x512xf32> -> vector<32x512xf32>
    %110 = arith.truncf %109 : vector<32x512xf32> to vector<32x512xbf16>
    %111 = arith.extf %110 : vector<32x512xbf16> to vector<32x512xf32>
    %112 = arith.subf %109, %111 : vector<32x512xf32>
    %113 = arith.truncf %112 : vector<32x512xf32> to vector<32x512xbf16>
    %cst_26 = arith.constant dense<0.000000e+00> : vector<32x32xf32>
    %114 = tpu.matmul %110, %2, %cst_26 {dimension_numbers = #tpu.dot_dimension_numbers<[1], [0], [0], [1], [0, 0, 1, 1], [], []>} : vector<32x512xbf16>, vector<512x32xbf16>, vector<32x32xf32> -> vector<32x32xf32>
    %cst_27 = arith.constant dense<0.000000e+00> : vector<32x32xf32>
    %115 = tpu.matmul %113, %2, %cst_27 {dimension_numbers = #tpu.dot_dimension_numbers<[1], [0], [0], [1], [0, 0, 1, 1], [], []>} : vector<32x512xbf16>, vector<512x32xbf16>, vector<32x32xf32> -> vector<32x32xf32>
    %116 = arith.addf %114, %115 : vector<32x32xf32>
    %cst_28 = arith.constant 6.250000e-02 : f32
    %117 = vector.broadcast %cst_28 : f32 to vector<32x32xf32>
    %118 = arith.mulf %116, %117 : vector<32x32xf32>
    %119 = vector.extract_strided_slice %118 {offsets = [0, 0], sizes = [16, 32], strides = [1, 1]} : vector<32x32xf32> to vector<16x32xf32>
    %120 = vector.extract_strided_slice %118 {offsets = [16, 0], sizes = [16, 32], strides = [1, 1]} : vector<32x32xf32> to vector<16x32xf32>
    %121 = arith.mulf %119, %119 : vector<16x32xf32>
    %122 = arith.subf %120, %121 : vector<16x32xf32>
    %cst_29 = arith.constant 9.99999974E-6 : f32
    %123 = vector.broadcast %cst_29 : f32 to vector<16x32xf32>
    %124 = arith.addf %122, %123 : vector<16x32xf32>
    %125 = math.rsqrt %124 : vector<16x32xf32>
    %126 = arith.mulf %119, %125 : vector<16x32xf32>
    %127 = tpu.concatenate %125, %126 in 0 : vector<16x32xf32>, vector<16x32xf32> -> vector<32x32xf32>
    %128 = arith.truncf %127 : vector<32x32xf32> to vector<32x32xbf16>
    %129 = arith.extf %128 : vector<32x32xbf16> to vector<32x32xf32>
    %130 = arith.subf %127, %129 : vector<32x32xf32>
    %131 = arith.truncf %130 : vector<32x32xf32> to vector<32x32xbf16>
    %cst_30 = arith.constant dense<0.000000e+00> : vector<32x512xf32>
    %132 = tpu.matmul %128, %3, %cst_30 {dimension_numbers = #tpu.dot_dimension_numbers<[1], [0], [0], [1], [0, 0, 1, 1], [], []>} : vector<32x32xbf16>, vector<32x512xbf16>, vector<32x512xf32> -> vector<32x512xf32>
    %cst_31 = arith.constant dense<0.000000e+00> : vector<32x512xf32>
    %133 = tpu.matmul %131, %3, %cst_31 {dimension_numbers = #tpu.dot_dimension_numbers<[1], [0], [0], [1], [0, 0, 1, 1], [], []>} : vector<32x32xbf16>, vector<32x512xbf16>, vector<32x512xf32> -> vector<32x512xf32>
    %134 = arith.addf %132, %133 : vector<32x512xf32>
    %135 = vector.extract_strided_slice %134 {offsets = [0, 0], sizes = [16, 512], strides = [1, 1]} : vector<32x512xf32> to vector<16x512xf32>
    %136 = arith.mulf %105, %135 : vector<16x512xf32>
    %137 = vector.extract_strided_slice %134 {offsets = [16, 0], sizes = [16, 512], strides = [1, 1]} : vector<32x512xf32> to vector<16x512xf32>
    %138 = arith.subf %136, %137 : vector<16x512xf32>
    %139 = vector.broadcast %106 : vector<1x512xf32> to vector<16x512xf32>
    %140 = arith.mulf %138, %139 : vector<16x512xf32>
    %141 = vector.broadcast %107 : vector<1x512xf32> to vector<16x512xf32>
    %142 = arith.addf %140, %141 : vector<16x512xf32>
    %cst_32 = arith.constant 0.000000e+00 : f32
    %143 = vector.broadcast %cst_32 : f32 to vector<16x512xf32>
    %144 = arith.maximumf %142, %143 : vector<16x512xf32>
    %145 = arith.truncf %144 : vector<16x512xf32> to vector<16x512xbf16>
    %c0_33 = arith.constant 0 : index
    %c0_34 = arith.constant 0 : index
    %146 = vector.load %arg7[%c0_33, %c0_34] : memref<16x24xbf16, #tpu.memory_space<vmem>>, vector<16x24xbf16>
    %147 = tpu.concatenate %145, %9 in 0 : vector<16x512xbf16>, vector<8x512xbf16> -> vector<24x512xbf16>
    %cst_35 = arith.constant dense<0.000000e+00> : vector<16x512xf32>
    %148 = tpu.matmul %146, %147, %cst_35 {dimension_numbers = #tpu.dot_dimension_numbers<[1], [0], [0], [1], [0, 0, 1, 1], [], []>} : vector<16x24xbf16>, vector<24x512xbf16>, vector<16x512xf32> -> vector<16x512xf32>
    %149 = arith.addf %148, %0 : vector<16x512xf32>
    %c0_36 = arith.constant 0 : index
    %c0_37 = arith.constant 0 : index
    %150 = vector.load %arg8[%c0_36, %c0_37] : memref<16x512xf32, #tpu.memory_space<vmem>>, vector<16x512xf32>
    tpu.vector_store %arg8[%c0_36, %c0_37], %149 {strides = array<i32>} : memref<16x512xf32, #tpu.memory_space<vmem>>, vector<16x512xf32>,
    return
  }
  func.func @transform_0(%arg0: i32) -> (i32, i32) {
    %c0_i32 = arith.constant 0 : i32
    %c0_i32_0 = arith.constant 0 : i32
    return %c0_i32, %arg0 : i32, i32
  }
  func.func @transform_1(%arg0: i32) -> (i32, i32) {
    %c0_i32 = arith.constant 0 : i32
    %c0_i32_0 = arith.constant 0 : i32
    %c0_i32_1 = arith.constant 0 : i32
    return %c0_i32, %c0_i32_0 : i32, i32
  }
  func.func @transform_2(%arg0: i32) -> (i32, i32) {
    %c0_i32 = arith.constant 0 : i32
    %c0_i32_0 = arith.constant 0 : i32
    %c0_i32_1 = arith.constant 0 : i32
    return %c0_i32, %c0_i32_0 : i32, i32
  }
  func.func @transform_3(%arg0: i32) -> (i32, i32) {
    %c0_i32 = arith.constant 0 : i32
    %c0_i32_0 = arith.constant 0 : i32
    %c0_i32_1 = arith.constant 0 : i32
    return %c0_i32, %c0_i32_0 : i32, i32
  }
  func.func @transform_4(%arg0: i32) -> (i32, i32) {
    %c0_i32 = arith.constant 0 : i32
    %c0_i32_0 = arith.constant 0 : i32
    %c0_i32_1 = arith.constant 0 : i32
    return %c0_i32, %c0_i32_0 : i32, i32
  }
  func.func @transform_5(%arg0: i32) -> (i32, i32) {
    %c0_i32 = arith.constant 0 : i32
    %c0_i32_0 = arith.constant 0 : i32
    %c0_i32_1 = arith.constant 0 : i32
    return %c0_i32, %c0_i32_0 : i32, i32
  }
  func.func @transform_6(%arg0: i32) -> (i32, i32) {
    %c0_i32 = arith.constant 0 : i32
    %c0_i32_0 = arith.constant 0 : i32
    %c0_i32_1 = arith.constant 0 : i32
    return %c0_i32, %c0_i32_0 : i32, i32
  }
  func.func @transform_7(%arg0: i32) -> (i32, i32) {
    %c0_i32 = arith.constant 0 : i32
    %c0_i32_0 = arith.constant 0 : i32
    return %c0_i32, %arg0 : i32, i32
  }
}

</mosaic_0001>

<llo_original>
// kernel: tpu_custom_call.1
$region0: #{tpu_custom_call.1}
  #allocation0 [shape = 'u32[]', space=smem, size = 0x4, offset = 0x4, fixed_abs, tag = 'smem constant byte address 0x4 - core index']
  #allocation1 [shape = 'u32[144,128]{1,0:T(1,128)}', space=vmem, size = 0x12000, scoped, tag = 'internal scratch']
  %s0 = inlined_call_operand.vmem [shape: f32[16,1024], index: 0, kind: input, shape index: {}]
  %s1 = inlined_call_operand.vmem [shape: f32[8,512], index: 1, kind: input, shape index: {}]
  %s2 = inlined_call_operand.vmem [shape: bf16[512,32], index: 2, kind: input, shape index: {}]
  %s3 = inlined_call_operand.vmem [shape: bf16[32,512], index: 3, kind: input, shape index: {}]
  %s4 = inlined_call_operand.vmem [shape: bf16[16,24], index: 4, kind: input, shape index: {}]
  %s5 = inlined_call_operand.vmem [shape: bf16[16,56], index: 5, kind: input, shape index: {}]
  %s6 = inlined_call_operand.vmem [shape: bf16[16,24], index: 6, kind: input, shape index: {}]
  %s7 = inlined_call_operand.hbm [shape: f32[16,1024], index: 7, kind: output, shape index: {}]
  %s8 = sld [smem:[#allocation0]]
  $region84: #{tpu_custom_call.1} parent=0
    _
  %s10 = ssub.s32 1, %s8
  %s11 = scalar_select 0, %s10, %s8
  $region1: #{tpu_custom_call.1} parent=0
    #allocation2 [shape = 'u8[65536]{0}', space=vmem, size = 0x10000, scoped, tag = 'input window, operand 0']
    #allocation3 [shape = 'u8[65536]{0}', space=vmem, size = 0x10000, scoped, tag = 'output window, operand 0']
    #allocation4 [shape = 's32[2]{0}', space=sflag, size = 0x8, scoped, tag = 'scoped memory for tpu_custom_call.1']
    %12 = vsyncpa [#allocation4], 0
    %s13 = scalar_lea.sflag [#allocation4], 1
    %14 = vsyncpa %s13, 0
    loop: start=0, step=1, limit=4
    $region2: #{tpu_custom_call.1} parent=1 // loop_pre_header
      _
    $region3: #{tpu_custom_call.1} parent=1 // loop_header
      %s16 = sphi 0, %s20
      %p17 = scmp.ge.s32.totalorder %s16, 4
      %s26 = sphi 0, %s28
      %s29 = sphi 0, %s26
      %s30 = sphi 0, %s29
      %s46 = sphi 0, %s30
      %s50 = sphi 0, %s50
      %s52 = sphi 0, %s50
      %s53 = sphi 0, %s52
      %s67 = sphi 0, %s53
      %s71 = sphi 0, %s71
      %s73 = sphi 0, %s71
      %s74 = sphi 0, %s73
      %s88 = sphi 0, %s74
      %s92 = sphi 0, %s92
      %s94 = sphi 0, %s92
      %s95 = sphi 0, %s94
      %s109 = sphi 0, %s95
      %s113 = sphi 0, %s113
      %s115 = sphi 0, %s113
      %s116 = sphi 0, %s115
      %s130 = sphi 0, %s116
      %s134 = sphi 0, %s134
      %s136 = sphi 0, %s134
      %s137 = sphi 0, %s136
      %s151 = sphi 0, %s137
      %s155 = sphi 0, %s155
      %s157 = sphi 0, %s155
      %s158 = sphi 0, %s157
      %s172 = sphi 0, %s158
      %s178 = sphi 0, %s180
      %s181 = sphi 0, %s178
      %s182 = sphi 0, %s181
      %s198 = sphi 0, %s182
    $region4: #{tpu_custom_call.1} parent=1 // loop_header_branch
      %19 = sbr.rel (%p17) target = $region8
    $region5: #{tpu_custom_call.1} parent=1 // loop_body
      %s21 = ssub.s32 %s16, 1
      %s22 = ssub.s32 %s16, 2
      %s23 = sadd.s32 %s16, 1
      %s24 = ssub.s32 %s16, %s23
      %p25 = scmp.eq.s32.totalorder %s24, 0
      %s27 = sadd.s32 %s26, 1
      %s28 = scalar_select %p25, %s26, %s27
      %p31 = pneg %p25
      %p32 = scmp.eq.s32.totalorder %s16, 1
      %p33 = por %p31, %p32
      %p34 = scmp.ne.s32.totalorder %s26, %s29
      %p35 = scmp.eq.s32.totalorder %s16, 0
      %p36 = por %p34, %p35
      %p37 = scmp.ne.s32.totalorder %s26, %s29
      %p38 = scmp.eq.s32.totalorder %s21, 1
      %p39 = por %p37, %p38
      %p40 = scmp.ne.s32.totalorder %s29, %s30
      %p41 = scmp.eq.s32.totalorder %s21, 0
      %p42 = por %p40, %p41
      %p43 = scmp.ne.s32.totalorder %s29, %s30
      %p44 = scmp.eq.s32.totalorder %s22, 1
      %p45 = por %p43, %p44
      %p47 = scmp.ne.s32.totalorder %s30, %s46
      %p48 = scmp.eq.s32.totalorder %s22, 0
      %p49 = por %p47, %p48
      %s51 = sadd.s32 %s50, 1
      %p54 = scmp.eq.s32.totalorder %s16, 1
      %p55 = scmp.ne.s32.totalorder %s50, %s52
      %p56 = scmp.eq.s32.totalorder %s16, 0
      %p57 = por %p55, %p56
      %p58 = scmp.ne.s32.totalorder %s50, %s52
      %p59 = scmp.eq.s32.totalorder %s21, 1
      %p60 = por %p58, %p59
      %p61 = scmp.ne.s32.totalorder %s52, %s53
      %p62 = scmp.eq.s32.totalorder %s21, 0
      %p63 = por %p61, %p62
      %p64 = scmp.ne.s32.totalorder %s52, %s53
      %p65 = scmp.eq.s32.totalorder %s22, 1
      %p66 = por %p64, %p65
      %p68 = scmp.ne.s32.totalorder %s53, %s67
      %p69 = scmp.eq.s32.totalorder %s22, 0
      %p70 = por %p68, %p69
      %s72 = sadd.s32 %s71, 1
      %p75 = scmp.eq.s32.totalorder %s16, 1
      %p76 = scmp.ne.s32.totalorder %s71, %s73
      %p77 = scmp.eq.s32.totalorder %s16, 0
      %p78 = por %p76, %p77
      %p79 = scmp.ne.s32.totalorder %s71, %s73
      %p80 = scmp.eq.s32.totalorder %s21, 1
      %p81 = por %p79, %p80
      %p82 = scmp.ne.s32.totalorder %s73, %s74
      %p83 = scmp.eq.s32.totalorder %s21, 0
      %p84 = por %p82, %p83
      %p85 = scmp.ne.s32.totalorder %s73, %s74
      %p86 = scmp.eq.s32.totalorder %s22, 1
      %p87 = por %p85, %p86
      %p89 = scmp.ne.s32.totalorder %s74, %s88
      %p90 = scmp.eq.s32.totalorder %s22, 0
      %p91 = por %p89, %p90
      %s93 = sadd.s32 %s92, 1
      %p96 = scmp.eq.s32.totalorder %s16, 1
      %p97 = scmp.ne.s32.totalorder %s92, %s94
      %p98 = scmp.eq.s32.totalorder %s16, 0
      %p99 = por %p97, %p98
      %p100 = scmp.ne.s32.totalorder %s92, %s94
      %p101 = scmp.eq.s32.totalorder %s21, 1
      %p102 = por %p100, %p101
      %p103 = scmp.ne.s32.totalorder %s94, %s95
      %p104 = scmp.eq.s32.totalorder %s21, 0
      %p105 = por %p103, %p104
      %p106 = scmp.ne.s32.totalorder %s94, %s95
      %p107 = scmp.eq.s32.totalorder %s22, 1
      %p108 = por %p106, %p107
      %p110 = scmp.ne.s32.totalorder %s95, %s109
      %p111 = scmp.eq.s32.totalorder %s22, 0
      %p112 = por %p110, %p111
      %s114 = sadd.s32 %s113, 1
      %p117 = scmp.eq.s32.totalorder %s16, 1
      %p118 = scmp.ne.s32.totalorder %s113, %s115
      %p119 = scmp.eq.s32.totalorder %s16, 0
      %p120 = por %p118, %p119
      %p121 = scmp.ne.s32.totalorder %s113, %s115
      %p122 = scmp.eq.s32.totalorder %s21, 1
      %p123 = por %p121, %p122
      %p124 = scmp.ne.s32.totalorder %s115, %s116
      %p125 = scmp.eq.s32.totalorder %s21, 0
      %p126 = por %p124, %p125
      %p127 = scmp.ne.s32.totalorder %s115, %s116
      %p128 = scmp.eq.s32.totalorder %s22, 1
      %p129 = por %p127, %p128
      %p131 = scmp.ne.s32.totalorder %s116, %s130
      %p132 = scmp.eq.s32.totalorder %s22, 0
      %p133 = por %p131, %p132
      %s135 = sadd.s32 %s134, 1
      %p138 = scmp.eq.s32.totalorder %s16, 1
      %p139 = scmp.ne.s32.totalorder %s134, %s136
      %p140 = scmp.eq.s32.totalorder %s16, 0
      %p141 = por %p139, %p140
      %p142 = scmp.ne.s32.totalorder %s134, %s136
      %p143 = scmp.eq.s32.totalorder %s21, 1
      %p144 = por %p142, %p143
      %p145 = scmp.ne.s32.totalorder %s136, %s137
      %p146 = scmp.eq.s32.totalorder %s21, 0
      %p147 = por %p145, %p146
      %p148 = scmp.ne.s32.totalorder %s136, %s137
      %p149 = scmp.eq.s32.totalorder %s22, 1
      %p150 = por %p148, %p149
      %p152 = scmp.ne.s32.totalorder %s137, %s151
      %p153 = scmp.eq.s32.totalorder %s22, 0
      %p154 = por %p152, %p153
      %s156 = sadd.s32 %s155, 1
      %p159 = scmp.eq.s32.totalorder %s16, 1
      %p160 = scmp.ne.s32.totalorder %s155, %s157
      %p161 = scmp.eq.s32.totalorder %s16, 0
      %p162 = por %p160, %p161
      %p163 = scmp.ne.s32.totalorder %s155, %s157
      %p164 = scmp.eq.s32.totalorder %s21, 1
      %p165 = por %p163, %p164
      %p166 = scmp.ne.s32.totalorder %s157, %s158
      %p167 = scmp.eq.s32.totalorder %s21, 0
      %p168 = por %p166, %p167
      %p169 = scmp.ne.s32.totalorder %s157, %s158
      %p170 = scmp.eq.s32.totalorder %s22, 1
      %p171 = por %p169, %p170
      %p173 = scmp.ne.s32.totalorder %s158, %s172
      %p174 = scmp.eq.s32.totalorder %s22, 0
      %p175 = por %p173, %p174
      %s176 = ssub.s32 %s16, %s23
      %p177 = scmp.eq.s32.totalorder %s176, 0
      %s179 = sadd.s32 %s178, 1
      %s180 = scalar_select %p177, %s178, %s179
      %p183 = pneg %p177
      %p184 = scmp.eq.s32.totalorder %s16, 1
      %p185 = por %p183, %p184
      %p186 = scmp.ne.s32.totalorder %s178, %s181
      %p187 = scmp.eq.s32.totalorder %s16, 0
      %p188 = por %p186, %p187
      %p189 = scmp.ne.s32.totalorder %s178, %s181
      %p190 = scmp.eq.s32.totalorder %s21, 1
      %p191 = por %p189, %p190
      %p192 = scmp.ne.s32.totalorder %s181, %s182
      %p193 = scmp.eq.s32.totalorder %s21, 0
      %p194 = por %p192, %p193
      %p195 = scmp.ne.s32.totalorder %s181, %s182
      %p196 = scmp.eq.s32.totalorder %s22, 1
      %p197 = por %p195, %p196
      %p199 = scmp.ne.s32.totalorder %s182, %s198
      %p200 = scmp.eq.s32.totalorder %s22, 0
      %p201 = por %p199, %p200
      %p202 = scmp.le.s32.totalorder 1, %s16
      %p203 = scmp.lt.s32.totalorder %s16, 3
      %p204 = pnand %p202, %p203
      %p205 = pneg %p204
      // Predicated region
      $region9: #{tpu_custom_call.1} parent=5 // pred_check
        _
      $region10: #{tpu_custom_call.1} parent=5 // pred_check_branch
        %207 = sbr.rel (%p204) target = $region12
      $region11: #{tpu_custom_call.1} parent=5 // pred_region
        %s208 = ssub.s32 %s16, 1
        // Predicated region
        $region13: #{tpu_custom_call.1} parent=11 // pred_check
          %p209 = pneg %p63
        $region14: #{tpu_custom_call.1} parent=11 // pred_check_branch
          %211 = sbr.rel (%p209) target = $region16
        $region15: #{tpu_custom_call.1} parent=11 // pred_region
          _
        $region16: #{tpu_custom_call.1} parent=11 // pred_fallthru
          _
        // Predicated region
        $region17: #{tpu_custom_call.1} parent=11 // pred_check
          %p212 = pneg %p84
        $region18: #{tpu_custom_call.1} parent=11 // pred_check_branch
          %214 = sbr.rel (%p212) target = $region20
        $region19: #{tpu_custom_call.1} parent=11 // pred_region
          _
        $region20: #{tpu_custom_call.1} parent=11 // pred_fallthru
          _
        // Predicated region
        $region21: #{tpu_custom_call.1} parent=11 // pred_check
          %p215 = pneg %p105
        $region22: #{tpu_custom_call.1} parent=11 // pred_check_branch
          %217 = sbr.rel (%p215) target = $region24
        $region23: #{tpu_custom_call.1} parent=11 // pred_region
          _
        $region24: #{tpu_custom_call.1} parent=11 // pred_fallthru
          _
        // Predicated region
        $region25: #{tpu_custom_call.1} parent=11 // pred_check
          %p218 = pneg %p126
        $region26: #{tpu_custom_call.1} parent=11 // pred_check_branch
          %220 = sbr.rel (%p218) target = $region28
        $region27: #{tpu_custom_call.1} parent=11 // pred_region
          _
        $region28: #{tpu_custom_call.1} parent=11 // pred_fallthru
          _
        // Predicated region
        $region29: #{tpu_custom_call.1} parent=11 // pred_check
          %p221 = pneg %p147
        $region30: #{tpu_custom_call.1} parent=11 // pred_check_branch
          %223 = sbr.rel (%p221) target = $region32
        $region31: #{tpu_custom_call.1} parent=11 // pred_region
          _
        $region32: #{tpu_custom_call.1} parent=11 // pred_fallthru
          _
        // Predicated region
        $region33: #{tpu_custom_call.1} parent=11 // pred_check
          %p224 = pneg %p168
        $region34: #{tpu_custom_call.1} parent=11 // pred_check_branch
          %226 = sbr.rel (%p224) target = $region36
        $region35: #{tpu_custom_call.1} parent=11 // pred_region
          _
        $region36: #{tpu_custom_call.1} parent=11 // pred_fallthru
          _
      $region12: #{tpu_custom_call.1} parent=5 // pred_fallthru
        _
      %p227 = scmp.lt.s32.totalorder %s16, 2
      // Predicated region
      $region37: #{tpu_custom_call.1} parent=5 // pred_check
        %p228 = pneg %p227
      $region38: #{tpu_custom_call.1} parent=5 // pred_check_branch
        %230 = sbr.rel (%p228) target = $region40
      $region39: #{tpu_custom_call.1} parent=5 // pred_region
        // Predicated region
        $region41: #{tpu_custom_call.1} parent=39 // pred_check
          %p231 = pneg %p36
        $region42: #{tpu_custom_call.1} parent=39 // pred_check_branch
          %233 = sbr.rel (%p231) target = $region44
        $region43: #{tpu_custom_call.1} parent=39 // pred_region
          %s234 = sand.u32 %s26, 1
          %s235 = sand.u32 %s26, 1
          %s236 = smul.addr %s235, 64
          %s237 = scalar_lea.vmem [#allocation2], %s236
          %s238 = smul.u32 4, %s16
          %s239 = smul.addr %s238, 8
          %s240 = scalar_lea.vmem %s0, %s239
          // Predicated region
          $region45: #{tpu_custom_call.1} parent=43 // pred_check
            _
          $region46: #{tpu_custom_call.1} parent=43 // pred_check_branch
            %242 = sbr.rel (0) target = $region48
          $region47: #{tpu_custom_call.1} parent=43 // pred_region
            // Predicated region
            $region49: #{tpu_custom_call.1} parent=47 // pred_check
              _
            $region50: #{tpu_custom_call.1} parent=47 // pred_check_branch
              %244 = sbr.rel (0) target = $region52
            $region51: #{tpu_custom_call.1} parent=47 // pred_region
              loop: start=0, step=1, limit=1
              $region53: #{tpu_custom_call.1} parent=51 // loop_pre_header
                _
              $region54: #{tpu_custom_call.1} parent=51 // loop_header
                %s246 = sphi 0, %s250
                %p247 = scmp.ge.s32.totalorder %s246, 1
                %s251 = sphi %s240, %s240
                %s252 = sphi %s237, %s237
              $region55: #{tpu_custom_call.1} parent=51 // loop_header_branch
                %249 = sbr.rel (%p247) target = $region59
              $region56: #{tpu_custom_call.1} parent=51 // loop_body
                %v253 = vld [vmem:[%s251] sm:$0xff]
                %254 = vst [vmem:[%s252] sm:$0xff] %v253
                %v255 = vld [vmem:[%s251 + $0x8] sm:$0xff]
                %256 = vst [vmem:[%s252 + $0x8] sm:$0xff] %v255
                %v257 = vld [vmem:[%s251 + $0x10] sm:$0xff]
                %258 = vst [vmem:[%s252 + $0x10] sm:$0xff] %v257
                %v259 = vld [vmem:[%s251 + $0x18] sm:$0xff]
                %260 = vst [vmem:[%s252 + $0x18] sm:$0xff] %v259
                %v261 = vld [vmem:[%s251 + $0x40] sm:$0xff]
                %262 = vst [vmem:[%s252 + $0x20] sm:$0xff] %v261
                %v263 = vld [vmem:[%s251 + $0x48] sm:$0xff]
                %264 = vst [vmem:[%s252 + $0x28] sm:$0xff] %v263
                %v265 = vld [vmem:[%s251 + $0x50] sm:$0xff]
                %266 = vst [vmem:[%s252 + $0x30] sm:$0xff] %v265
                %v267 = vld [vmem:[%s251 + $0x58] sm:$0xff]
                %268 = vst [vmem:[%s252 + $0x38] sm:$0xff] %v267
              $region57: #{tpu_custom_call.1} parent=51 // loop_footer
                %s250 = sadd.s32 1, %s246
              $region58: #{tpu_custom_call.1} parent=51 // loop_footer_branch
                %245 = sbr.rel target = $region54
              $region59: #{tpu_custom_call.1} parent=51 // loop_exit
                _
            $region52: #{tpu_custom_call.1} parent=47 // pred_fallthru
              _
            // Predicated region
            $region60: #{tpu_custom_call.1} parent=47 // pred_check
              _
            $region61: #{tpu_custom_call.1} parent=47 // pred_check_branch
              %270 = sbr.rel target = $region63
            $region62: #{tpu_custom_call.1} parent=47 // pred_region
              _
            $region63: #{tpu_custom_call.1} parent=47 // pred_fallthru
              _
          $region48: #{tpu_custom_call.1} parent=43 // pred_fallthru
            _
          %271 = vnop
        $region44: #{tpu_custom_call.1} parent=39 // pred_fallthru
          _
      $region40: #{tpu_custom_call.1} parent=5 // pred_fallthru
        _
      %p272 = scmp.le.s32.totalorder 1, %s16
      %p273 = scmp.lt.s32.totalorder %s16, 3
      %p274 = pnand %p272, %p273
      %p275 = pneg %p274
      // Predicated region
      $region64: #{tpu_custom_call.1} parent=5 // pred_check
        _
      $region65: #{tpu_custom_call.1} parent=5 // pred_check_branch
        %277 = sbr.rel (%p274) target = $region67
      $region66: #{tpu_custom_call.1} parent=5 // pred_region
        %s278 = ssub.s32 %s16, 1
        %s279 = sand.u32 %s29, 1
        %s280 = sand.u32 %s29, 1
        %s281 = smul.addr %s280, 64
        %s282 = scalar_lea.vmem [#allocation2], %s281
        // Predicated region
        $region68: #{tpu_custom_call.1} parent=66 // pred_check
          %p283 = pneg %p42
        $region69: #{tpu_custom_call.1} parent=66 // pred_check_branch
          %285 = sbr.rel (%p283) target = $region71
        $region70: #{tpu_custom_call.1} parent=66 // pred_region
          _
        $region71: #{tpu_custom_call.1} parent=66 // pred_fallthru
          _
        %s286 = sand.u32 %s29, 1
        %s287 = sand.u32 %s29, 1
        %s288 = smul.addr %s287, 64
        %s289 = scalar_lea.vmem [#allocation2], %s288
        %p290 = pneg %p42
        %p291 = pneg %p39
        %p292 = pneg %p63
        %p293 = pneg %p60
        %p294 = pneg %p84
        %p295 = pneg %p81
        %p296 = pneg %p105
        %p297 = pneg %p102
        %p298 = pneg %p126
        %p299 = pneg %p123
        %p300 = pneg %p147
        %p301 = pneg %p144
        %p302 = pneg %p168
        %p303 = pneg %p165
        %p304 = pneg %p194
        %p305 = pneg %p191
        %s306 = sand.u32 %s181, 1
        %s307 = scalar_lea.sflag [#allocation4], %s306
        %s308 = sand.u32 %s181, 1
        %s309 = smul.addr %s308, 64
        %s310 = scalar_lea.vmem [#allocation3], %s309
        %s311 = smul.u32 4, %s21
        %s312 = smul.u32 4, %s21
        %v314 = vld [vmem:[%s282] sm:$0xff]
        %v315 = vld [vmem:[%s282 + $0x8] sm:$0xff]
        %v316 = vld [vmem:[%s282 + $0x10] sm:$0xff]
        %v317 = vld [vmem:[%s282 + $0x18] sm:$0xff]
        %v318 = vld [vmem:[%s282 + $0x20] sm:$0xff]
        %v319 = vld [vmem:[%s282 + $0x28] sm:$0xff]
        %v320 = vld [vmem:[%s282 + $0x30] sm:$0xff]
        %v321 = vld [vmem:[%s282 + $0x38] sm:$0xff]
        %v322 = vld [vmem:[%s1] sm:$0xff]
        %v323 = vld [vmem:[%s1 + $0x8] sm:$0xff]
        %v324 = vld [vmem:[%s1 + $0x10] sm:$0xff]
        %v325 = vld [vmem:[%s1 + $0x18] sm:$0xff]
        %v326 = vld [vmem:[%s2] sm:$0xf]
        %v327 = vld [vmem:[%s2 + $0x4] sm:$0xf]
        %v328 = vld [vmem:[%s2 + $0x8] sm:$0xf]
        %v329 = vld [vmem:[%s2 + $0xc] sm:$0xf]
        %v330 = vld [vmem:[%s2 + $0x10] sm:$0xf]
        %v331 = vld [vmem:[%s2 + $0x14] sm:$0xf]
        %v332 = vld [vmem:[%s2 + $0x18] sm:$0xf]
        %v333 = vld [vmem:[%s2 + $0x1c] sm:$0xf]
        %v334 = vld [vmem:[%s2 + $0x20] sm:$0xf]
        %v335 = vld [vmem:[%s2 + $0x24] sm:$0xf]
        %v336 = vld [vmem:[%s2 + $0x28] sm:$0xf]
        %v337 = vld [vmem:[%s2 + $0x2c] sm:$0xf]
        %v338 = vld [vmem:[%s2 + $0x30] sm:$0xf]
        %v339 = vld [vmem:[%s2 + $0x34] sm:$0xf]
        %v340 = vld [vmem:[%s2 + $0x38] sm:$0xf]
        %v341 = vld [vmem:[%s2 + $0x3c] sm:$0xf]
        %v342 = vld [vmem:[%s2 + $0x40] sm:$0xf]
        %v343 = vld [vmem:[%s2 + $0x44] sm:$0xf]
        %v344 = vld [vmem:[%s2 + $0x48] sm:$0xf]
        %v345 = vld [vmem:[%s2 + $0x4c] sm:$0xf]
        %v346 = vld [vmem:[%s2 + $0x50] sm:$0xf]
        %v347 = vld [vmem:[%s2 + $0x54] sm:$0xf]
        %v348 = vld [vmem:[%s2 + $0x58] sm:$0xf]
        %v349 = vld [vmem:[%s2 + $0x5c] sm:$0xf]
        %v350 = vld [vmem:[%s2 + $0x60] sm:$0xf]
        %v351 = vld [vmem:[%s2 + $0x64] sm:$0xf]
        %v352 = vld [vmem:[%s2 + $0x68] sm:$0xf]
        %v353 = vld [vmem:[%s2 + $0x6c] sm:$0xf]
        %v354 = vld [vmem:[%s2 + $0x70] sm:$0xf]
        %v355 = vld [vmem:[%s2 + $0x74] sm:$0xf]
        %v356 = vld [vmem:[%s2 + $0x78] sm:$0xf]
        %v357 = vld [vmem:[%s2 + $0x7c] sm:$0xf]
        %v358 = vld [vmem:[%s2 + $0x80] sm:$0xf]
        %v359 = vld [vmem:[%s2 + $0x84] sm:$0xf]
        %v360 = vld [vmem:[%s2 + $0x88] sm:$0xf]
        %v361 = vld [vmem:[%s2 + $0x8c] sm:$0xf]
        %v362 = vld [vmem:[%s2 + $0x90] sm:$0xf]
        %v363 = vld [vmem:[%s2 + $0x94] sm:$0xf]
        %v364 = vld [vmem:[%s2 + $0x98] sm:$0xf]
        %v365 = vld [vmem:[%s2 + $0x9c] sm:$0xf]
        %v366 = vld [vmem:[%s2 + $0xa0] sm:$0xf]
        %v367 = vld [vmem:[%s2 + $0xa4] sm:$0xf]
        %v368 = vld [vmem:[%s2 + $0xa8] sm:$0xf]
        %v369 = vld [vmem:[%s2 + $0xac] sm:$0xf]
        %v370 = vld [vmem:[%s2 + $0xb0] sm:$0xf]
        %v371 = vld [vmem:[%s2 + $0xb4] sm:$0xf]
        %v372 = vld [vmem:[%s2 + $0xb8] sm:$0xf]
        %v373 = vld [vmem:[%s2 + $0xbc] sm:$0xf]
        %v374 = vld [vmem:[%s2 + $0xc0] sm:$0xf]
        %v375 = vld [vmem:[%s2 + $0xc4] sm:$0xf]
        %v376 = vld [vmem:[%s2 + $0xc8] sm:$0xf]
        %v377 = vld [vmem:[%s2 + $0xcc] sm:$0xf]
        %v378 = vld [vmem:[%s2 + $0xd0] sm:$0xf]
        %v379 = vld [vmem:[%s2 + $0xd4] sm:$0xf]
        %v380 = vld [vmem:[%s2 + $0xd8] sm:$0xf]
        %v381 = vld [vmem:[%s2 + $0xdc] sm:$0xf]
        %v382 = vld [vmem:[%s2 + $0xe0] sm:$0xf]
        %v383 = vld [vmem:[%s2 + $0xe4] sm:$0xf]
        %v384 = vld [vmem:[%s2 + $0xe8] sm:$0xf]
        %v385 = vld [vmem:[%s2 + $0xec] sm:$0xf]
        %v386 = vld [vmem:[%s2 + $0xf0] sm:$0xf]
        %v387 = vld [vmem:[%s2 + $0xf4] sm:$0xf]
        %v388 = vld [vmem:[%s2 + $0xf8] sm:$0xf]
        %v389 = vld [vmem:[%s2 + $0xfc] sm:$0xf]
        %v390 = vld [vmem:[%s3] sm:$0xff]
        %v391 = vld [vmem:[%s3 + $0x8] sm:$0xff]
        %v392 = vld [vmem:[%s3 + $0x10] sm:$0xff]
        %v393 = vld [vmem:[%s3 + $0x18] sm:$0xff]
        %v394 = vld [vmem:[%s3 + $0x20] sm:$0xff]
        %v395 = vld [vmem:[%s3 + $0x28] sm:$0xff]
        %v396 = vld [vmem:[%s3 + $0x30] sm:$0xff]
        %v397 = vld [vmem:[%s3 + $0x38] sm:$0xff]
        %v398 = vlaneseq
        %v399 = vshrl.u32 %v398, 7
        %vm400 = vcmp.eq.s32.totalorder %v399, 0
        %v401 = vsel %vm400, 1, 0
        %v402 = vcvt.s32.f32 %v401
        %v403 = vpack.c.bf16 %v402, %v402
        %v404 = vmul.f32 %v314, %v314
        %v405 = vmul.f32 %v315, %v315
        %v406 = vmul.f32 %v316, %v316
        %v407 = vmul.f32 %v317, %v317
        %v408 = vmul.f32 %v318, %v318
        %v409 = vmul.f32 %v319, %v319
        %v410 = vmul.f32 %v320, %v320
        %v411 = vmul.f32 %v321, %v321
        %v412 = vpack.c.bf16 %v318, %v314
        %v413 = vpack.c.bf16 %v319, %v315
        %v414 = vpack.c.bf16 %v320, %v316
        %v415 = vpack.c.bf16 %v321, %v317
        %v416 = vpack.c.bf16 %v408, %v404
        %v417 = vpack.c.bf16 %v409, %v405
        %v418 = vpack.c.bf16 %v410, %v406
        %v419 = vpack.c.bf16 %v411, %v407
        %v420 = vunpack.c.l.bf16 %v412
        %v421 = vunpack.c.l.bf16 %v413
        %v422 = vunpack.c.l.bf16 %v414
        %v423 = vunpack.c.l.bf16 %v415
        %v424 = vunpack.c.h.bf16 %v412
        %v425 = vunpack.c.h.bf16 %v413
        %v426 = vunpack.c.h.bf16 %v414
        %v427 = vunpack.c.h.bf16 %v415
        %v428 = vunpack.c.l.bf16 %v416
        %v429 = vunpack.c.l.bf16 %v417
        %v430 = vunpack.c.l.bf16 %v418
        %v431 = vunpack.c.l.bf16 %v419
        %v432 = vunpack.c.h.bf16 %v416
        %v433 = vunpack.c.h.bf16 %v417
        %v434 = vunpack.c.h.bf16 %v418
        %v435 = vunpack.c.h.bf16 %v419
        %v436 = vsub.f32 %v314, %v420
        %v437 = vsub.f32 %v315, %v421
        %v438 = vsub.f32 %v316, %v422
        %v439 = vsub.f32 %v317, %v423
        %v440 = vsub.f32 %v318, %v424
        %v441 = vsub.f32 %v319, %v425
        %v442 = vsub.f32 %v320, %v426
        %v443 = vsub.f32 %v321, %v427
        %v444 = vsub.f32 %v404, %v428
        %v445 = vsub.f32 %v405, %v429
        %v446 = vsub.f32 %v406, %v430
        %v447 = vsub.f32 %v407, %v431
        %v448 = vsub.f32 %v408, %v432
        %v449 = vsub.f32 %v409, %v433
        %v450 = vsub.f32 %v410, %v434
        %v451 = vsub.f32 %v411, %v435
        %v452 = vpack.c.bf16 %v440, %v436
        %v453 = vpack.c.bf16 %v441, %v437
        %v454 = vpack.c.bf16 %v442, %v438
        %v455 = vpack.c.bf16 %v443, %v439
        %v456 = vpack.c.bf16 %v448, %v444
        %v457 = vpack.c.bf16 %v449, %v445
        %v458 = vpack.c.bf16 %v450, %v446
        %v459 = vpack.c.bf16 %v451, %v447
        %v524 = vunpack.c.l.b16 %v326
        %v525 = vunpack.c.l.b16 %v327
        %v526 = vunpack.c.l.b16 %v328
        %v527 = vunpack.c.l.b16 %v329
        %v528 = vunpack.c.l.b16 %v330
        %v529 = vunpack.c.l.b16 %v331
        %v530 = vunpack.c.l.b16 %v332
        %v531 = vunpack.c.l.b16 %v333
        %v532 = vunpack.c.l.b16 %v334
        %v533 = vunpack.c.l.b16 %v335
        %v534 = vunpack.c.l.b16 %v336
        %v535 = vunpack.c.l.b16 %v337
        %v536 = vunpack.c.l.b16 %v338
        %v537 = vunpack.c.l.b16 %v339
        %v538 = vunpack.c.l.b16 %v340
        %v539 = vunpack.c.l.b16 %v341
        %v540 = vunpack.c.l.b16 %v342
        %v541 = vunpack.c.l.b16 %v343
        %v542 = vunpack.c.l.b16 %v344
        %v543 = vunpack.c.l.b16 %v345
        %v544 = vunpack.c.l.b16 %v346
        %v545 = vunpack.c.l.b16 %v347
        %v546 = vunpack.c.l.b16 %v348
        %v547 = vunpack.c.l.b16 %v349
        %v548 = vunpack.c.l.b16 %v350
        %v549 = vunpack.c.l.b16 %v351
        %v550 = vunpack.c.l.b16 %v352
        %v551 = vunpack.c.l.b16 %v353
        %v552 = vunpack.c.l.b16 %v354
        %v553 = vunpack.c.l.b16 %v355
        %v554 = vunpack.c.l.b16 %v356
        %v555 = vunpack.c.l.b16 %v357
        %v556 = vunpack.c.l.b16 %v358
        %v557 = vunpack.c.l.b16 %v359
        %v558 = vunpack.c.l.b16 %v360
        %v559 = vunpack.c.l.b16 %v361
        %v560 = vunpack.c.l.b16 %v362
        %v561 = vunpack.c.l.b16 %v363
        %v562 = vunpack.c.l.b16 %v364
        %v563 = vunpack.c.l.b16 %v365
        %v564 = vunpack.c.l.b16 %v366
        %v565 = vunpack.c.l.b16 %v367
        %v566 = vunpack.c.l.b16 %v368
        %v567 = vunpack.c.l.b16 %v369
        %v568 = vunpack.c.l.b16 %v370
        %v569 = vunpack.c.l.b16 %v371
        %v570 = vunpack.c.l.b16 %v372
        %v571 = vunpack.c.l.b16 %v373
        %v572 = vunpack.c.l.b16 %v374
        %v573 = vunpack.c.l.b16 %v375
        %v574 = vunpack.c.l.b16 %v376
        %v575 = vunpack.c.l.b16 %v377
        %v576 = vunpack.c.l.b16 %v378
        %v577 = vunpack.c.l.b16 %v379
        %v578 = vunpack.c.l.b16 %v380
        %v579 = vunpack.c.l.b16 %v381
        %v580 = vunpack.c.l.b16 %v382
        %v581 = vunpack.c.l.b16 %v383
        %v582 = vunpack.c.l.b16 %v384
        %v583 = vunpack.c.l.b16 %v385
        %v584 = vunpack.c.l.b16 %v386
        %v585 = vunpack.c.l.b16 %v387
        %v586 = vunpack.c.l.b16 %v388
        %v587 = vunpack.c.l.b16 %v389
        %v588 = vpack.c.b16 %v525, %v524
        %v589 = vpack.c.b16 %v527, %v526
        %v590 = vpack.c.b16 %v529, %v528
        %v591 = vpack.c.b16 %v531, %v530
        %v592 = vpack.c.b16 %v533, %v532
        %v593 = vpack.c.b16 %v535, %v534
        %v594 = vpack.c.b16 %v537, %v536
        %v595 = vpack.c.b16 %v539, %v538
        %v596 = vpack.c.b16 %v541, %v540
        %v597 = vpack.c.b16 %v543, %v542
        %v598 = vpack.c.b16 %v545, %v544
        %v599 = vpack.c.b16 %v547, %v546
        %v600 = vpack.c.b16 %v549, %v548
        %v601 = vpack.c.b16 %v551, %v550
        %v602 = vpack.c.b16 %v553, %v552
        %v603 = vpack.c.b16 %v555, %v554
        %v604 = vpack.c.b16 %v557, %v556
        %v605 = vpack.c.b16 %v559, %v558
        %v606 = vpack.c.b16 %v561, %v560
        %v607 = vpack.c.b16 %v563, %v562
        %v608 = vpack.c.b16 %v565, %v564
        %v609 = vpack.c.b16 %v567, %v566
        %v610 = vpack.c.b16 %v569, %v568
        %v611 = vpack.c.b16 %v571, %v570
        %v612 = vpack.c.b16 %v573, %v572
        %v613 = vpack.c.b16 %v575, %v574
        %v614 = vpack.c.b16 %v577, %v576
        %v615 = vpack.c.b16 %v579, %v578
        %v616 = vpack.c.b16 %v581, %v580
        %v617 = vpack.c.b16 %v583, %v582
        %v618 = vpack.c.b16 %v585, %v584
        %v619 = vpack.c.b16 %v587, %v586
        %652 = vmatprep.subr.bf16.mxu0 0
        %653 = vmatpush1.bf16.msra.mxu0 %v595
        %654 = vmatprep.subr.bf16.mxu0 0
        %655 = vmatpush1.bf16.msra.mxu0 %v594
        %656 = vmatprep.subr.bf16.mxu0 0
        %657 = vmatpush1.bf16.msra.mxu0 %v593
        %658 = vmatprep.subr.bf16.mxu0 0
        %659 = vmatpush1.bf16.msra.mxu0 %v592
        %660 = vmatprep.subr.bf16.mxu0 0
        %661 = vmatpush1.bf16.msra.mxu0 %v591
        %662 = vmatprep.subr.bf16.mxu0 0
        %663 = vmatpush1.bf16.msra.mxu0 %v590
        %664 = vmatprep.subr.bf16.mxu0 0
        %665 = vmatpush1.bf16.msra.mxu0 %v589
        %666 = vmatprep.subr.bf16.mxu0 0
        %667 = vmatpush1.bf16.msra.mxu0 %v588
        %668 = vmatprep.subr.bf16.mxu0 0
        %669 = vmatpush2.bf16.msra.mxu0 %v603
        %670 = vmatprep.subr.bf16.mxu0 0
        %671 = vmatpush2.bf16.msra.mxu0 %v602
        %672 = vmatprep.subr.bf16.mxu0 0
        %673 = vmatpush2.bf16.msra.mxu0 %v601
        %674 = vmatprep.subr.bf16.mxu0 0
        %675 = vmatpush2.bf16.msra.mxu0 %v600
        %676 = vmatprep.subr.bf16.mxu0 0
        %677 = vmatpush2.bf16.msra.mxu0 %v599
        %678 = vmatprep.subr.bf16.mxu0 0
        %679 = vmatpush2.bf16.msra.mxu0 %v598
        %680 = vmatprep.subr.bf16.mxu0 0
        %681 = vmatpush2.bf16.msra.mxu0 %v597
        %682 = vmatprep.subr.bf16.mxu0 0
        %683 = vmatpush2.bf16.msra.mxu0 %v596
        %684 = vmatprep.mubr.bf16.mxu0 %v453
        %685 = vmatmul.mubr.bf16.gmra.mxu0 %v452
        %v686 = vpop.f32.mrf.mxu0
        %v687 = vadd.f32 0.0, %v686
        %v688 = vpop.f32.mrf.mxu0
        %v689 = vpop.f32.mrf.mxu0
        %v690 = vadd.f32 0.0, %v689
        %v691 = vpop.f32.mrf.mxu0
        %692 = vmatprep.mubr.bf16.mxu0 %v457
        %693 = vmatmul.mubr.bf16.gmra.mxu0 %v456
        %v694 = vpop.f32.mrf.mxu0
        %v695 = vadd.f32 0.0, %v694
        %v696 = vpop.f32.mrf.mxu0
        %v697 = vpop.f32.mrf.mxu0
        %v698 = vadd.f32 0.0, %v697
        %v699 = vpop.f32.mrf.mxu0
        %700 = vdwg.mxu0
        %701 = vmatprep.subr.bf16.mxu0 0
        %702 = vmatpush1.bf16.msra.mxu0 %v611
        %703 = vmatprep.subr.bf16.mxu0 0
        %704 = vmatpush1.bf16.msra.mxu0 %v610
        %705 = vmatprep.subr.bf16.mxu0 0
        %706 = vmatpush1.bf16.msra.mxu0 %v609
        %707 = vmatprep.subr.bf16.mxu0 0
        %708 = vmatpush1.bf16.msra.mxu0 %v608
        %709 = vmatprep.subr.bf16.mxu0 0
        %710 = vmatpush1.bf16.msra.mxu0 %v607
        %711 = vmatprep.subr.bf16.mxu0 0
        %712 = vmatpush1.bf16.msra.mxu0 %v606
        %713 = vmatprep.subr.bf16.mxu0 0
        %714 = vmatpush1.bf16.msra.mxu0 %v605
        %715 = vmatprep.subr.bf16.mxu0 0
        %716 = vmatpush1.bf16.msra.mxu0 %v604
        %717 = vmatprep.subr.bf16.mxu0 0
        %718 = vmatpush2.bf16.msra.mxu0 %v619
        %719 = vmatprep.subr.bf16.mxu0 0
        %720 = vmatpush2.bf16.msra.mxu0 %v618
        %721 = vmatprep.subr.bf16.mxu0 0
        %722 = vmatpush2.bf16.msra.mxu0 %v617
        %723 = vmatprep.subr.bf16.mxu0 0
        %724 = vmatpush2.bf16.msra.mxu0 %v616
        %725 = vmatprep.subr.bf16.mxu0 0
        %726 = vmatpush2.bf16.msra.mxu0 %v615
        %727 = vmatprep.subr.bf16.mxu0 0
        %728 = vmatpush2.bf16.msra.mxu0 %v614
        %729 = vmatprep.subr.bf16.mxu0 0
        %730 = vmatpush2.bf16.msra.mxu0 %v613
        %731 = vmatprep.subr.bf16.mxu0 0
        %732 = vmatpush2.bf16.msra.mxu0 %v612
        %733 = vmatprep.mubr.bf16.mxu0 %v455
        %734 = vmatmul.mubr.bf16.gmra.mxu0 %v454
        %v735 = vpop.f32.mrf.mxu0
        %v736 = vadd.f32 %v687, %v735
        %v737 = vpop.f32.mrf.mxu0
        %v738 = vpop.f32.mrf.mxu0
        %v739 = vadd.f32 %v690, %v738
        %v740 = vpop.f32.mrf.mxu0
        %741 = vmatprep.mubr.bf16.mxu0 %v459
        %742 = vmatmul.mubr.bf16.gmra.mxu0 %v458
        %v743 = vpop.f32.mrf.mxu0
        %v744 = vadd.f32 %v695, %v743
        %v745 = vpop.f32.mrf.mxu0
        %v746 = vpop.f32.mrf.mxu0
        %v747 = vadd.f32 %v698, %v746
        %v748 = vpop.f32.mrf.mxu0
        %749 = vdwg.mxu0
        %750 = vmatprep.subr.bf16.mxu0 0
        %751 = vmatpush1.bf16.msra.mxu0 %v595
        %752 = vmatprep.subr.bf16.mxu0 0
        %753 = vmatpush1.bf16.msra.mxu0 %v594
        %754 = vmatprep.subr.bf16.mxu0 0
        %755 = vmatpush1.bf16.msra.mxu0 %v593
        %756 = vmatprep.subr.bf16.mxu0 0
        %757 = vmatpush1.bf16.msra.mxu0 %v592
        %758 = vmatprep.subr.bf16.mxu0 0
        %759 = vmatpush1.bf16.msra.mxu0 %v591
        %760 = vmatprep.subr.bf16.mxu0 0
        %761 = vmatpush1.bf16.msra.mxu0 %v590
        %762 = vmatprep.subr.bf16.mxu0 0
        %763 = vmatpush1.bf16.msra.mxu0 %v589
        %764 = vmatprep.subr.bf16.mxu0 0
        %765 = vmatpush1.bf16.msra.mxu0 %v588
        %766 = vmatprep.subr.bf16.mxu0 0
        %767 = vmatpush2.bf16.msra.mxu0 %v603
        %768 = vmatprep.subr.bf16.mxu0 0
        %769 = vmatpush2.bf16.msra.mxu0 %v602
        %770 = vmatprep.subr.bf16.mxu0 0
        %771 = vmatpush2.bf16.msra.mxu0 %v601
        %772 = vmatprep.subr.bf16.mxu0 0
        %773 = vmatpush2.bf16.msra.mxu0 %v600
        %774 = vmatprep.subr.bf16.mxu0 0
        %775 = vmatpush2.bf16.msra.mxu0 %v599
        %776 = vmatprep.subr.bf16.mxu0 0
        %777 = vmatpush2.bf16.msra.mxu0 %v598
        %778 = vmatprep.subr.bf16.mxu0 0
        %779 = vmatpush2.bf16.msra.mxu0 %v597
        %780 = vmatprep.subr.bf16.mxu0 0
        %781 = vmatpush2.bf16.msra.mxu0 %v596
        %782 = vmatprep.mubr.bf16.mxu0 %v413
        %783 = vmatmul.mubr.bf16.gmra.mxu0 %v412
        %v784 = vpop.f32.mrf.mxu0
        %v785 = vadd.f32 %v736, %v784
        %v786 = vpop.f32.mrf.mxu0
        %v787 = vpop.f32.mrf.mxu0
        %v788 = vadd.f32 %v739, %v787
        %v789 = vpop.f32.mrf.mxu0
        %790 = vmatprep.mubr.bf16.mxu0 %v417
        %791 = vmatmul.mubr.bf16.gmra.mxu0 %v416
        %v792 = vpop.f32.mrf.mxu0
        %v793 = vadd.f32 %v744, %v792
        %v794 = vpop.f32.mrf.mxu0
        %v795 = vpop.f32.mrf.mxu0
        %v796 = vadd.f32 %v747, %v795
        %v797 = vpop.f32.mrf.mxu0
        %798 = vdwg.mxu0
        %799 = vmatprep.subr.bf16.mxu0 0
        %800 = vmatpush1.bf16.msra.mxu0 %v611
        %801 = vmatprep.subr.bf16.mxu0 0
        %802 = vmatpush1.bf16.msra.mxu0 %v610
        %803 = vmatprep.subr.bf16.mxu0 0
        %804 = vmatpush1.bf16.msra.mxu0 %v609
        %805 = vmatprep.subr.bf16.mxu0 0
        %806 = vmatpush1.bf16.msra.mxu0 %v608
        %807 = vmatprep.subr.bf16.mxu0 0
        %808 = vmatpush1.bf16.msra.mxu0 %v607
        %809 = vmatprep.subr.bf16.mxu0 0
        %810 = vmatpush1.bf16.msra.mxu0 %v606
        %811 = vmatprep.subr.bf16.mxu0 0
        %812 = vmatpush1.bf16.msra.mxu0 %v605
        %813 = vmatprep.subr.bf16.mxu0 0
        %814 = vmatpush1.bf16.msra.mxu0 %v604
        %815 = vmatprep.subr.bf16.mxu0 0
        %816 = vmatpush2.bf16.msra.mxu0 %v619
        %817 = vmatprep.subr.bf16.mxu0 0
        %818 = vmatpush2.bf16.msra.mxu0 %v618
        %819 = vmatprep.subr.bf16.mxu0 0
        %820 = vmatpush2.bf16.msra.mxu0 %v617
        %821 = vmatprep.subr.bf16.mxu0 0
        %822 = vmatpush2.bf16.msra.mxu0 %v616
        %823 = vmatprep.subr.bf16.mxu0 0
        %824 = vmatpush2.bf16.msra.mxu0 %v615
        %825 = vmatprep.subr.bf16.mxu0 0
        %826 = vmatpush2.bf16.msra.mxu0 %v614
        %827 = vmatprep.subr.bf16.mxu0 0
        %828 = vmatpush2.bf16.msra.mxu0 %v613
        %829 = vmatprep.subr.bf16.mxu0 0
        %830 = vmatpush2.bf16.msra.mxu0 %v612
        %831 = vmatprep.mubr.bf16.mxu0 %v415
        %832 = vmatmul.mubr.bf16.gmra.mxu0 %v414
        %v833 = vpop.f32.mrf.mxu0
        %v834 = vadd.f32 %v785, %v833
        %v835 = vpop.f32.mrf.mxu0
        %v836 = vpop.f32.mrf.mxu0
        %v837 = vadd.f32 %v788, %v836
        %v838 = vpop.f32.mrf.mxu0
        %839 = vmatprep.mubr.bf16.mxu0 %v419
        %840 = vmatmul.mubr.bf16.gmra.mxu0 %v418
        %v841 = vpop.f32.mrf.mxu0
        %v842 = vadd.f32 %v793, %v841
        %v843 = vpop.f32.mrf.mxu0
        %v844 = vpop.f32.mrf.mxu0
        %v845 = vadd.f32 %v796, %v844
        %v846 = vpop.f32.mrf.mxu0
        %847 = vdwg.mxu0
        %v848 = vmul.f32 %v834, 0.0625
        %v849 = vmul.f32 %v837, 0.0625
        %v850 = vmul.f32 %v842, 0.0625
        %v851 = vmul.f32 %v845, 0.0625
        %v852 = vmul.f32 %v848, %v848
        %v853 = vmul.f32 %v849, %v849
        %v854 = vsub.f32 %v850, %v852
        %v855 = vsub.f32 %v851, %v853
        %v856 = vadd.f32 %v854, 1e-05
        %v857 = vadd.f32 %v855, 1e-05
        %v858 = vrsqrt.pop %v856
        %v859 = vrsqrt.pop %v857
        %v860 = vmul.f32 %v848, %v858
        %v861 = vmul.f32 %v849, %v859
        %v862 = vpack.c.bf16 %v859, %v858
        %v863 = vpack.c.bf16 %v861, %v860
        %v864 = vunpack.c.l.bf16 %v862
        %v865 = vunpack.c.h.bf16 %v862
        %v866 = vunpack.c.l.bf16 %v863
        %v867 = vunpack.c.h.bf16 %v863
        %v868 = vsub.f32 %v858, %v864
        %v869 = vsub.f32 %v859, %v865
        %v870 = vsub.f32 %v860, %v866
        %v871 = vsub.f32 %v861, %v867
        %v872 = vpack.c.bf16 %v869, %v868
        %v873 = vpack.c.bf16 %v871, %v870
        %v882 = vunpack.c.l.b16 %v390
        %v883 = vunpack.c.h.b16 %v390
        %v884 = vunpack.c.l.b16 %v391
        %v885 = vunpack.c.h.b16 %v391
        %v886 = vunpack.c.l.b16 %v392
        %v887 = vunpack.c.h.b16 %v392
        %v888 = vunpack.c.l.b16 %v393
        %v889 = vunpack.c.h.b16 %v393
        %v890 = vunpack.c.l.b16 %v394
        %v891 = vunpack.c.h.b16 %v394
        %v892 = vunpack.c.l.b16 %v395
        %v893 = vunpack.c.h.b16 %v395
        %v894 = vunpack.c.l.b16 %v396
        %v895 = vunpack.c.h.b16 %v396
        %v896 = vunpack.c.l.b16 %v397
        %v897 = vunpack.c.h.b16 %v397
        %v898 = vpack.c.b16 %v886, %v882
        %v899 = vpack.c.b16 %v887, %v883
        %v900 = vpack.c.b16 %v888, %v884
        %v901 = vpack.c.b16 %v889, %v885
        %v902 = vpack.c.b16 %v894, %v890
        %v903 = vpack.c.b16 %v895, %v891
        %v904 = vpack.c.b16 %v896, %v892
        %v905 = vpack.c.b16 %v897, %v893
        %vm914 = vcmask 261120
        %v916 = vsel %vm914, %v872, 0
        %v919 = vsel %vm914, %v873, 0
        %921 = vmatprep.subr.bf16.mxu0 0
        %922 = vmatpush1.bf16.msra.mxu0 0
        %923 = vmatprep.subr.bf16.mxu0 0
        %924 = vmatpush1.bf16.msra.mxu0 0
        %925 = vmatprep.subr.bf16.mxu0 0
        %926 = vmatpush1.bf16.msra.mxu0 0
        %927 = vmatprep.subr.bf16.mxu0 0
        %928 = vmatpush1.bf16.msra.mxu0 0
        %929 = vmatprep.subr.bf16.mxu0 0
        %930 = vmatpush1.bf16.msra.mxu0 0
        %931 = vmatprep.subr.bf16.mxu0 0
        %932 = vmatpush1.bf16.msra.mxu0 0
        %933 = vmatprep.subr.bf16.mxu0 %v903
        %934 = vmatpush1.bf16.msra.mxu0 %v902
        %935 = vmatprep.subr.bf16.mxu0 %v899
        %936 = vmatpush1.bf16.msra.mxu0 %v898
        %937 = vmatprep.subr.bf16.mxu0 0
        %938 = vmatpush2.bf16.msra.mxu0 0
        %939 = vmatprep.subr.bf16.mxu0 0
        %940 = vmatpush2.bf16.msra.mxu0 0
        %941 = vmatprep.subr.bf16.mxu0 0
        %942 = vmatpush2.bf16.msra.mxu0 0
        %943 = vmatprep.subr.bf16.mxu0 0
        %944 = vmatpush2.bf16.msra.mxu0 0
        %945 = vmatprep.subr.bf16.mxu0 0
        %946 = vmatpush2.bf16.msra.mxu0 0
        %947 = vmatprep.subr.bf16.mxu0 0
        %948 = vmatpush2.bf16.msra.mxu0 0
        %949 = vmatprep.subr.bf16.mxu0 0
        %950 = vmatpush2.bf16.msra.mxu0 0
        %951 = vmatprep.subr.bf16.mxu0 0
        %952 = vmatpush2.bf16.msra.mxu0 0
        %953 = vmatprep.mubr.bf16.mxu0 0
        %954 = vmatmul.mubr.bf16.gmra.mxu0 %v916
        %v955 = vpop.f32.mrf.mxu0
        %v956 = vadd.f32 0.0, %v955
        %v957 = vpop.f32.mrf.mxu0
        %v958 = vadd.f32 0.0, %v957
        %v959 = vpop.f32.mrf.mxu0
        %v960 = vadd.f32 0.0, %v959
        %v961 = vpop.f32.mrf.mxu0
        %v962 = vadd.f32 0.0, %v961
        %963 = vmatprep.mubr.bf16.mxu0 0
        %964 = vmatmul.mubr.bf16.gmra.mxu0 %v919
        %v965 = vpop.f32.mrf.mxu0
        %v966 = vadd.f32 0.0, %v965
        %v967 = vpop.f32.mrf.mxu0
        %v968 = vadd.f32 0.0, %v967
        %v969 = vpop.f32.mrf.mxu0
        %v970 = vadd.f32 0.0, %v969
        %v971 = vpop.f32.mrf.mxu0
        %v972 = vadd.f32 0.0, %v971
        %973 = vdwg.mxu0
        %974 = vmatprep.subr.bf16.mxu0 0
        %975 = vmatpush1.bf16.msra.mxu0 0
        %976 = vmatprep.subr.bf16.mxu0 0
        %977 = vmatpush1.bf16.msra.mxu0 0
        %978 = vmatprep.subr.bf16.mxu0 0
        %979 = vmatpush1.bf16.msra.mxu0 0
        %980 = vmatprep.subr.bf16.mxu0 0
        %981 = vmatpush1.bf16.msra.mxu0 0
        %982 = vmatprep.subr.bf16.mxu0 0
        %983 = vmatpush1.bf16.msra.mxu0 0
        %984 = vmatprep.subr.bf16.mxu0 0
        %985 = vmatpush1.bf16.msra.mxu0 0
        %986 = vmatprep.subr.bf16.mxu0 %v905
        %987 = vmatpush1.bf16.msra.mxu0 %v904
        %988 = vmatprep.subr.bf16.mxu0 %v901
        %989 = vmatpush1.bf16.msra.mxu0 %v900
        %990 = vmatprep.subr.bf16.mxu0 0
        %991 = vmatpush2.bf16.msra.mxu0 0
        %992 = vmatprep.subr.bf16.mxu0 0
        %993 = vmatpush2.bf16.msra.mxu0 0
        %994 = vmatprep.subr.bf16.mxu0 0
        %995 = vmatpush2.bf16.msra.mxu0 0
        %996 = vmatprep.subr.bf16.mxu0 0
        %997 = vmatpush2.bf16.msra.mxu0 0
        %998 = vmatprep.subr.bf16.mxu0 0
        %999 = vmatpush2.bf16.msra.mxu0 0
        %1000 = vmatprep.subr.bf16.mxu0 0
        %1001 = vmatpush2.bf16.msra.mxu0 0
        %1002 = vmatprep.subr.bf16.mxu0 0
        %1003 = vmatpush2.bf16.msra.mxu0 0
        %1004 = vmatprep.subr.bf16.mxu0 0
        %1005 = vmatpush2.bf16.msra.mxu0 0
        %1006 = vmatprep.mubr.bf16.mxu0 0
        %1007 = vmatmul.mubr.bf16.gmra.mxu0 %v916
        %v1008 = vpop.f32.mrf.mxu0
        %v1009 = vadd.f32 0.0, %v1008
        %v1010 = vpop.f32.mrf.mxu0
        %v1011 = vadd.f32 0.0, %v1010
        %v1012 = vpop.f32.mrf.mxu0
        %v1013 = vadd.f32 0.0, %v1012
        %v1014 = vpop.f32.mrf.mxu0
        %v1015 = vadd.f32 0.0, %v1014
        %1016 = vmatprep.mubr.bf16.mxu0 0
        %1017 = vmatmul.mubr.bf16.gmra.mxu0 %v919
        %v1018 = vpop.f32.mrf.mxu0
        %v1019 = vadd.f32 0.0, %v1018
        %v1020 = vpop.f32.mrf.mxu0
        %v1021 = vadd.f32 0.0, %v1020
        %v1022 = vpop.f32.mrf.mxu0
        %v1023 = vadd.f32 0.0, %v1022
        %v1024 = vpop.f32.mrf.mxu0
        %v1025 = vadd.f32 0.0, %v1024
        %1026 = vdwg.mxu0
        %v1028 = vsel %vm914, %v862, 0
        %v1031 = vsel %vm914, %v863, 0
        %1033 = vmatprep.subr.bf16.mxu0 0
        %1034 = vmatpush1.bf16.msra.mxu0 0
        %1035 = vmatprep.subr.bf16.mxu0 0
        %1036 = vmatpush1.bf16.msra.mxu0 0
        %1037 = vmatprep.subr.bf16.mxu0 0
        %1038 = vmatpush1.bf16.msra.mxu0 0
        %1039 = vmatprep.subr.bf16.mxu0 0
        %1040 = vmatpush1.bf16.msra.mxu0 0
        %1041 = vmatprep.subr.bf16.mxu0 0
        %1042 = vmatpush1.bf16.msra.mxu0 0
        %1043 = vmatprep.subr.bf16.mxu0 0
        %1044 = vmatpush1.bf16.msra.mxu0 0
        %1045 = vmatprep.subr.bf16.mxu0 %v903
        %1046 = vmatpush1.bf16.msra.mxu0 %v902
        %1047 = vmatprep.subr.bf16.mxu0 %v899
        %1048 = vmatpush1.bf16.msra.mxu0 %v898
        %1049 = vmatprep.subr.bf16.mxu0 0
        %1050 = vmatpush2.bf16.msra.mxu0 0
        %1051 = vmatprep.subr.bf16.mxu0 0
        %1052 = vmatpush2.bf16.msra.mxu0 0
        %1053 = vmatprep.subr.bf16.mxu0 0
        %1054 = vmatpush2.bf16.msra.mxu0 0
        %1055 = vmatprep.subr.bf16.mxu0 0
        %1056 = vmatpush2.bf16.msra.mxu0 0
        %1057 = vmatprep.subr.bf16.mxu0 0
        %1058 = vmatpush2.bf16.msra.mxu0 0
        %1059 = vmatprep.subr.bf16.mxu0 0
        %1060 = vmatpush2.bf16.msra.mxu0 0
        %1061 = vmatprep.subr.bf16.mxu0 0
        %1062 = vmatpush2.bf16.msra.mxu0 0
        %1063 = vmatprep.subr.bf16.mxu0 0
        %1064 = vmatpush2.bf16.msra.mxu0 0
        %1065 = vmatprep.mubr.bf16.mxu0 0
        %1066 = vmatmul.mubr.bf16.gmra.mxu0 %v1028
        %v1067 = vpop.f32.mrf.mxu0
        %v1068 = vadd.f32 %v956, %v1067
        %v1069 = vpop.f32.mrf.mxu0
        %v1070 = vadd.f32 %v958, %v1069
        %v1071 = vpop.f32.mrf.mxu0
        %v1072 = vadd.f32 %v960, %v1071
        %v1073 = vpop.f32.mrf.mxu0
        %v1074 = vadd.f32 %v962, %v1073
        %1075 = vmatprep.mubr.bf16.mxu0 0
        %1076 = vmatmul.mubr.bf16.gmra.mxu0 %v1031
        %v1077 = vpop.f32.mrf.mxu0
        %v1078 = vadd.f32 %v966, %v1077
        %v1079 = vpop.f32.mrf.mxu0
        %v1080 = vadd.f32 %v968, %v1079
        %v1081 = vpop.f32.mrf.mxu0
        %v1082 = vadd.f32 %v970, %v1081
        %v1083 = vpop.f32.mrf.mxu0
        %v1084 = vadd.f32 %v972, %v1083
        %1085 = vdwg.mxu0
        %1086 = vmatprep.subr.bf16.mxu0 0
        %1087 = vmatpush1.bf16.msra.mxu0 0
        %1088 = vmatprep.subr.bf16.mxu0 0
        %1089 = vmatpush1.bf16.msra.mxu0 0
        %1090 = vmatprep.subr.bf16.mxu0 0
        %1091 = vmatpush1.bf16.msra.mxu0 0
        %1092 = vmatprep.subr.bf16.mxu0 0
        %1093 = vmatpush1.bf16.msra.mxu0 0
        %1094 = vmatprep.subr.bf16.mxu0 0
        %1095 = vmatpush1.bf16.msra.mxu0 0
        %1096 = vmatprep.subr.bf16.mxu0 0
        %1097 = vmatpush1.bf16.msra.mxu0 0
        %1098 = vmatprep.subr.bf16.mxu0 %v905
        %1099 = vmatpush1.bf16.msra.mxu0 %v904
        %1100 = vmatprep.subr.bf16.mxu0 %v901
        %1101 = vmatpush1.bf16.msra.mxu0 %v900
        %1102 = vmatprep.subr.bf16.mxu0 0
        %1103 = vmatpush2.bf16.msra.mxu0 0
        %1104 = vmatprep.subr.bf16.mxu0 0
        %1105 = vmatpush2.bf16.msra.mxu0 0
        %1106 = vmatprep.subr.bf16.mxu0 0
        %1107 = vmatpush2.bf16.msra.mxu0 0
        %1108 = vmatprep.subr.bf16.mxu0 0
        %1109 = vmatpush2.bf16.msra.mxu0 0
        %1110 = vmatprep.subr.bf16.mxu0 0
        %1111 = vmatpush2.bf16.msra.mxu0 0
        %1112 = vmatprep.subr.bf16.mxu0 0
        %1113 = vmatpush2.bf16.msra.mxu0 0
        %1114 = vmatprep.subr.bf16.mxu0 0
        %1115 = vmatpush2.bf16.msra.mxu0 0
        %1116 = vmatprep.subr.bf16.mxu0 0
        %1117 = vmatpush2.bf16.msra.mxu0 0
        %1118 = vmatprep.mubr.bf16.mxu0 0
        %1119 = vmatmul.mubr.bf16.gmra.mxu0 %v1028
        %v1120 = vpop.f32.mrf.mxu0
        %v1121 = vadd.f32 %v1009, %v1120
        %v1122 = vpop.f32.mrf.mxu0
        %v1123 = vadd.f32 %v1011, %v1122
        %v1124 = vpop.f32.mrf.mxu0
        %v1125 = vadd.f32 %v1013, %v1124
        %v1126 = vpop.f32.mrf.mxu0
        %v1127 = vadd.f32 %v1015, %v1126
        %1128 = vmatprep.mubr.bf16.mxu0 0
        %1129 = vmatmul.mubr.bf16.gmra.mxu0 %v1031
        %v1130 = vpop.f32.mrf.mxu0
        %v1131 = vadd.f32 %v1019, %v1130
        %v1132 = vpop.f32.mrf.mxu0
        %v1133 = vadd.f32 %v1021, %v1132
        %v1134 = vpop.f32.mrf.mxu0
        %v1135 = vadd.f32 %v1023, %v1134
        %v1136 = vpop.f32.mrf.mxu0
        %v1137 = vadd.f32 %v1025, %v1136
        %1138 = vdwg.mxu0
        %v1139 = vmul.f32 %v314, %v1068
        %v1140 = vmul.f32 %v315, %v1070
        %v1141 = vmul.f32 %v316, %v1121
        %v1142 = vmul.f32 %v317, %v1123
        %v1143 = vmul.f32 %v318, %v1072
        %v1144 = vmul.f32 %v319, %v1074
        %v1145 = vmul.f32 %v320, %v1125
        %v1146 = vmul.f32 %v321, %v1127
        %v1147 = vsub.f32 %v1139, %v1078
        %v1148 = vsub.f32 %v1140, %v1080
        %v1149 = vsub.f32 %v1141, %v1131
        %v1150 = vsub.f32 %v1142, %v1133
        %v1151 = vsub.f32 %v1143, %v1082
        %v1152 = vsub.f32 %v1144, %v1084
        %v1153 = vsub.f32 %v1145, %v1135
        %v1154 = vsub.f32 %v1146, %v1137
        %v1155 = vlaneseq
        %v1156 = vshrl.u32 %v1155, 7
        %v1157 = vsub.s32 0, %v1156
        %v1158 = vrot.slane %v322, %v1157
        %v1159 = vlaneseq
        %v1160 = vshrl.u32 %v1159, 7
        %v1161 = vsub.s32 0, %v1160
        %v1162 = vrot.slane %v323, %v1161
        %v1163 = vlaneseq
        %v1164 = vshrl.u32 %v1163, 7
        %v1165 = vsub.s32 0, %v1164
        %v1166 = vrot.slane %v324, %v1165
        %v1167 = vlaneseq
        %v1168 = vshrl.u32 %v1167, 7
        %v1169 = vsub.s32 0, %v1168
        %v1170 = vrot.slane %v325, %v1169
        %v1171 = vmul.f32 %v1147, %v1158
        %v1172 = vmul.f32 %v1148, %v1162
        %v1173 = vmul.f32 %v1149, %v1166
        %v1174 = vmul.f32 %v1150, %v1170
        %v1175 = vmul.f32 %v1151, %v1158
        %v1176 = vmul.f32 %v1152, %v1162
        %v1177 = vmul.f32 %v1153, %v1166
        %v1178 = vmul.f32 %v1154, %v1170
        %v1179 = vlaneseq
        %v1180 = vshrl.u32 %v1179, 7
        %v1181 = vsub.s32 1, %v1180
        %v1182 = vrot.slane %v322, %v1181
        %v1183 = vlaneseq
        %v1184 = vshrl.u32 %v1183, 7
        %v1185 = vsub.s32 1, %v1184
        %v1186 = vrot.slane %v323, %v1185
        %v1187 = vlaneseq
        %v1188 = vshrl.u32 %v1187, 7
        %v1189 = vsub.s32 1, %v1188
        %v1190 = vrot.slane %v324, %v1189
        %v1191 = vlaneseq
        %v1192 = vshrl.u32 %v1191, 7
        %v1193 = vsub.s32 1, %v1192
        %v1194 = vrot.slane %v325, %v1193
        %v1195 = vadd.f32 %v1171, %v1182
        %v1196 = vadd.f32 %v1172, %v1186
        %v1197 = vadd.f32 %v1173, %v1190
        %v1198 = vadd.f32 %v1174, %v1194
        %v1199 = vadd.f32 %v1175, %v1182
        %v1200 = vadd.f32 %v1176, %v1186
        %v1201 = vadd.f32 %v1177, %v1190
        %v1202 = vadd.f32 %v1178, %v1194
        %v1203 = vmax.f32 %v1195, 0.0
        %v1204 = vmax.f32 %v1196, 0.0
        %v1205 = vmax.f32 %v1197, 0.0
        %v1206 = vmax.f32 %v1198, 0.0
        %v1207 = vmax.f32 %v1199, 0.0
        %v1208 = vmax.f32 %v1200, 0.0
        %v1209 = vmax.f32 %v1201, 0.0
        %v1210 = vmax.f32 %v1202, 0.0
        %v1211 = vpack.c.bf16 %v1207, %v1203
        %v1212 = vpack.c.bf16 %v1208, %v1204
        %v1213 = vpack.c.bf16 %v1209, %v1205
        %v1214 = vpack.c.bf16 %v1210, %v1206
        %v1215 = vld [vmem:[%s4] sm:$0xf]
        %v1216 = vld [vmem:[%s4 + $0x4] sm:$0xf]
        %v1219 = vunpack.c.l.b16 %v1215
        %v1220 = vunpack.c.l.b16 %v1216
        %v1221 = vpack.c.b16 %v1220, %v1219
        %vm1222 = vcmask 195584
        %v1224 = vsel %vm1222, %v1221, 0
        %vm1226 = vcmask 1043456
        %v1228 = vsel %vm1226, %v403, 0
        %1230 = vmatprep.subr.bf16.mxu0 0
        %1231 = vmatpush1.bf16.msra.mxu0 0
        %1232 = vmatprep.subr.bf16.mxu0 0
        %1233 = vmatpush1.bf16.msra.mxu0 0
        %1234 = vmatprep.subr.bf16.mxu0 0
        %1235 = vmatpush1.bf16.msra.mxu0 0
        %1236 = vmatprep.subr.bf16.mxu0 0
        %1237 = vmatpush1.bf16.msra.mxu0 0
        %1238 = vmatprep.subr.bf16.mxu0 0
        %1239 = vmatpush1.bf16.msra.mxu0 0
        %1240 = vmatprep.subr.bf16.mxu0 0
        %1241 = vmatpush1.bf16.msra.mxu0 0
        %1242 = vmatprep.subr.bf16.mxu0 %v1228
        %1243 = vmatpush1.bf16.msra.mxu0 %v1228
        %1244 = vmatprep.subr.bf16.mxu0 %v1212
        %1245 = vmatpush1.bf16.msra.mxu0 %v1211
        %1246 = vmatprep.subr.bf16.mxu0 0
        %1247 = vmatpush2.bf16.msra.mxu0 0
        %1248 = vmatprep.subr.bf16.mxu0 0
        %1249 = vmatpush2.bf16.msra.mxu0 0
        %1250 = vmatprep.subr.bf16.mxu0 0
        %1251 = vmatpush2.bf16.msra.mxu0 0
        %1252 = vmatprep.subr.bf16.mxu0 0
        %1253 = vmatpush2.bf16.msra.mxu0 0
        %1254 = vmatprep.subr.bf16.mxu0 0
        %1255 = vmatpush2.bf16.msra.mxu0 0
        %1256 = vmatprep.subr.bf16.mxu0 0
        %1257 = vmatpush2.bf16.msra.mxu0 0
        %1258 = vmatprep.subr.bf16.mxu0 0
        %1259 = vmatpush2.bf16.msra.mxu0 0
        %1260 = vmatprep.subr.bf16.mxu0 0
        %1261 = vmatpush2.bf16.msra.mxu0 0
        %1262 = vmatprep.mubr.bf16.mxu0 0
        %1263 = vmatmul.mubr.bf16.gmra.mxu0 %v1224
        %v1264 = vpop.f32.mrf.mxu0
        %v1265 = vadd.f32 0.0, %v1264
        %v1266 = vpop.f32.mrf.mxu0
        %v1267 = vadd.f32 0.0, %v1266
        %v1268 = vpop.f32.mrf.mxu0
        %v1269 = vadd.f32 0.0, %v1268
        %v1270 = vpop.f32.mrf.mxu0
        %v1271 = vadd.f32 0.0, %v1270
        %1272 = vdwg.mxu0
        %1273 = vmatprep.subr.bf16.mxu0 0
        %1274 = vmatpush1.bf16.msra.mxu0 0
        %1275 = vmatprep.subr.bf16.mxu0 0
        %1276 = vmatpush1.bf16.msra.mxu0 0
        %1277 = vmatprep.subr.bf16.mxu0 0
        %1278 = vmatpush1.bf16.msra.mxu0 0
        %1279 = vmatprep.subr.bf16.mxu0 0
        %1280 = vmatpush1.bf16.msra.mxu0 0
        %1281 = vmatprep.subr.bf16.mxu0 0
        %1282 = vmatpush1.bf16.msra.mxu0 0
        %1283 = vmatprep.subr.bf16.mxu0 0
        %1284 = vmatpush1.bf16.msra.mxu0 0
        %1285 = vmatprep.subr.bf16.mxu0 %v1228
        %1286 = vmatpush1.bf16.msra.mxu0 %v1228
        %1287 = vmatprep.subr.bf16.mxu0 %v1214
        %1288 = vmatpush1.bf16.msra.mxu0 %v1213
        %1289 = vmatprep.subr.bf16.mxu0 0
        %1290 = vmatpush2.bf16.msra.mxu0 0
        %1291 = vmatprep.subr.bf16.mxu0 0
        %1292 = vmatpush2.bf16.msra.mxu0 0
        %1293 = vmatprep.subr.bf16.mxu0 0
        %1294 = vmatpush2.bf16.msra.mxu0 0
        %1295 = vmatprep.subr.bf16.mxu0 0
        %1296 = vmatpush2.bf16.msra.mxu0 0
        %1297 = vmatprep.subr.bf16.mxu0 0
        %1298 = vmatpush2.bf16.msra.mxu0 0
        %1299 = vmatprep.subr.bf16.mxu0 0
        %1300 = vmatpush2.bf16.msra.mxu0 0
        %1301 = vmatprep.subr.bf16.mxu0 0
        %1302 = vmatpush2.bf16.msra.mxu0 0
        %1303 = vmatprep.subr.bf16.mxu0 0
        %1304 = vmatpush2.bf16.msra.mxu0 0
        %1305 = vmatprep.mubr.bf16.mxu0 0
        %1306 = vmatmul.mubr.bf16.gmra.mxu0 %v1224
        %v1307 = vpop.f32.mrf.mxu0
        %v1308 = vadd.f32 0.0, %v1307
        %v1309 = vpop.f32.mrf.mxu0
        %v1310 = vadd.f32 0.0, %v1309
        %v1311 = vpop.f32.mrf.mxu0
        %v1312 = vadd.f32 0.0, %v1311
        %v1313 = vpop.f32.mrf.mxu0
        %v1314 = vadd.f32 0.0, %v1313
        %1315 = vdwg.mxu0
        %v1316 = vmul.f32 %v1265, %v1265
        %v1317 = vmul.f32 %v1267, %v1267
        %v1318 = vmul.f32 %v1308, %v1308
        %v1319 = vmul.f32 %v1310, %v1310
        %v1320 = vmul.f32 %v1269, %v1269
        %v1321 = vmul.f32 %v1271, %v1271
        %v1322 = vmul.f32 %v1312, %v1312
        %v1323 = vmul.f32 %v1314, %v1314
        %v1324 = vpack.c.bf16 %v1269, %v1265
        %v1325 = vpack.c.bf16 %v1271, %v1267
        %v1326 = vpack.c.bf16 %v1312, %v1308
        %v1327 = vpack.c.bf16 %v1314, %v1310
        %v1328 = vpack.c.bf16 %v1320, %v1316
        %v1329 = vpack.c.bf16 %v1321, %v1317
        %v1330 = vpack.c.bf16 %v1322, %v1318
        %v1331 = vpack.c.bf16 %v1323, %v1319
        %v1332 = vunpack.c.l.bf16 %v1324
        %v1333 = vunpack.c.l.bf16 %v1325
        %v1334 = vunpack.c.l.bf16 %v1326
        %v1335 = vunpack.c.l.bf16 %v1327
        %v1336 = vunpack.c.h.bf16 %v1324
        %v1337 = vunpack.c.h.bf16 %v1325
        %v1338 = vunpack.c.h.bf16 %v1326
        %v1339 = vunpack.c.h.bf16 %v1327
        %v1340 = vunpack.c.l.bf16 %v1328
        %v1341 = vunpack.c.l.bf16 %v1329
        %v1342 = vunpack.c.l.bf16 %v1330
        %v1343 = vunpack.c.l.bf16 %v1331
        %v1344 = vunpack.c.h.bf16 %v1328
        %v1345 = vunpack.c.h.bf16 %v1329
        %v1346 = vunpack.c.h.bf16 %v1330
        %v1347 = vunpack.c.h.bf16 %v1331
        %v1348 = vsub.f32 %v1265, %v1332
        %v1349 = vsub.f32 %v1267, %v1333
        %v1350 = vsub.f32 %v1308, %v1334
        %v1351 = vsub.f32 %v1310, %v1335
        %v1352 = vsub.f32 %v1269, %v1336
        %v1353 = vsub.f32 %v1271, %v1337
        %v1354 = vsub.f32 %v1312, %v1338
        %v1355 = vsub.f32 %v1314, %v1339
        %v1356 = vsub.f32 %v1316, %v1340
        %v1357 = vsub.f32 %v1317, %v1341
        %v1358 = vsub.f32 %v1318, %v1342
        %v1359 = vsub.f32 %v1319, %v1343
        %v1360 = vsub.f32 %v1320, %v1344
        %v1361 = vsub.f32 %v1321, %v1345
        %v1362 = vsub.f32 %v1322, %v1346
        %v1363 = vsub.f32 %v1323, %v1347
        %v1364 = vpack.c.bf16 %v1352, %v1348
        %v1365 = vpack.c.bf16 %v1353, %v1349
        %v1366 = vpack.c.bf16 %v1354, %v1350
        %v1367 = vpack.c.bf16 %v1355, %v1351
        %v1368 = vpack.c.bf16 %v1360, %v1356
        %v1369 = vpack.c.bf16 %v1361, %v1357
        %v1370 = vpack.c.bf16 %v1362, %v1358
        %v1371 = vpack.c.bf16 %v1363, %v1359
        %1372 = vmatprep.subr.bf16.mxu0 0
        %1373 = vmatpush1.bf16.msra.mxu0 %v595
        %1374 = vmatprep.subr.bf16.mxu0 0
        %1375 = vmatpush1.bf16.msra.mxu0 %v594
        %1376 = vmatprep.subr.bf16.mxu0 0
        %1377 = vmatpush1.bf16.msra.mxu0 %v593
        %1378 = vmatprep.subr.bf16.mxu0 0
        %1379 = vmatpush1.bf16.msra.mxu0 %v592
        %1380 = vmatprep.subr.bf16.mxu0 0
        %1381 = vmatpush1.bf16.msra.mxu0 %v591
        %1382 = vmatprep.subr.bf16.mxu0 0
        %1383 = vmatpush1.bf16.msra.mxu0 %v590
        %1384 = vmatprep.subr.bf16.mxu0 0
        %1385 = vmatpush1.bf16.msra.mxu0 %v589
        %1386 = vmatprep.subr.bf16.mxu0 0
        %1387 = vmatpush1.bf16.msra.mxu0 %v588
        %1388 = vmatprep.subr.bf16.mxu0 0
        %1389 = vmatpush2.bf16.msra.mxu0 %v603
        %1390 = vmatprep.subr.bf16.mxu0 0
        %1391 = vmatpush2.bf16.msra.mxu0 %v602
        %1392 = vmatprep.subr.bf16.mxu0 0
        %1393 = vmatpush2.bf16.msra.mxu0 %v601
        %1394 = vmatprep.subr.bf16.mxu0 0
        %1395 = vmatpush2.bf16.msra.mxu0 %v600
        %1396 = vmatprep.subr.bf16.mxu0 0
        %1397 = vmatpush2.bf16.msra.mxu0 %v599
        %1398 = vmatprep.subr.bf16.mxu0 0
        %1399 = vmatpush2.bf16.msra.mxu0 %v598
        %1400 = vmatprep.subr.bf16.mxu0 0
        %1401 = vmatpush2.bf16.msra.mxu0 %v597
        %1402 = vmatprep.subr.bf16.mxu0 0
        %1403 = vmatpush2.bf16.msra.mxu0 %v596
        %1404 = vmatprep.mubr.bf16.mxu0 %v1365
        %1405 = vmatmul.mubr.bf16.gmra.mxu0 %v1364
        %v1406 = vpop.f32.mrf.mxu0
        %v1407 = vadd.f32 0.0, %v1406
        %v1408 = vpop.f32.mrf.mxu0
        %v1409 = vpop.f32.mrf.mxu0
        %v1410 = vadd.f32 0.0, %v1409
        %v1411 = vpop.f32.mrf.mxu0
        %1412 = vmatprep.mubr.bf16.mxu0 %v1369
        %1413 = vmatmul.mubr.bf16.gmra.mxu0 %v1368
        %v1414 = vpop.f32.mrf.mxu0
        %v1415 = vadd.f32 0.0, %v1414
        %v1416 = vpop.f32.mrf.mxu0
        %v1417 = vpop.f32.mrf.mxu0
        %v1418 = vadd.f32 0.0, %v1417
        %v1419 = vpop.f32.mrf.mxu0
        %1420 = vdwg.mxu0
        %1421 = vmatprep.subr.bf16.mxu0 0
        %1422 = vmatpush1.bf16.msra.mxu0 %v611
        %1423 = vmatprep.subr.bf16.mxu0 0
        %1424 = vmatpush1.bf16.msra.mxu0 %v610
        %1425 = vmatprep.subr.bf16.mxu0 0
        %1426 = vmatpush1.bf16.msra.mxu0 %v609
        %1427 = vmatprep.subr.bf16.mxu0 0
        %1428 = vmatpush1.bf16.msra.mxu0 %v608
        %1429 = vmatprep.subr.bf16.mxu0 0
        %1430 = vmatpush1.bf16.msra.mxu0 %v607
        %1431 = vmatprep.subr.bf16.mxu0 0
        %1432 = vmatpush1.bf16.msra.mxu0 %v606
        %1433 = vmatprep.subr.bf16.mxu0 0
        %1434 = vmatpush1.bf16.msra.mxu0 %v605
        %1435 = vmatprep.subr.bf16.mxu0 0
        %1436 = vmatpush1.bf16.msra.mxu0 %v604
        %1437 = vmatprep.subr.bf16.mxu0 0
        %1438 = vmatpush2.bf16.msra.mxu0 %v619
        %1439 = vmatprep.subr.bf16.mxu0 0
        %1440 = vmatpush2.bf16.msra.mxu0 %v618
        %1441 = vmatprep.subr.bf16.mxu0 0
        %1442 = vmatpush2.bf16.msra.mxu0 %v617
        %1443 = vmatprep.subr.bf16.mxu0 0
        %1444 = vmatpush2.bf16.msra.mxu0 %v616
        %1445 = vmatprep.subr.bf16.mxu0 0
        %1446 = vmatpush2.bf16.msra.mxu0 %v615
        %1447 = vmatprep.subr.bf16.mxu0 0
        %1448 = vmatpush2.bf16.msra.mxu0 %v614
        %1449 = vmatprep.subr.bf16.mxu0 0
        %1450 = vmatpush2.bf16.msra.mxu0 %v613
        %1451 = vmatprep.subr.bf16.mxu0 0
        %1452 = vmatpush2.bf16.msra.mxu0 %v612
        %1453 = vmatprep.mubr.bf16.mxu0 %v1367
        %1454 = vmatmul.mubr.bf16.gmra.mxu0 %v1366
        %v1455 = vpop.f32.mrf.mxu0
        %v1456 = vadd.f32 %v1407, %v1455
        %v1457 = vpop.f32.mrf.mxu0
        %v1458 = vpop.f32.mrf.mxu0
        %v1459 = vadd.f32 %v1410, %v1458
        %v1460 = vpop.f32.mrf.mxu0
        %1461 = vmatprep.mubr.bf16.mxu0 %v1371
        %1462 = vmatmul.mubr.bf16.gmra.mxu0 %v1370
        %v1463 = vpop.f32.mrf.mxu0
        %v1464 = vadd.f32 %v1415, %v1463
        %v1465 = vpop.f32.mrf.mxu0
        %v1466 = vpop.f32.mrf.mxu0
        %v1467 = vadd.f32 %v1418, %v1466
        %v1468 = vpop.f32.mrf.mxu0
        %1469 = vdwg.mxu0
        %1470 = vmatprep.subr.bf16.mxu0 0
        %1471 = vmatpush1.bf16.msra.mxu0 %v595
        %1472 = vmatprep.subr.bf16.mxu0 0
        %1473 = vmatpush1.bf16.msra.mxu0 %v594
        %1474 = vmatprep.subr.bf16.mxu0 0
        %1475 = vmatpush1.bf16.msra.mxu0 %v593
        %1476 = vmatprep.subr.bf16.mxu0 0
        %1477 = vmatpush1.bf16.msra.mxu0 %v592
        %1478 = vmatprep.subr.bf16.mxu0 0
        %1479 = vmatpush1.bf16.msra.mxu0 %v591
        %1480 = vmatprep.subr.bf16.mxu0 0
        %1481 = vmatpush1.bf16.msra.mxu0 %v590
        %1482 = vmatprep.subr.bf16.mxu0 0
        %1483 = vmatpush1.bf16.msra.mxu0 %v589
        %1484 = vmatprep.subr.bf16.mxu0 0
        %1485 = vmatpush1.bf16.msra.mxu0 %v588
        %1486 = vmatprep.subr.bf16.mxu0 0
        %1487 = vmatpush2.bf16.msra.mxu0 %v603
        %1488 = vmatprep.subr.bf16.mxu0 0
        %1489 = vmatpush2.bf16.msra.mxu0 %v602
        %1490 = vmatprep.subr.bf16.mxu0 0
        %1491 = vmatpush2.bf16.msra.mxu0 %v601
        %1492 = vmatprep.subr.bf16.mxu0 0
        %1493 = vmatpush2.bf16.msra.mxu0 %v600
        %1494 = vmatprep.subr.bf16.mxu0 0
        %1495 = vmatpush2.bf16.msra.mxu0 %v599
        %1496 = vmatprep.subr.bf16.mxu0 0
        %1497 = vmatpush2.bf16.msra.mxu0 %v598
        %1498 = vmatprep.subr.bf16.mxu0 0
        %1499 = vmatpush2.bf16.msra.mxu0 %v597
        %1500 = vmatprep.subr.bf16.mxu0 0
        %1501 = vmatpush2.bf16.msra.mxu0 %v596
        %1502 = vmatprep.mubr.bf16.mxu0 %v1325
        %1503 = vmatmul.mubr.bf16.gmra.mxu0 %v1324
        %v1504 = vpop.f32.mrf.mxu0
        %v1505 = vadd.f32 %v1456, %v1504
        %v1506 = vpop.f32.mrf.mxu0
        %v1507 = vpop.f32.mrf.mxu0
        %v1508 = vadd.f32 %v1459, %v1507
        %v1509 = vpop.f32.mrf.mxu0
        %1510 = vmatprep.mubr.bf16.mxu0 %v1329
        %1511 = vmatmul.mubr.bf16.gmra.mxu0 %v1328
        %v1512 = vpop.f32.mrf.mxu0
        %v1513 = vadd.f32 %v1464, %v1512
        %v1514 = vpop.f32.mrf.mxu0
        %v1515 = vpop.f32.mrf.mxu0
        %v1516 = vadd.f32 %v1467, %v1515
        %v1517 = vpop.f32.mrf.mxu0
        %1518 = vdwg.mxu0
        %1519 = vmatprep.subr.bf16.mxu0 0
        %1520 = vmatpush1.bf16.msra.mxu0 %v611
        %1521 = vmatprep.subr.bf16.mxu0 0
        %1522 = vmatpush1.bf16.msra.mxu0 %v610
        %1523 = vmatprep.subr.bf16.mxu0 0
        %1524 = vmatpush1.bf16.msra.mxu0 %v609
        %1525 = vmatprep.subr.bf16.mxu0 0
        %1526 = vmatpush1.bf16.msra.mxu0 %v608
        %1527 = vmatprep.subr.bf16.mxu0 0
        %1528 = vmatpush1.bf16.msra.mxu0 %v607
        %1529 = vmatprep.subr.bf16.mxu0 0
        %1530 = vmatpush1.bf16.msra.mxu0 %v606
        %1531 = vmatprep.subr.bf16.mxu0 0
        %1532 = vmatpush1.bf16.msra.mxu0 %v605
        %1533 = vmatprep.subr.bf16.mxu0 0
        %1534 = vmatpush1.bf16.msra.mxu0 %v604
        %1535 = vmatprep.subr.bf16.mxu0 0
        %1536 = vmatpush2.bf16.msra.mxu0 %v619
        %1537 = vmatprep.subr.bf16.mxu0 0
        %1538 = vmatpush2.bf16.msra.mxu0 %v618
        %1539 = vmatprep.subr.bf16.mxu0 0
        %1540 = vmatpush2.bf16.msra.mxu0 %v617
        %1541 = vmatprep.subr.bf16.mxu0 0
        %1542 = vmatpush2.bf16.msra.mxu0 %v616
        %1543 = vmatprep.subr.bf16.mxu0 0
        %1544 = vmatpush2.bf16.msra.mxu0 %v615
        %1545 = vmatprep.subr.bf16.mxu0 0
        %1546 = vmatpush2.bf16.msra.mxu0 %v614
        %1547 = vmatprep.subr.bf16.mxu0 0
        %1548 = vmatpush2.bf16.msra.mxu0 %v613
        %1549 = vmatprep.subr.bf16.mxu0 0
        %1550 = vmatpush2.bf16.msra.mxu0 %v612
        %1551 = vmatprep.mubr.bf16.mxu0 %v1327
        %1552 = vmatmul.mubr.bf16.gmra.mxu0 %v1326
        %v1553 = vpop.f32.mrf.mxu0
        %v1554 = vadd.f32 %v1505, %v1553
        %v1555 = vpop.f32.mrf.mxu0
        %v1556 = vpop.f32.mrf.mxu0
        %v1557 = vadd.f32 %v1508, %v1556
        %v1558 = vpop.f32.mrf.mxu0
        %1559 = vmatprep.mubr.bf16.mxu0 %v1331
        %1560 = vmatmul.mubr.bf16.gmra.mxu0 %v1330
        %v1561 = vpop.f32.mrf.mxu0
        %v1562 = vadd.f32 %v1513, %v1561
        %v1563 = vpop.f32.mrf.mxu0
        %v1564 = vpop.f32.mrf.mxu0
        %v1565 = vadd.f32 %v1516, %v1564
        %v1566 = vpop.f32.mrf.mxu0
        %1567 = vdwg.mxu0
        %v1568 = vmul.f32 %v1554, 0.0625
        %v1569 = vmul.f32 %v1557, 0.0625
        %v1570 = vmul.f32 %v1562, 0.0625
        %v1571 = vmul.f32 %v1565, 0.0625
        %v1572 = vmul.f32 %v1568, %v1568
        %v1573 = vmul.f32 %v1569, %v1569
        %v1574 = vsub.f32 %v1570, %v1572
        %v1575 = vsub.f32 %v1571, %v1573
        %v1576 = vadd.f32 %v1574, 1e-05
        %v1577 = vadd.f32 %v1575, 1e-05
        %v1578 = vrsqrt.pop %v1576
        %v1579 = vrsqrt.pop %v1577
        %v1580 = vmul.f32 %v1568, %v1578
        %v1581 = vmul.f32 %v1569, %v1579
        %v1582 = vpack.c.bf16 %v1579, %v1578
        %v1583 = vpack.c.bf16 %v1581, %v1580
        %v1584 = vunpack.c.l.bf16 %v1582
        %v1585 = vunpack.c.h.bf16 %v1582
        %v1586 = vunpack.c.l.bf16 %v1583
        %v1587 = vunpack.c.h.bf16 %v1583
        %v1588 = vsub.f32 %v1578, %v1584
        %v1589 = vsub.f32 %v1579, %v1585
        %v1590 = vsub.f32 %v1580, %v1586
        %v1591 = vsub.f32 %v1581, %v1587
        %v1592 = vpack.c.bf16 %v1589, %v1588
        %v1593 = vpack.c.bf16 %v1591, %v1590
        %v1595 = vsel %vm914, %v1592, 0
        %v1598 = vsel %vm914, %v1593, 0
        %1600 = vmatprep.subr.bf16.mxu0 0
        %1601 = vmatpush1.bf16.msra.mxu0 0
        %1602 = vmatprep.subr.bf16.mxu0 0
        %1603 = vmatpush1.bf16.msra.mxu0 0
        %1604 = vmatprep.subr.bf16.mxu0 0
        %1605 = vmatpush1.bf16.msra.mxu0 0
        %1606 = vmatprep.subr.bf16.mxu0 0
        %1607 = vmatpush1.bf16.msra.mxu0 0
        %1608 = vmatprep.subr.bf16.mxu0 0
        %1609 = vmatpush1.bf16.msra.mxu0 0
        %1610 = vmatprep.subr.bf16.mxu0 0
        %1611 = vmatpush1.bf16.msra.mxu0 0
        %1612 = vmatprep.subr.bf16.mxu0 %v903
        %1613 = vmatpush1.bf16.msra.mxu0 %v902
        %1614 = vmatprep.subr.bf16.mxu0 %v899
        %1615 = vmatpush1.bf16.msra.mxu0 %v898
        %1616 = vmatprep.subr.bf16.mxu0 0
        %1617 = vmatpush2.bf16.msra.mxu0 0
        %1618 = vmatprep.subr.bf16.mxu0 0
        %1619 = vmatpush2.bf16.msra.mxu0 0
        %1620 = vmatprep.subr.bf16.mxu0 0
        %1621 = vmatpush2.bf16.msra.mxu0 0
        %1622 = vmatprep.subr.bf16.mxu0 0
        %1623 = vmatpush2.bf16.msra.mxu0 0
        %1624 = vmatprep.subr.bf16.mxu0 0
        %1625 = vmatpush2.bf16.msra.mxu0 0
        %1626 = vmatprep.subr.bf16.mxu0 0
        %1627 = vmatpush2.bf16.msra.mxu0 0
        %1628 = vmatprep.subr.bf16.mxu0 0
        %1629 = vmatpush2.bf16.msra.mxu0 0
        %1630 = vmatprep.subr.bf16.mxu0 0
        %1631 = vmatpush2.bf16.msra.mxu0 0
        %1632 = vmatprep.mubr.bf16.mxu0 0
        %1633 = vmatmul.mubr.bf16.gmra.mxu0 %v1595
        %v1634 = vpop.f32.mrf.mxu0
        %v1635 = vadd.f32 0.0, %v1634
        %v1636 = vpop.f32.mrf.mxu0
        %v1637 = vadd.f32 0.0, %v1636
        %v1638 = vpop.f32.mrf.mxu0
        %v1639 = vadd.f32 0.0, %v1638
        %v1640 = vpop.f32.mrf.mxu0
        %v1641 = vadd.f32 0.0, %v1640
        %1642 = vmatprep.mubr.bf16.mxu0 0
        %1643 = vmatmul.mubr.bf16.gmra.mxu0 %v1598
        %v1644 = vpop.f32.mrf.mxu0
        %v1645 = vadd.f32 0.0, %v1644
        %v1646 = vpop.f32.mrf.mxu0
        %v1647 = vadd.f32 0.0, %v1646
        %v1648 = vpop.f32.mrf.mxu0
        %v1649 = vadd.f32 0.0, %v1648
        %v1650 = vpop.f32.mrf.mxu0
        %v1651 = vadd.f32 0.0, %v1650
        %1652 = vdwg.mxu0
        %1653 = vmatprep.subr.bf16.mxu0 0
        %1654 = vmatpush1.bf16.msra.mxu0 0
        %1655 = vmatprep.subr.bf16.mxu0 0
        %1656 = vmatpush1.bf16.msra.mxu0 0
        %1657 = vmatprep.subr.bf16.mxu0 0
        %1658 = vmatpush1.bf16.msra.mxu0 0
        %1659 = vmatprep.subr.bf16.mxu0 0
        %1660 = vmatpush1.bf16.msra.mxu0 0
        %1661 = vmatprep.subr.bf16.mxu0 0
        %1662 = vmatpush1.bf16.msra.mxu0 0
        %1663 = vmatprep.subr.bf16.mxu0 0
        %1664 = vmatpush1.bf16.msra.mxu0 0
        %1665 = vmatprep.subr.bf16.mxu0 %v905
        %1666 = vmatpush1.bf16.msra.mxu0 %v904
        %1667 = vmatprep.subr.bf16.mxu0 %v901
        %1668 = vmatpush1.bf16.msra.mxu0 %v900
        %1669 = vmatprep.subr.bf16.mxu0 0
        %1670 = vmatpush2.bf16.msra.mxu0 0
        %1671 = vmatprep.subr.bf16.mxu0 0
        %1672 = vmatpush2.bf16.msra.mxu0 0
        %1673 = vmatprep.subr.bf16.mxu0 0
        %1674 = vmatpush2.bf16.msra.mxu0 0
        %1675 = vmatprep.subr.bf16.mxu0 0
        %1676 = vmatpush2.bf16.msra.mxu0 0
        %1677 = vmatprep.subr.bf16.mxu0 0
        %1678 = vmatpush2.bf16.msra.mxu0 0
        %1679 = vmatprep.subr.bf16.mxu0 0
        %1680 = vmatpush2.bf16.msra.mxu0 0
        %1681 = vmatprep.subr.bf16.mxu0 0
        %1682 = vmatpush2.bf16.msra.mxu0 0
        %1683 = vmatprep.subr.bf16.mxu0 0
        %1684 = vmatpush2.bf16.msra.mxu0 0
        %1685 = vmatprep.mubr.bf16.mxu0 0
        %1686 = vmatmul.mubr.bf16.gmra.mxu0 %v1595
        %v1687 = vpop.f32.mrf.mxu0
        %v1688 = vadd.f32 0.0, %v1687
        %v1689 = vpop.f32.mrf.mxu0
        %v1690 = vadd.f32 0.0, %v1689
        %v1691 = vpop.f32.mrf.mxu0
        %v1692 = vadd.f32 0.0, %v1691
        %v1693 = vpop.f32.mrf.mxu0
        %v1694 = vadd.f32 0.0, %v1693
        %1695 = vmatprep.mubr.bf16.mxu0 0
        %1696 = vmatmul.mubr.bf16.gmra.mxu0 %v1598
        %v1697 = vpop.f32.mrf.mxu0
        %v1698 = vadd.f32 0.0, %v1697
        %v1699 = vpop.f32.mrf.mxu0
        %v1700 = vadd.f32 0.0, %v1699
        %v1701 = vpop.f32.mrf.mxu0
        %v1702 = vadd.f32 0.0, %v1701
        %v1703 = vpop.f32.mrf.mxu0
        %v1704 = vadd.f32 0.0, %v1703
        %1705 = vdwg.mxu0
        %v1707 = vsel %vm914, %v1582, 0
        %v1710 = vsel %vm914, %v1583, 0
        %1712 = vmatprep.subr.bf16.mxu0 0
        %1713 = vmatpush1.bf16.msra.mxu0 0
        %1714 = vmatprep.subr.bf16.mxu0 0
        %1715 = vmatpush1.bf16.msra.mxu0 0
        %1716 = vmatprep.subr.bf16.mxu0 0
        %1717 = vmatpush1.bf16.msra.mxu0 0
        %1718 = vmatprep.subr.bf16.mxu0 0
        %1719 = vmatpush1.bf16.msra.mxu0 0
        %1720 = vmatprep.subr.bf16.mxu0 0
        %1721 = vmatpush1.bf16.msra.mxu0 0
        %1722 = vmatprep.subr.bf16.mxu0 0
        %1723 = vmatpush1.bf16.msra.mxu0 0
        %1724 = vmatprep.subr.bf16.mxu0 %v903
        %1725 = vmatpush1.bf16.msra.mxu0 %v902
        %1726 = vmatprep.subr.bf16.mxu0 %v899
        %1727 = vmatpush1.bf16.msra.mxu0 %v898
        %1728 = vmatprep.subr.bf16.mxu0 0
        %1729 = vmatpush2.bf16.msra.mxu0 0
        %1730 = vmatprep.subr.bf16.mxu0 0
        %1731 = vmatpush2.bf16.msra.mxu0 0
        %1732 = vmatprep.subr.bf16.mxu0 0
        %1733 = vmatpush2.bf16.msra.mxu0 0
        %1734 = vmatprep.subr.bf16.mxu0 0
        %1735 = vmatpush2.bf16.msra.mxu0 0
        %1736 = vmatprep.subr.bf16.mxu0 0
        %1737 = vmatpush2.bf16.msra.mxu0 0
        %1738 = vmatprep.subr.bf16.mxu0 0
        %1739 = vmatpush2.bf16.msra.mxu0 0
        %1740 = vmatprep.subr.bf16.mxu0 0
        %1741 = vmatpush2.bf16.msra.mxu0 0
        %1742 = vmatprep.subr.bf16.mxu0 0
        %1743 = vmatpush2.bf16.msra.mxu0 0
        %1744 = vmatprep.mubr.bf16.mxu0 0
        %1745 = vmatmul.mubr.bf16.gmra.mxu0 %v1707
        %v1746 = vpop.f32.mrf.mxu0
        %v1747 = vadd.f32 %v1635, %v1746
        %v1748 = vpop.f32.mrf.mxu0
        %v1749 = vadd.f32 %v1637, %v1748
        %v1750 = vpop.f32.mrf.mxu0
        %v1751 = vadd.f32 %v1639, %v1750
        %v1752 = vpop.f32.mrf.mxu0
        %v1753 = vadd.f32 %v1641, %v1752
        %1754 = vmatprep.mubr.bf16.mxu0 0
        %1755 = vmatmul.mubr.bf16.gmra.mxu0 %v1710
        %v1756 = vpop.f32.mrf.mxu0
        %v1757 = vadd.f32 %v1645, %v1756
        %v1758 = vpop.f32.mrf.mxu0
        %v1759 = vadd.f32 %v1647, %v1758
        %v1760 = vpop.f32.mrf.mxu0
        %v1761 = vadd.f32 %v1649, %v1760
        %v1762 = vpop.f32.mrf.mxu0
        %v1763 = vadd.f32 %v1651, %v1762
        %1764 = vdwg.mxu0
        %1765 = vmatprep.subr.bf16.mxu0 0
        %1766 = vmatpush1.bf16.msra.mxu0 0
        %1767 = vmatprep.subr.bf16.mxu0 0
        %1768 = vmatpush1.bf16.msra.mxu0 0
        %1769 = vmatprep.subr.bf16.mxu0 0
        %1770 = vmatpush1.bf16.msra.mxu0 0
        %1771 = vmatprep.subr.bf16.mxu0 0
        %1772 = vmatpush1.bf16.msra.mxu0 0
        %1773 = vmatprep.subr.bf16.mxu0 0
        %1774 = vmatpush1.bf16.msra.mxu0 0
        %1775 = vmatprep.subr.bf16.mxu0 0
        %1776 = vmatpush1.bf16.msra.mxu0 0
        %1777 = vmatprep.subr.bf16.mxu0 %v905
        %1778 = vmatpush1.bf16.msra.mxu0 %v904
        %1779 = vmatprep.subr.bf16.mxu0 %v901
        %1780 = vmatpush1.bf16.msra.mxu0 %v900
        %1781 = vmatprep.subr.bf16.mxu0 0
        %1782 = vmatpush2.bf16.msra.mxu0 0
        %1783 = vmatprep.subr.bf16.mxu0 0
        %1784 = vmatpush2.bf16.msra.mxu0 0
        %1785 = vmatprep.subr.bf16.mxu0 0
        %1786 = vmatpush2.bf16.msra.mxu0 0
        %1787 = vmatprep.subr.bf16.mxu0 0
        %1788 = vmatpush2.bf16.msra.mxu0 0
        %1789 = vmatprep.subr.bf16.mxu0 0
        %1790 = vmatpush2.bf16.msra.mxu0 0
        %1791 = vmatprep.subr.bf16.mxu0 0
        %1792 = vmatpush2.bf16.msra.mxu0 0
        %1793 = vmatprep.subr.bf16.mxu0 0
        %1794 = vmatpush2.bf16.msra.mxu0 0
        %1795 = vmatprep.subr.bf16.mxu0 0
        %1796 = vmatpush2.bf16.msra.mxu0 0
        %1797 = vmatprep.mubr.bf16.mxu0 0
        %1798 = vmatmul.mubr.bf16.gmra.mxu0 %v1707
        %v1799 = vpop.f32.mrf.mxu0
        %v1800 = vadd.f32 %v1688, %v1799
        %v1801 = vpop.f32.mrf.mxu0
        %v1802 = vadd.f32 %v1690, %v1801
        %v1803 = vpop.f32.mrf.mxu0
        %v1804 = vadd.f32 %v1692, %v1803
        %v1805 = vpop.f32.mrf.mxu0
        %v1806 = vadd.f32 %v1694, %v1805
        %1807 = vmatprep.mubr.bf16.mxu0 0
        %1808 = vmatmul.mubr.bf16.gmra.mxu0 %v1710
        %v1809 = vpop.f32.mrf.mxu0
        %v1810 = vadd.f32 %v1698, %v1809
        %v1811 = vpop.f32.mrf.mxu0
        %v1812 = vadd.f32 %v1700, %v1811
        %v1813 = vpop.f32.mrf.mxu0
        %v1814 = vadd.f32 %v1702, %v1813
        %v1815 = vpop.f32.mrf.mxu0
        %v1816 = vadd.f32 %v1704, %v1815
        %1817 = vdwg.mxu0
        %v1818 = vmul.f32 %v1265, %v1747
        %v1819 = vmul.f32 %v1267, %v1749
        %v1820 = vmul.f32 %v1308, %v1800
        %v1821 = vmul.f32 %v1310, %v1802
        %v1822 = vmul.f32 %v1269, %v1751
        %v1823 = vmul.f32 %v1271, %v1753
        %v1824 = vmul.f32 %v1312, %v1804
        %v1825 = vmul.f32 %v1314, %v1806
        %v1826 = vsub.f32 %v1818, %v1757
        %v1827 = vsub.f32 %v1819, %v1759
        %v1828 = vsub.f32 %v1820, %v1810
        %v1829 = vsub.f32 %v1821, %v1812
        %v1830 = vsub.f32 %v1822, %v1761
        %v1831 = vsub.f32 %v1823, %v1763
        %v1832 = vsub.f32 %v1824, %v1814
        %v1833 = vsub.f32 %v1825, %v1816
        %v1834 = vlaneseq
        %v1835 = vshrl.u32 %v1834, 7
        %v1836 = vsub.s32 2, %v1835
        %v1837 = vrot.slane %v322, %v1836
        %v1838 = vlaneseq
        %v1839 = vshrl.u32 %v1838, 7
        %v1840 = vsub.s32 2, %v1839
        %v1841 = vrot.slane %v323, %v1840
        %v1842 = vlaneseq
        %v1843 = vshrl.u32 %v1842, 7
        %v1844 = vsub.s32 2, %v1843
        %v1845 = vrot.slane %v324, %v1844
        %v1846 = vlaneseq
        %v1847 = vshrl.u32 %v1846, 7
        %v1848 = vsub.s32 2, %v1847
        %v1849 = vrot.slane %v325, %v1848
        %v1850 = vmul.f32 %v1826, %v1837
        %v1851 = vmul.f32 %v1827, %v1841
        %v1852 = vmul.f32 %v1828, %v1845
        %v1853 = vmul.f32 %v1829, %v1849
        %v1854 = vmul.f32 %v1830, %v1837
        %v1855 = vmul.f32 %v1831, %v1841
        %v1856 = vmul.f32 %v1832, %v1845
        %v1857 = vmul.f32 %v1833, %v1849
        %v1858 = vlaneseq
        %v1859 = vshrl.u32 %v1858, 7
        %v1860 = vsub.s32 3, %v1859
        %v1861 = vrot.slane %v322, %v1860
        %v1862 = vlaneseq
        %v1863 = vshrl.u32 %v1862, 7
        %v1864 = vsub.s32 3, %v1863
        %v1865 = vrot.slane %v323, %v1864
        %v1866 = vlaneseq
        %v1867 = vshrl.u32 %v1866, 7
        %v1868 = vsub.s32 3, %v1867
        %v1869 = vrot.slane %v324, %v1868
        %v1870 = vlaneseq
        %v1871 = vshrl.u32 %v1870, 7
        %v1872 = vsub.s32 3, %v1871
        %v1873 = vrot.slane %v325, %v1872
        %v1874 = vadd.f32 %v1850, %v1861
        %v1875 = vadd.f32 %v1851, %v1865
        %v1876 = vadd.f32 %v1852, %v1869
        %v1877 = vadd.f32 %v1853, %v1873
        %v1878 = vadd.f32 %v1854, %v1861
        %v1879 = vadd.f32 %v1855, %v1865
        %v1880 = vadd.f32 %v1856, %v1869
        %v1881 = vadd.f32 %v1857, %v1873
        %v1882 = vmax.f32 %v1874, 0.0
        %v1883 = vmax.f32 %v1875, 0.0
        %v1884 = vmax.f32 %v1876, 0.0
        %v1885 = vmax.f32 %v1877, 0.0
        %v1886 = vmax.f32 %v1878, 0.0
        %v1887 = vmax.f32 %v1879, 0.0
        %v1888 = vmax.f32 %v1880, 0.0
        %v1889 = vmax.f32 %v1881, 0.0
        %1890 = vrot.lane.b32.xlu0 %v1882, 2
        %v1891 = vpop.permute.xlu0 %1890
        %1892 = vrot.lane.b32.xlu0 %v1886, 2
        %v1893 = vpop.permute.xlu0 %1892
        %1894 = vrot.lane.b32.xlu0 %v1883, 2
        %v1895 = vpop.permute.xlu0 %1894
        %1896 = vrot.lane.b32.xlu0 %v1887, 2
        %v1897 = vpop.permute.xlu0 %1896
        %1898 = vrot.lane.b32.xlu0 %v1884, 2
        %v1899 = vpop.permute.xlu0 %1898
        %1900 = vrot.lane.b32.xlu0 %v1888, 2
        %v1901 = vpop.permute.xlu0 %1900
        %1902 = vrot.lane.b32.xlu0 %v1885, 2
        %v1903 = vpop.permute.xlu0 %1902
        %1904 = vrot.lane.b32.xlu0 %v1889, 2
        %v1905 = vpop.permute.xlu0 %1904
        %v1906 = vlaneseq
        %v1907 = vand.u32 %v1906, 127
        %vm1908 = vcmp.lt.s32.totalorder %v1907, 2
        %v1909 = vsel %vm1908, %v1899, %v1903
        %v1910 = vsel %vm1908, %v1901, %v1905
        %v1911 = vsel %vm1908, %v1895, %v1899
        %v1912 = vsel %vm1908, %v1897, %v1901
        %v1913 = vsel %vm1908, %v1891, %v1895
        %v1914 = vsel %vm1908, %v1893, %v1897
        %v1915 = vsel %vm1908, %v1903, %v1891
        %v1916 = vsel %vm1908, %v1905, %v1893
        %v1917 = vlaneseq
        %v1918 = vshrl.u32 %v1917, 7
        %v1919 = vsub.s32 6, %v1918
        %v1920 = vrot.slane %v322, %v1919
        %v1921 = vlaneseq
        %v1922 = vshrl.u32 %v1921, 7
        %v1923 = vsub.s32 6, %v1922
        %v1924 = vrot.slane %v323, %v1923
        %v1925 = vlaneseq
        %v1926 = vshrl.u32 %v1925, 7
        %v1927 = vsub.s32 6, %v1926
        %v1928 = vrot.slane %v324, %v1927
        %v1929 = vlaneseq
        %v1930 = vshrl.u32 %v1929, 7
        %v1931 = vsub.s32 6, %v1930
        %v1932 = vrot.slane %v325, %v1931
        %v1933 = vmul.f32 %v1915, %v1920
        %v1934 = vmul.f32 %v1913, %v1924
        %v1935 = vmul.f32 %v1911, %v1928
        %v1936 = vmul.f32 %v1909, %v1932
        %v1937 = vmul.f32 %v1916, %v1920
        %v1938 = vmul.f32 %v1914, %v1924
        %v1939 = vmul.f32 %v1912, %v1928
        %v1940 = vmul.f32 %v1910, %v1932
        %v1941 = vpack.c.bf16 %v1937, %v1933
        %v1942 = vpack.c.bf16 %v1938, %v1934
        %v1943 = vpack.c.bf16 %v1939, %v1935
        %v1944 = vpack.c.bf16 %v1940, %v1936
        %1945 = vrot.lane.b32.xlu0 %v1882, 1
        %v1946 = vpop.permute.xlu0 %1945
        %1947 = vrot.lane.b32.xlu0 %v1886, 1
        %v1948 = vpop.permute.xlu0 %1947
        %1949 = vrot.lane.b32.xlu0 %v1883, 1
        %v1950 = vpop.permute.xlu0 %1949
        %1951 = vrot.lane.b32.xlu0 %v1887, 1
        %v1952 = vpop.permute.xlu0 %1951
        %1953 = vrot.lane.b32.xlu0 %v1884, 1
        %v1954 = vpop.permute.xlu0 %1953
        %1955 = vrot.lane.b32.xlu0 %v1888, 1
        %v1956 = vpop.permute.xlu0 %1955
        %1957 = vrot.lane.b32.xlu0 %v1885, 1
        %v1958 = vpop.permute.xlu0 %1957
        %1959 = vrot.lane.b32.xlu0 %v1889, 1
        %v1960 = vpop.permute.xlu0 %1959
        %vm1961 = vcmp.lt.s32.totalorder %v1907, 1
        %v1962 = vsel %vm1961, %v1954, %v1958
        %v1963 = vsel %vm1961, %v1956, %v1960
        %v1964 = vsel %vm1961, %v1950, %v1954
        %v1965 = vsel %vm1961, %v1952, %v1956
        %v1966 = vsel %vm1961, %v1946, %v1950
        %v1967 = vsel %vm1961, %v1948, %v1952
        %v1968 = vsel %vm1961, %v1958, %v1946
        %v1969 = vsel %vm1961, %v1960, %v1948
        %v1970 = vlaneseq
        %v1971 = vshrl.u32 %v1970, 7
        %v1972 = vsub.s32 7, %v1971
        %v1973 = vrot.slane %v322, %v1972
        %v1974 = vlaneseq
        %v1975 = vshrl.u32 %v1974, 7
        %v1976 = vsub.s32 7, %v1975
        %v1977 = vrot.slane %v323, %v1976
        %v1978 = vlaneseq
        %v1979 = vshrl.u32 %v1978, 7
        %v1980 = vsub.s32 7, %v1979
        %v1981 = vrot.slane %v324, %v1980
        %v1982 = vlaneseq
        %v1983 = vshrl.u32 %v1982, 7
        %v1984 = vsub.s32 7, %v1983
        %v1985 = vrot.slane %v325, %v1984
        %v1986 = vmul.f32 %v1968, %v1973
        %v1987 = vmul.f32 %v1966, %v1977
        %v1988 = vmul.f32 %v1964, %v1981
        %v1989 = vmul.f32 %v1962, %v1985
        %v1990 = vmul.f32 %v1969, %v1973
        %v1991 = vmul.f32 %v1967, %v1977
        %v1992 = vmul.f32 %v1965, %v1981
        %v1993 = vmul.f32 %v1963, %v1985
        %v1994 = vpack.c.bf16 %v1990, %v1986
        %v1995 = vpack.c.bf16 %v1991, %v1987
        %v1996 = vpack.c.bf16 %v1992, %v1988
        %v1997 = vpack.c.bf16 %v1993, %v1989
        %v1998 = vpack.c.bf16 %v1886, %v1882
        %v1999 = vpack.c.bf16 %v1887, %v1883
        %v2000 = vpack.c.bf16 %v1888, %v1884
        %v2001 = vpack.c.bf16 %v1889, %v1885
        %v2002 = vld [vmem:[%s5] sm:$0xf]
        %v2003 = vld [vmem:[%s5 + $0x4] sm:$0xf]
        %v2006 = vunpack.c.l.b16 %v2002
        %v2007 = vunpack.c.l.b16 %v2003
        %v2008 = vpack.c.b16 %v2007, %v2006
        %vm2009 = vcmask 457728
        %v2011 = vsel %vm2009, %v2008, 0
        %2013 = vmatprep.subr.bf16.mxu0 0
        %2014 = vmatpush1.bf16.msra.mxu0 0
        %2015 = vmatprep.subr.bf16.mxu0 0
        %2016 = vmatpush1.bf16.msra.mxu0 0
        %2017 = vmatprep.subr.bf16.mxu0 0
        %2018 = vmatpush1.bf16.msra.mxu0 0
        %2019 = vmatprep.subr.bf16.mxu0 0
        %2020 = vmatpush1.bf16.msra.mxu0 0
        %2021 = vmatprep.subr.bf16.mxu0 %v1228
        %2022 = vmatpush1.bf16.msra.mxu0 %v1228
        %2023 = vmatprep.subr.bf16.mxu0 %v1999
        %2024 = vmatpush1.bf16.msra.mxu0 %v1998
        %2025 = vmatprep.subr.bf16.mxu0 %v1995
        %2026 = vmatpush1.bf16.msra.mxu0 %v1994
        %2027 = vmatprep.subr.bf16.mxu0 %v1942
        %2028 = vmatpush1.bf16.msra.mxu0 %v1941
        %2029 = vmatprep.subr.bf16.mxu0 0
        %2030 = vmatpush2.bf16.msra.mxu0 0
        %2031 = vmatprep.subr.bf16.mxu0 0
        %2032 = vmatpush2.bf16.msra.mxu0 0
        %2033 = vmatprep.subr.bf16.mxu0 0
        %2034 = vmatpush2.bf16.msra.mxu0 0
        %2035 = vmatprep.subr.bf16.mxu0 0
        %2036 = vmatpush2.bf16.msra.mxu0 0
        %2037 = vmatprep.subr.bf16.mxu0 0
        %2038 = vmatpush2.bf16.msra.mxu0 0
        %2039 = vmatprep.subr.bf16.mxu0 0
        %2040 = vmatpush2.bf16.msra.mxu0 0
        %2041 = vmatprep.subr.bf16.mxu0 0
        %2042 = vmatpush2.bf16.msra.mxu0 0
        %2043 = vmatprep.subr.bf16.mxu0 0
        %2044 = vmatpush2.bf16.msra.mxu0 0
        %2045 = vmatprep.mubr.bf16.mxu0 0
        %2046 = vmatmul.mubr.bf16.gmra.mxu0 %v2011
        %v2047 = vpop.f32.mrf.mxu0
        %v2048 = vadd.f32 0.0, %v2047
        %v2049 = vpop.f32.mrf.mxu0
        %v2050 = vadd.f32 0.0, %v2049
        %v2051 = vpop.f32.mrf.mxu0
        %v2052 = vadd.f32 0.0, %v2051
        %v2053 = vpop.f32.mrf.mxu0
        %v2054 = vadd.f32 0.0, %v2053
        %2055 = vdwg.mxu0
        %2056 = vmatprep.subr.bf16.mxu0 0
        %2057 = vmatpush1.bf16.msra.mxu0 0
        %2058 = vmatprep.subr.bf16.mxu0 0
        %2059 = vmatpush1.bf16.msra.mxu0 0
        %2060 = vmatprep.subr.bf16.mxu0 0
        %2061 = vmatpush1.bf16.msra.mxu0 0
        %2062 = vmatprep.subr.bf16.mxu0 0
        %2063 = vmatpush1.bf16.msra.mxu0 0
        %2064 = vmatprep.subr.bf16.mxu0 %v1228
        %2065 = vmatpush1.bf16.msra.mxu0 %v1228
        %2066 = vmatprep.subr.bf16.mxu0 %v2001
        %2067 = vmatpush1.bf16.msra.mxu0 %v2000
        %2068 = vmatprep.subr.bf16.mxu0 %v1997
        %2069 = vmatpush1.bf16.msra.mxu0 %v1996
        %2070 = vmatprep.subr.bf16.mxu0 %v1944
        %2071 = vmatpush1.bf16.msra.mxu0 %v1943
        %2072 = vmatprep.subr.bf16.mxu0 0
        %2073 = vmatpush2.bf16.msra.mxu0 0
        %2074 = vmatprep.subr.bf16.mxu0 0
        %2075 = vmatpush2.bf16.msra.mxu0 0
        %2076 = vmatprep.subr.bf16.mxu0 0
        %2077 = vmatpush2.bf16.msra.mxu0 0
        %2078 = vmatprep.subr.bf16.mxu0 0
        %2079 = vmatpush2.bf16.msra.mxu0 0
        %2080 = vmatprep.subr.bf16.mxu0 0
        %2081 = vmatpush2.bf16.msra.mxu0 0
        %2082 = vmatprep.subr.bf16.mxu0 0
        %2083 = vmatpush2.bf16.msra.mxu0 0
        %2084 = vmatprep.subr.bf16.mxu0 0
        %2085 = vmatpush2.bf16.msra.mxu0 0
        %2086 = vmatprep.subr.bf16.mxu0 0
        %2087 = vmatpush2.bf16.msra.mxu0 0
        %2088 = vmatprep.mubr.bf16.mxu0 0
        %2089 = vmatmul.mubr.bf16.gmra.mxu0 %v2011
        %v2090 = vpop.f32.mrf.mxu0
        %v2091 = vadd.f32 0.0, %v2090
        %v2092 = vpop.f32.mrf.mxu0
        %v2093 = vadd.f32 0.0, %v2092
        %v2094 = vpop.f32.mrf.mxu0
        %v2095 = vadd.f32 0.0, %v2094
        %v2096 = vpop.f32.mrf.mxu0
        %v2097 = vadd.f32 0.0, %v2096
        %2098 = vdwg.mxu0
        %v2099 = vmul.f32 %v2048, %v2048
        %v2100 = vmul.f32 %v2050, %v2050
        %v2101 = vmul.f32 %v2091, %v2091
        %v2102 = vmul.f32 %v2093, %v2093
        %v2103 = vmul.f32 %v2052, %v2052
        %v2104 = vmul.f32 %v2054, %v2054
        %v2105 = vmul.f32 %v2095, %v2095
        %v2106 = vmul.f32 %v2097, %v2097
        %v2107 = vpack.c.bf16 %v2052, %v2048
        %v2108 = vpack.c.bf16 %v2054, %v2050
        %v2109 = vpack.c.bf16 %v2095, %v2091
        %v2110 = vpack.c.bf16 %v2097, %v2093
        %v2111 = vpack.c.bf16 %v2103, %v2099
        %v2112 = vpack.c.bf16 %v2104, %v2100
        %v2113 = vpack.c.bf16 %v2105, %v2101
        %v2114 = vpack.c.bf16 %v2106, %v2102
        %v2115 = vunpack.c.l.bf16 %v2107
        %v2116 = vunpack.c.l.bf16 %v2108
        %v2117 = vunpack.c.l.bf16 %v2109
        %v2118 = vunpack.c.l.bf16 %v2110
        %v2119 = vunpack.c.h.bf16 %v2107
        %v2120 = vunpack.c.h.bf16 %v2108
        %v2121 = vunpack.c.h.bf16 %v2109
        %v2122 = vunpack.c.h.bf16 %v2110
        %v2123 = vunpack.c.l.bf16 %v2111
        %v2124 = vunpack.c.l.bf16 %v2112
        %v2125 = vunpack.c.l.bf16 %v2113
        %v2126 = vunpack.c.l.bf16 %v2114
        %v2127 = vunpack.c.h.bf16 %v2111
        %v2128 = vunpack.c.h.bf16 %v2112
        %v2129 = vunpack.c.h.bf16 %v2113
        %v2130 = vunpack.c.h.bf16 %v2114
        %v2131 = vsub.f32 %v2048, %v2115
        %v2132 = vsub.f32 %v2050, %v2116
        %v2133 = vsub.f32 %v2091, %v2117
        %v2134 = vsub.f32 %v2093, %v2118
        %v2135 = vsub.f32 %v2052, %v2119
        %v2136 = vsub.f32 %v2054, %v2120
        %v2137 = vsub.f32 %v2095, %v2121
        %v2138 = vsub.f32 %v2097, %v2122
        %v2139 = vsub.f32 %v2099, %v2123
        %v2140 = vsub.f32 %v2100, %v2124
        %v2141 = vsub.f32 %v2101, %v2125
        %v2142 = vsub.f32 %v2102, %v2126
        %v2143 = vsub.f32 %v2103, %v2127
        %v2144 = vsub.f32 %v2104, %v2128
        %v2145 = vsub.f32 %v2105, %v2129
        %v2146 = vsub.f32 %v2106, %v2130
        %v2147 = vpack.c.bf16 %v2135, %v2131
        %v2148 = vpack.c.bf16 %v2136, %v2132
        %v2149 = vpack.c.bf16 %v2137, %v2133
        %v2150 = vpack.c.bf16 %v2138, %v2134
        %v2151 = vpack.c.bf16 %v2143, %v2139
        %v2152 = vpack.c.bf16 %v2144, %v2140
        %v2153 = vpack.c.bf16 %v2145, %v2141
        %v2154 = vpack.c.bf16 %v2146, %v2142
        %2155 = vmatprep.subr.bf16.mxu0 0
        %2156 = vmatpush1.bf16.msra.mxu0 %v595
        %2157 = vmatprep.subr.bf16.mxu0 0
        %2158 = vmatpush1.bf16.msra.mxu0 %v594
        %2159 = vmatprep.subr.bf16.mxu0 0
        %2160 = vmatpush1.bf16.msra.mxu0 %v593
        %2161 = vmatprep.subr.bf16.mxu0 0
        %2162 = vmatpush1.bf16.msra.mxu0 %v592
        %2163 = vmatprep.subr.bf16.mxu0 0
        %2164 = vmatpush1.bf16.msra.mxu0 %v591
        %2165 = vmatprep.subr.bf16.mxu0 0
        %2166 = vmatpush1.bf16.msra.mxu0 %v590
        %2167 = vmatprep.subr.bf16.mxu0 0
        %2168 = vmatpush1.bf16.msra.mxu0 %v589
        %2169 = vmatprep.subr.bf16.mxu0 0
        %2170 = vmatpush1.bf16.msra.mxu0 %v588
        %2171 = vmatprep.subr.bf16.mxu0 0
        %2172 = vmatpush2.bf16.msra.mxu0 %v603
        %2173 = vmatprep.subr.bf16.mxu0 0
        %2174 = vmatpush2.bf16.msra.mxu0 %v602
        %2175 = vmatprep.subr.bf16.mxu0 0
        %2176 = vmatpush2.bf16.msra.mxu0 %v601
        %2177 = vmatprep.subr.bf16.mxu0 0
        %2178 = vmatpush2.bf16.msra.mxu0 %v600
        %2179 = vmatprep.subr.bf16.mxu0 0
        %2180 = vmatpush2.bf16.msra.mxu0 %v599
        %2181 = vmatprep.subr.bf16.mxu0 0
        %2182 = vmatpush2.bf16.msra.mxu0 %v598
        %2183 = vmatprep.subr.bf16.mxu0 0
        %2184 = vmatpush2.bf16.msra.mxu0 %v597
        %2185 = vmatprep.subr.bf16.mxu0 0
        %2186 = vmatpush2.bf16.msra.mxu0 %v596
        %2187 = vmatprep.mubr.bf16.mxu0 %v2148
        %2188 = vmatmul.mubr.bf16.gmra.mxu0 %v2147
        %v2189 = vpop.f32.mrf.mxu0
        %v2190 = vadd.f32 0.0, %v2189
        %v2191 = vpop.f32.mrf.mxu0
        %v2192 = vpop.f32.mrf.mxu0
        %v2193 = vadd.f32 0.0, %v2192
        %v2194 = vpop.f32.mrf.mxu0
        %2195 = vmatprep.mubr.bf16.mxu0 %v2152
        %2196 = vmatmul.mubr.bf16.gmra.mxu0 %v2151
        %v2197 = vpop.f32.mrf.mxu0
        %v2198 = vadd.f32 0.0, %v2197
        %v2199 = vpop.f32.mrf.mxu0
        %v2200 = vpop.f32.mrf.mxu0
        %v2201 = vadd.f32 0.0, %v2200
        %v2202 = vpop.f32.mrf.mxu0
        %2203 = vdwg.mxu0
        %2204 = vmatprep.subr.bf16.mxu0 0
        %2205 = vmatpush1.bf16.msra.mxu0 %v611
        %2206 = vmatprep.subr.bf16.mxu0 0
        %2207 = vmatpush1.bf16.msra.mxu0 %v610
        %2208 = vmatprep.subr.bf16.mxu0 0
        %2209 = vmatpush1.bf16.msra.mxu0 %v609
        %2210 = vmatprep.subr.bf16.mxu0 0
        %2211 = vmatpush1.bf16.msra.mxu0 %v608
        %2212 = vmatprep.subr.bf16.mxu0 0
        %2213 = vmatpush1.bf16.msra.mxu0 %v607
        %2214 = vmatprep.subr.bf16.mxu0 0
        %2215 = vmatpush1.bf16.msra.mxu0 %v606
        %2216 = vmatprep.subr.bf16.mxu0 0
        %2217 = vmatpush1.bf16.msra.mxu0 %v605
        %2218 = vmatprep.subr.bf16.mxu0 0
        %2219 = vmatpush1.bf16.msra.mxu0 %v604
        %2220 = vmatprep.subr.bf16.mxu0 0
        %2221 = vmatpush2.bf16.msra.mxu0 %v619
        %2222 = vmatprep.subr.bf16.mxu0 0
        %2223 = vmatpush2.bf16.msra.mxu0 %v618
        %2224 = vmatprep.subr.bf16.mxu0 0
        %2225 = vmatpush2.bf16.msra.mxu0 %v617
        %2226 = vmatprep.subr.bf16.mxu0 0
        %2227 = vmatpush2.bf16.msra.mxu0 %v616
        %2228 = vmatprep.subr.bf16.mxu0 0
        %2229 = vmatpush2.bf16.msra.mxu0 %v615
        %2230 = vmatprep.subr.bf16.mxu0 0
        %2231 = vmatpush2.bf16.msra.mxu0 %v614
        %2232 = vmatprep.subr.bf16.mxu0 0
        %2233 = vmatpush2.bf16.msra.mxu0 %v613
        %2234 = vmatprep.subr.bf16.mxu0 0
        %2235 = vmatpush2.bf16.msra.mxu0 %v612
        %2236 = vmatprep.mubr.bf16.mxu0 %v2150
        %2237 = vmatmul.mubr.bf16.gmra.mxu0 %v2149
        %v2238 = vpop.f32.mrf.mxu0
        %v2239 = vadd.f32 %v2190, %v2238
        %v2240 = vpop.f32.mrf.mxu0
        %v2241 = vpop.f32.mrf.mxu0
        %v2242 = vadd.f32 %v2193, %v2241
        %v2243 = vpop.f32.mrf.mxu0
        %2244 = vmatprep.mubr.bf16.mxu0 %v2154
        %2245 = vmatmul.mubr.bf16.gmra.mxu0 %v2153
        %v2246 = vpop.f32.mrf.mxu0
        %v2247 = vadd.f32 %v2198, %v2246
        %v2248 = vpop.f32.mrf.mxu0
        %v2249 = vpop.f32.mrf.mxu0
        %v2250 = vadd.f32 %v2201, %v2249
        %v2251 = vpop.f32.mrf.mxu0
        %2252 = vdwg.mxu0
        %2253 = vmatprep.subr.bf16.mxu0 0
        %2254 = vmatpush1.bf16.msra.mxu0 %v595
        %2255 = vmatprep.subr.bf16.mxu0 0
        %2256 = vmatpush1.bf16.msra.mxu0 %v594
        %2257 = vmatprep.subr.bf16.mxu0 0
        %2258 = vmatpush1.bf16.msra.mxu0 %v593
        %2259 = vmatprep.subr.bf16.mxu0 0
        %2260 = vmatpush1.bf16.msra.mxu0 %v592
        %2261 = vmatprep.subr.bf16.mxu0 0
        %2262 = vmatpush1.bf16.msra.mxu0 %v591
        %2263 = vmatprep.subr.bf16.mxu0 0
        %2264 = vmatpush1.bf16.msra.mxu0 %v590
        %2265 = vmatprep.subr.bf16.mxu0 0
        %2266 = vmatpush1.bf16.msra.mxu0 %v589
        %2267 = vmatprep.subr.bf16.mxu0 0
        %2268 = vmatpush1.bf16.msra.mxu0 %v588
        %2269 = vmatprep.subr.bf16.mxu0 0
        %2270 = vmatpush2.bf16.msra.mxu0 %v603
        %2271 = vmatprep.subr.bf16.mxu0 0
        %2272 = vmatpush2.bf16.msra.mxu0 %v602
        %2273 = vmatprep.subr.bf16.mxu0 0
        %2274 = vmatpush2.bf16.msra.mxu0 %v601
        %2275 = vmatprep.subr.bf16.mxu0 0
        %2276 = vmatpush2.bf16.msra.mxu0 %v600
        %2277 = vmatprep.subr.bf16.mxu0 0
        %2278 = vmatpush2.bf16.msra.mxu0 %v599
        %2279 = vmatprep.subr.bf16.mxu0 0
        %2280 = vmatpush2.bf16.msra.mxu0 %v598
        %2281 = vmatprep.subr.bf16.mxu0 0
        %2282 = vmatpush2.bf16.msra.mxu0 %v597
        %2283 = vmatprep.subr.bf16.mxu0 0
        %2284 = vmatpush2.bf16.msra.mxu0 %v596
        %2285 = vmatprep.mubr.bf16.mxu0 %v2108
        %2286 = vmatmul.mubr.bf16.gmra.mxu0 %v2107
        %v2287 = vpop.f32.mrf.mxu0
        %v2288 = vadd.f32 %v2239, %v2287
        %v2289 = vpop.f32.mrf.mxu0
        %v2290 = vpop.f32.mrf.mxu0
        %v2291 = vadd.f32 %v2242, %v2290
        %v2292 = vpop.f32.mrf.mxu0
        %2293 = vmatprep.mubr.bf16.mxu0 %v2112
        %2294 = vmatmul.mubr.bf16.gmra.mxu0 %v2111
        %v2295 = vpop.f32.mrf.mxu0
        %v2296 = vadd.f32 %v2247, %v2295
        %v2297 = vpop.f32.mrf.mxu0
        %v2298 = vpop.f32.mrf.mxu0
        %v2299 = vadd.f32 %v2250, %v2298
        %v2300 = vpop.f32.mrf.mxu0
        %2301 = vdwg.mxu0
        %2302 = vmatprep.subr.bf16.mxu0 0
        %2303 = vmatpush1.bf16.msra.mxu0 %v611
        %2304 = vmatprep.subr.bf16.mxu0 0
        %2305 = vmatpush1.bf16.msra.mxu0 %v610
        %2306 = vmatprep.subr.bf16.mxu0 0
        %2307 = vmatpush1.bf16.msra.mxu0 %v609
        %2308 = vmatprep.subr.bf16.mxu0 0
        %2309 = vmatpush1.bf16.msra.mxu0 %v608
        %2310 = vmatprep.subr.bf16.mxu0 0
        %2311 = vmatpush1.bf16.msra.mxu0 %v607
        %2312 = vmatprep.subr.bf16.mxu0 0
        %2313 = vmatpush1.bf16.msra.mxu0 %v606
        %2314 = vmatprep.subr.bf16.mxu0 0
        %2315 = vmatpush1.bf16.msra.mxu0 %v605
        %2316 = vmatprep.subr.bf16.mxu0 0
        %2317 = vmatpush1.bf16.msra.mxu0 %v604
        %2318 = vmatprep.subr.bf16.mxu0 0
        %2319 = vmatpush2.bf16.msra.mxu0 %v619
        %2320 = vmatprep.subr.bf16.mxu0 0
        %2321 = vmatpush2.bf16.msra.mxu0 %v618
        %2322 = vmatprep.subr.bf16.mxu0 0
        %2323 = vmatpush2.bf16.msra.mxu0 %v617
        %2324 = vmatprep.subr.bf16.mxu0 0
        %2325 = vmatpush2.bf16.msra.mxu0 %v616
        %2326 = vmatprep.subr.bf16.mxu0 0
        %2327 = vmatpush2.bf16.msra.mxu0 %v615
        %2328 = vmatprep.subr.bf16.mxu0 0
        %2329 = vmatpush2.bf16.msra.mxu0 %v614
        %2330 = vmatprep.subr.bf16.mxu0 0
        %2331 = vmatpush2.bf16.msra.mxu0 %v613
        %2332 = vmatprep.subr.bf16.mxu0 0
        %2333 = vmatpush2.bf16.msra.mxu0 %v612
        %2334 = vmatprep.mubr.bf16.mxu0 %v2110
        %2335 = vmatmul.mubr.bf16.gmra.mxu0 %v2109
        %v2336 = vpop.f32.mrf.mxu0
        %v2337 = vadd.f32 %v2288, %v2336
        %v2338 = vpop.f32.mrf.mxu0
        %v2339 = vpop.f32.mrf.mxu0
        %v2340 = vadd.f32 %v2291, %v2339
        %v2341 = vpop.f32.mrf.mxu0
        %2342 = vmatprep.mubr.bf16.mxu0 %v2114
        %2343 = vmatmul.mubr.bf16.gmra.mxu0 %v2113
        %v2344 = vpop.f32.mrf.mxu0
        %v2345 = vadd.f32 %v2296, %v2344
        %v2346 = vpop.f32.mrf.mxu0
        %v2347 = vpop.f32.mrf.mxu0
        %v2348 = vadd.f32 %v2299, %v2347
        %v2349 = vpop.f32.mrf.mxu0
        %2350 = vdwg.mxu0
        %v2351 = vmul.f32 %v2337, 0.0625
        %v2352 = vmul.f32 %v2340, 0.0625
        %v2353 = vmul.f32 %v2345, 0.0625
        %v2354 = vmul.f32 %v2348, 0.0625
        %v2355 = vmul.f32 %v2351, %v2351
        %v2356 = vmul.f32 %v2352, %v2352
        %v2357 = vsub.f32 %v2353, %v2355
        %v2358 = vsub.f32 %v2354, %v2356
        %v2359 = vadd.f32 %v2357, 1e-05
        %v2360 = vadd.f32 %v2358, 1e-05
        %v2361 = vrsqrt.pop %v2359
        %v2362 = vrsqrt.pop %v2360
        %v2363 = vmul.f32 %v2351, %v2361
        %v2364 = vmul.f32 %v2352, %v2362
        %v2365 = vpack.c.bf16 %v2362, %v2361
        %v2366 = vpack.c.bf16 %v2364, %v2363
        %v2367 = vunpack.c.l.bf16 %v2365
        %v2368 = vunpack.c.h.bf16 %v2365
        %v2369 = vunpack.c.l.bf16 %v2366
        %v2370 = vunpack.c.h.bf16 %v2366
        %v2371 = vsub.f32 %v2361, %v2367
        %v2372 = vsub.f32 %v2362, %v2368
        %v2373 = vsub.f32 %v2363, %v2369
        %v2374 = vsub.f32 %v2364, %v2370
        %v2375 = vpack.c.bf16 %v2372, %v2371
        %v2376 = vpack.c.bf16 %v2374, %v2373
        %v2378 = vsel %vm914, %v2375, 0
        %v2381 = vsel %vm914, %v2376, 0
        %2383 = vmatprep.subr.bf16.mxu0 0
        %2384 = vmatpush1.bf16.msra.mxu0 0
        %2385 = vmatprep.subr.bf16.mxu0 0
        %2386 = vmatpush1.bf16.msra.mxu0 0
        %2387 = vmatprep.subr.bf16.mxu0 0
        %2388 = vmatpush1.bf16.msra.mxu0 0
        %2389 = vmatprep.subr.bf16.mxu0 0
        %2390 = vmatpush1.bf16.msra.mxu0 0
        %2391 = vmatprep.subr.bf16.mxu0 0
        %2392 = vmatpush1.bf16.msra.mxu0 0
        %2393 = vmatprep.subr.bf16.mxu0 0
        %2394 = vmatpush1.bf16.msra.mxu0 0
        %2395 = vmatprep.subr.bf16.mxu0 %v903
        %2396 = vmatpush1.bf16.msra.mxu0 %v902
        %2397 = vmatprep.subr.bf16.mxu0 %v899
        %2398 = vmatpush1.bf16.msra.mxu0 %v898
        %2399 = vmatprep.subr.bf16.mxu0 0
        %2400 = vmatpush2.bf16.msra.mxu0 0
        %2401 = vmatprep.subr.bf16.mxu0 0
        %2402 = vmatpush2.bf16.msra.mxu0 0
        %2403 = vmatprep.subr.bf16.mxu0 0
        %2404 = vmatpush2.bf16.msra.mxu0 0
        %2405 = vmatprep.subr.bf16.mxu0 0
        %2406 = vmatpush2.bf16.msra.mxu0 0
        %2407 = vmatprep.subr.bf16.mxu0 0
        %2408 = vmatpush2.bf16.msra.mxu0 0
        %2409 = vmatprep.subr.bf16.mxu0 0
        %2410 = vmatpush2.bf16.msra.mxu0 0
        %2411 = vmatprep.subr.bf16.mxu0 0
        %2412 = vmatpush2.bf16.msra.mxu0 0
        %2413 = vmatprep.subr.bf16.mxu0 0
        %2414 = vmatpush2.bf16.msra.mxu0 0
        %2415 = vmatprep.mubr.bf16.mxu0 0
        %2416 = vmatmul.mubr.bf16.gmra.mxu0 %v2378
        %v2417 = vpop.f32.mrf.mxu0
        %v2418 = vadd.f32 0.0, %v2417
        %v2419 = vpop.f32.mrf.mxu0
        %v2420 = vadd.f32 0.0, %v2419
        %v2421 = vpop.f32.mrf.mxu0
        %v2422 = vadd.f32 0.0, %v2421
        %v2423 = vpop.f32.mrf.mxu0
        %v2424 = vadd.f32 0.0, %v2423
        %2425 = vmatprep.mubr.bf16.mxu0 0
        %2426 = vmatmul.mubr.bf16.gmra.mxu0 %v2381
        %v2427 = vpop.f32.mrf.mxu0
        %v2428 = vadd.f32 0.0, %v2427
        %v2429 = vpop.f32.mrf.mxu0
        %v2430 = vadd.f32 0.0, %v2429
        %v2431 = vpop.f32.mrf.mxu0
        %v2432 = vadd.f32 0.0, %v2431
        %v2433 = vpop.f32.mrf.mxu0
        %v2434 = vadd.f32 0.0, %v2433
        %2435 = vdwg.mxu0
        %2436 = vmatprep.subr.bf16.mxu0 0
        %2437 = vmatpush1.bf16.msra.mxu0 0
        %2438 = vmatprep.subr.bf16.mxu0 0
        %2439 = vmatpush1.bf16.msra.mxu0 0
        %2440 = vmatprep.subr.bf16.mxu0 0
        %2441 = vmatpush1.bf16.msra.mxu0 0
        %2442 = vmatprep.subr.bf16.mxu0 0
        %2443 = vmatpush1.bf16.msra.mxu0 0
        %2444 = vmatprep.subr.bf16.mxu0 0
        %2445 = vmatpush1.bf16.msra.mxu0 0
        %2446 = vmatprep.subr.bf16.mxu0 0
        %2447 = vmatpush1.bf16.msra.mxu0 0
        %2448 = vmatprep.subr.bf16.mxu0 %v905
        %2449 = vmatpush1.bf16.msra.mxu0 %v904
        %2450 = vmatprep.subr.bf16.mxu0 %v901
        %2451 = vmatpush1.bf16.msra.mxu0 %v900
        %2452 = vmatprep.subr.bf16.mxu0 0
        %2453 = vmatpush2.bf16.msra.mxu0 0
        %2454 = vmatprep.subr.bf16.mxu0 0
        %2455 = vmatpush2.bf16.msra.mxu0 0
        %2456 = vmatprep.subr.bf16.mxu0 0
        %2457 = vmatpush2.bf16.msra.mxu0 0
        %2458 = vmatprep.subr.bf16.mxu0 0
        %2459 = vmatpush2.bf16.msra.mxu0 0
        %2460 = vmatprep.subr.bf16.mxu0 0
        %2461 = vmatpush2.bf16.msra.mxu0 0
        %2462 = vmatprep.subr.bf16.mxu0 0
        %2463 = vmatpush2.bf16.msra.mxu0 0
        %2464 = vmatprep.subr.bf16.mxu0 0
        %2465 = vmatpush2.bf16.msra.mxu0 0
        %2466 = vmatprep.subr.bf16.mxu0 0
        %2467 = vmatpush2.bf16.msra.mxu0 0
        %2468 = vmatprep.mubr.bf16.mxu0 0
        %2469 = vmatmul.mubr.bf16.gmra.mxu0 %v2378
        %v2470 = vpop.f32.mrf.mxu0
        %v2471 = vadd.f32 0.0, %v2470
        %v2472 = vpop.f32.mrf.mxu0
        %v2473 = vadd.f32 0.0, %v2472
        %v2474 = vpop.f32.mrf.mxu0
        %v2475 = vadd.f32 0.0, %v2474
        %v2476 = vpop.f32.mrf.mxu0
        %v2477 = vadd.f32 0.0, %v2476
        %2478 = vmatprep.mubr.bf16.mxu0 0
        %2479 = vmatmul.mubr.bf16.gmra.mxu0 %v2381
        %v2480 = vpop.f32.mrf.mxu0
        %v2481 = vadd.f32 0.0, %v2480
        %v2482 = vpop.f32.mrf.mxu0
        %v2483 = vadd.f32 0.0, %v2482
        %v2484 = vpop.f32.mrf.mxu0
        %v2485 = vadd.f32 0.0, %v2484
        %v2486 = vpop.f32.mrf.mxu0
        %v2487 = vadd.f32 0.0, %v2486
        %2488 = vdwg.mxu0
        %v2490 = vsel %vm914, %v2365, 0
        %v2493 = vsel %vm914, %v2366, 0
        %2495 = vmatprep.subr.bf16.mxu0 0
        %2496 = vmatpush1.bf16.msra.mxu0 0
        %2497 = vmatprep.subr.bf16.mxu0 0
        %2498 = vmatpush1.bf16.msra.mxu0 0
        %2499 = vmatprep.subr.bf16.mxu0 0
        %2500 = vmatpush1.bf16.msra.mxu0 0
        %2501 = vmatprep.subr.bf16.mxu0 0
        %2502 = vmatpush1.bf16.msra.mxu0 0
        %2503 = vmatprep.subr.bf16.mxu0 0
        %2504 = vmatpush1.bf16.msra.mxu0 0
        %2505 = vmatprep.subr.bf16.mxu0 0
        %2506 = vmatpush1.bf16.msra.mxu0 0
        %2507 = vmatprep.subr.bf16.mxu0 %v903
        %2508 = vmatpush1.bf16.msra.mxu0 %v902
        %2509 = vmatprep.subr.bf16.mxu0 %v899
        %2510 = vmatpush1.bf16.msra.mxu0 %v898
        %2511 = vmatprep.subr.bf16.mxu0 0
        %2512 = vmatpush2.bf16.msra.mxu0 0
        %2513 = vmatprep.subr.bf16.mxu0 0
        %2514 = vmatpush2.bf16.msra.mxu0 0
        %2515 = vmatprep.subr.bf16.mxu0 0
        %2516 = vmatpush2.bf16.msra.mxu0 0
        %2517 = vmatprep.subr.bf16.mxu0 0
        %2518 = vmatpush2.bf16.msra.mxu0 0
        %2519 = vmatprep.subr.bf16.mxu0 0
        %2520 = vmatpush2.bf16.msra.mxu0 0
        %2521 = vmatprep.subr.bf16.mxu0 0
        %2522 = vmatpush2.bf16.msra.mxu0 0
        %2523 = vmatprep.subr.bf16.mxu0 0
        %2524 = vmatpush2.bf16.msra.mxu0 0
        %2525 = vmatprep.subr.bf16.mxu0 0
        %2526 = vmatpush2.bf16.msra.mxu0 0
        %2527 = vmatprep.mubr.bf16.mxu0 0
        %2528 = vmatmul.mubr.bf16.gmra.mxu0 %v2490
        %v2529 = vpop.f32.mrf.mxu0
        %v2530 = vadd.f32 %v2418, %v2529
        %v2531 = vpop.f32.mrf.mxu0
        %v2532 = vadd.f32 %v2420, %v2531
        %v2533 = vpop.f32.mrf.mxu0
        %v2534 = vadd.f32 %v2422, %v2533
        %v2535 = vpop.f32.mrf.mxu0
        %v2536 = vadd.f32 %v2424, %v2535
        %2537 = vmatprep.mubr.bf16.mxu0 0
        %2538 = vmatmul.mubr.bf16.gmra.mxu0 %v2493
        %v2539 = vpop.f32.mrf.mxu0
        %v2540 = vadd.f32 %v2428, %v2539
        %v2541 = vpop.f32.mrf.mxu0
        %v2542 = vadd.f32 %v2430, %v2541
        %v2543 = vpop.f32.mrf.mxu0
        %v2544 = vadd.f32 %v2432, %v2543
        %v2545 = vpop.f32.mrf.mxu0
        %v2546 = vadd.f32 %v2434, %v2545
        %2547 = vdwg.mxu0
        %2548 = vmatprep.subr.bf16.mxu0 0
        %2549 = vmatpush1.bf16.msra.mxu0 0
        %2550 = vmatprep.subr.bf16.mxu0 0
        %2551 = vmatpush1.bf16.msra.mxu0 0
        %2552 = vmatprep.subr.bf16.mxu0 0
        %2553 = vmatpush1.bf16.msra.mxu0 0
        %2554 = vmatprep.subr.bf16.mxu0 0
        %2555 = vmatpush1.bf16.msra.mxu0 0
        %2556 = vmatprep.subr.bf16.mxu0 0
        %2557 = vmatpush1.bf16.msra.mxu0 0
        %2558 = vmatprep.subr.bf16.mxu0 0
        %2559 = vmatpush1.bf16.msra.mxu0 0
        %2560 = vmatprep.subr.bf16.mxu0 %v905
        %2561 = vmatpush1.bf16.msra.mxu0 %v904
        %2562 = vmatprep.subr.bf16.mxu0 %v901
        %2563 = vmatpush1.bf16.msra.mxu0 %v900
        %2564 = vmatprep.subr.bf16.mxu0 0
        %2565 = vmatpush2.bf16.msra.mxu0 0
        %2566 = vmatprep.subr.bf16.mxu0 0
        %2567 = vmatpush2.bf16.msra.mxu0 0
        %2568 = vmatprep.subr.bf16.mxu0 0
        %2569 = vmatpush2.bf16.msra.mxu0 0
        %2570 = vmatprep.subr.bf16.mxu0 0
        %2571 = vmatpush2.bf16.msra.mxu0 0
        %2572 = vmatprep.subr.bf16.mxu0 0
        %2573 = vmatpush2.bf16.msra.mxu0 0
        %2574 = vmatprep.subr.bf16.mxu0 0
        %2575 = vmatpush2.bf16.msra.mxu0 0
        %2576 = vmatprep.subr.bf16.mxu0 0
        %2577 = vmatpush2.bf16.msra.mxu0 0
        %2578 = vmatprep.subr.bf16.mxu0 0
        %2579 = vmatpush2.bf16.msra.mxu0 0
        %2580 = vmatprep.mubr.bf16.mxu0 0
        %2581 = vmatmul.mubr.bf16.gmra.mxu0 %v2490
        %v2582 = vpop.f32.mrf.mxu0
        %v2583 = vadd.f32 %v2471, %v2582
        %v2584 = vpop.f32.mrf.mxu0
        %v2585 = vadd.f32 %v2473, %v2584
        %v2586 = vpop.f32.mrf.mxu0
        %v2587 = vadd.f32 %v2475, %v2586
        %v2588 = vpop.f32.mrf.mxu0
        %v2589 = vadd.f32 %v2477, %v2588
        %2590 = vmatprep.mubr.bf16.mxu0 0
        %2591 = vmatmul.mubr.bf16.gmra.mxu0 %v2493
        %v2592 = vpop.f32.mrf.mxu0
        %v2593 = vadd.f32 %v2481, %v2592
        %v2594 = vpop.f32.mrf.mxu0
        %v2595 = vadd.f32 %v2483, %v2594
        %v2596 = vpop.f32.mrf.mxu0
        %v2597 = vadd.f32 %v2485, %v2596
        %v2598 = vpop.f32.mrf.mxu0
        %v2599 = vadd.f32 %v2487, %v2598
        %2600 = vdwg.mxu0
        %v2601 = vmul.f32 %v2048, %v2530
        %v2602 = vmul.f32 %v2050, %v2532
        %v2603 = vmul.f32 %v2091, %v2583
        %v2604 = vmul.f32 %v2093, %v2585
        %v2605 = vmul.f32 %v2052, %v2534
        %v2606 = vmul.f32 %v2054, %v2536
        %v2607 = vmul.f32 %v2095, %v2587
        %v2608 = vmul.f32 %v2097, %v2589
        %v2609 = vsub.f32 %v2601, %v2540
        %v2610 = vsub.f32 %v2602, %v2542
        %v2611 = vsub.f32 %v2603, %v2593
        %v2612 = vsub.f32 %v2604, %v2595
        %v2613 = vsub.f32 %v2605, %v2544
        %v2614 = vsub.f32 %v2606, %v2546
        %v2615 = vsub.f32 %v2607, %v2597
        %v2616 = vsub.f32 %v2608, %v2599
        %v2617 = vlaneseq
        %v2618 = vshrl.u32 %v2617, 7
        %v2619 = vsub.s32 4, %v2618
        %v2620 = vrot.slane %v322, %v2619
        %v2621 = vlaneseq
        %v2622 = vshrl.u32 %v2621, 7
        %v2623 = vsub.s32 4, %v2622
        %v2624 = vrot.slane %v323, %v2623
        %v2625 = vlaneseq
        %v2626 = vshrl.u32 %v2625, 7
        %v2627 = vsub.s32 4, %v2626
        %v2628 = vrot.slane %v324, %v2627
        %v2629 = vlaneseq
        %v2630 = vshrl.u32 %v2629, 7
        %v2631 = vsub.s32 4, %v2630
        %v2632 = vrot.slane %v325, %v2631
        %v2633 = vmul.f32 %v2609, %v2620
        %v2634 = vmul.f32 %v2610, %v2624
        %v2635 = vmul.f32 %v2611, %v2628
        %v2636 = vmul.f32 %v2612, %v2632
        %v2637 = vmul.f32 %v2613, %v2620
        %v2638 = vmul.f32 %v2614, %v2624
        %v2639 = vmul.f32 %v2615, %v2628
        %v2640 = vmul.f32 %v2616, %v2632
        %v2641 = vlaneseq
        %v2642 = vshrl.u32 %v2641, 7
        %v2643 = vsub.s32 5, %v2642
        %v2644 = vrot.slane %v322, %v2643
        %v2645 = vlaneseq
        %v2646 = vshrl.u32 %v2645, 7
        %v2647 = vsub.s32 5, %v2646
        %v2648 = vrot.slane %v323, %v2647
        %v2649 = vlaneseq
        %v2650 = vshrl.u32 %v2649, 7
        %v2651 = vsub.s32 5, %v2650
        %v2652 = vrot.slane %v324, %v2651
        %v2653 = vlaneseq
        %v2654 = vshrl.u32 %v2653, 7
        %v2655 = vsub.s32 5, %v2654
        %v2656 = vrot.slane %v325, %v2655
        %v2657 = vadd.f32 %v2633, %v2644
        %v2658 = vadd.f32 %v2634, %v2648
        %v2659 = vadd.f32 %v2635, %v2652
        %v2660 = vadd.f32 %v2636, %v2656
        %v2661 = vadd.f32 %v2637, %v2644
        %v2662 = vadd.f32 %v2638, %v2648
        %v2663 = vadd.f32 %v2639, %v2652
        %v2664 = vadd.f32 %v2640, %v2656
        %v2665 = vmax.f32 %v2657, 0.0
        %v2666 = vmax.f32 %v2658, 0.0
        %v2667 = vmax.f32 %v2659, 0.0
        %v2668 = vmax.f32 %v2660, 0.0
        %v2669 = vmax.f32 %v2661, 0.0
        %v2670 = vmax.f32 %v2662, 0.0
        %v2671 = vmax.f32 %v2663, 0.0
        %v2672 = vmax.f32 %v2664, 0.0
        %v2673 = vpack.c.bf16 %v2669, %v2665
        %v2674 = vpack.c.bf16 %v2670, %v2666
        %v2675 = vpack.c.bf16 %v2671, %v2667
        %v2676 = vpack.c.bf16 %v2672, %v2668
        %v2677 = vld [vmem:[%s6] sm:$0xf]
        %v2678 = vld [vmem:[%s6 + $0x4] sm:$0xf]
        %v2681 = vunpack.c.l.b16 %v2677
        %v2682 = vunpack.c.l.b16 %v2678
        %v2683 = vpack.c.b16 %v2682, %v2681
        %v2685 = vsel %vm1222, %v2683, 0
        %2687 = vmatprep.subr.bf16.mxu0 0
        %2688 = vmatpush1.bf16.msra.mxu0 0
        %2689 = vmatprep.subr.bf16.mxu0 0
        %2690 = vmatpush1.bf16.msra.mxu0 0
        %2691 = vmatprep.subr.bf16.mxu0 0
        %2692 = vmatpush1.bf16.msra.mxu0 0
        %2693 = vmatprep.subr.bf16.mxu0 0
        %2694 = vmatpush1.bf16.msra.mxu0 0
        %2695 = vmatprep.subr.bf16.mxu0 0
        %2696 = vmatpush1.bf16.msra.mxu0 0
        %2697 = vmatprep.subr.bf16.mxu0 0
        %2698 = vmatpush1.bf16.msra.mxu0 0
        %2699 = vmatprep.subr.bf16.mxu0 %v1228
        %2700 = vmatpush1.bf16.msra.mxu0 %v1228
        %2701 = vmatprep.subr.bf16.mxu0 %v2674
        %2702 = vmatpush1.bf16.msra.mxu0 %v2673
        %2703 = vmatprep.subr.bf16.mxu0 0
        %2704 = vmatpush2.bf16.msra.mxu0 0
        %2705 = vmatprep.subr.bf16.mxu0 0
        %2706 = vmatpush2.bf16.msra.mxu0 0
        %2707 = vmatprep.subr.bf16.mxu0 0
        %2708 = vmatpush2.bf16.msra.mxu0 0
        %2709 = vmatprep.subr.bf16.mxu0 0
        %2710 = vmatpush2.bf16.msra.mxu0 0
        %2711 = vmatprep.subr.bf16.mxu0 0
        %2712 = vmatpush2.bf16.msra.mxu0 0
        %2713 = vmatprep.subr.bf16.mxu0 0
        %2714 = vmatpush2.bf16.msra.mxu0 0
        %2715 = vmatprep.subr.bf16.mxu0 0
        %2716 = vmatpush2.bf16.msra.mxu0 0
        %2717 = vmatprep.subr.bf16.mxu0 0
        %2718 = vmatpush2.bf16.msra.mxu0 0
        %2719 = vmatprep.mubr.bf16.mxu0 0
        %2720 = vmatmul.mubr.bf16.gmra.mxu0 %v2685
        %v2721 = vpop.f32.mrf.mxu0
        %v2722 = vadd.f32 %v314, %v2721
        %v2723 = vpop.f32.mrf.mxu0
        %v2724 = vadd.f32 %v315, %v2723
        %v2725 = vpop.f32.mrf.mxu0
        %v2726 = vadd.f32 %v318, %v2725
        %v2727 = vpop.f32.mrf.mxu0
        %v2728 = vadd.f32 %v319, %v2727
        %2729 = vdwg.mxu0
        %2730 = vmatprep.subr.bf16.mxu0 0
        %2731 = vmatpush1.bf16.msra.mxu0 0
        %2732 = vmatprep.subr.bf16.mxu0 0
        %2733 = vmatpush1.bf16.msra.mxu0 0
        %2734 = vmatprep.subr.bf16.mxu0 0
        %2735 = vmatpush1.bf16.msra.mxu0 0
        %2736 = vmatprep.subr.bf16.mxu0 0
        %2737 = vmatpush1.bf16.msra.mxu0 0
        %2738 = vmatprep.subr.bf16.mxu0 0
        %2739 = vmatpush1.bf16.msra.mxu0 0
        %2740 = vmatprep.subr.bf16.mxu0 0
        %2741 = vmatpush1.bf16.msra.mxu0 0
        %2742 = vmatprep.subr.bf16.mxu0 %v1228
        %2743 = vmatpush1.bf16.msra.mxu0 %v1228
        %2744 = vmatprep.subr.bf16.mxu0 %v2676
        %2745 = vmatpush1.bf16.msra.mxu0 %v2675
        %2746 = vmatprep.subr.bf16.mxu0 0
        %2747 = vmatpush2.bf16.msra.mxu0 0
        %2748 = vmatprep.subr.bf16.mxu0 0
        %2749 = vmatpush2.bf16.msra.mxu0 0
        %2750 = vmatprep.subr.bf16.mxu0 0
        %2751 = vmatpush2.bf16.msra.mxu0 0
        %2752 = vmatprep.subr.bf16.mxu0 0
        %2753 = vmatpush2.bf16.msra.mxu0 0
        %2754 = vmatprep.subr.bf16.mxu0 0
        %2755 = vmatpush2.bf16.msra.mxu0 0
        %2756 = vmatprep.subr.bf16.mxu0 0
        %2757 = vmatpush2.bf16.msra.mxu0 0
        %2758 = vmatprep.subr.bf16.mxu0 0
        %2759 = vmatpush2.bf16.msra.mxu0 0
        %2760 = vmatprep.subr.bf16.mxu0 0
        %2761 = vmatpush2.bf16.msra.mxu0 0
        %2762 = vmatprep.mubr.bf16.mxu0 0
        %2763 = vmatmul.mubr.bf16.gmra.mxu0 %v2685
        %v2764 = vpop.f32.mrf.mxu0
        %v2765 = vadd.f32 %v316, %v2764
        %v2766 = vpop.f32.mrf.mxu0
        %v2767 = vadd.f32 %v317, %v2766
        %v2768 = vpop.f32.mrf.mxu0
        %v2769 = vadd.f32 %v320, %v2768
        %v2770 = vpop.f32.mrf.mxu0
        %v2771 = vadd.f32 %v321, %v2770
        %2772 = vdwg.mxu0
        %2773 = vst [vmem:[%s310] sm:$0xff] %v2722
        %2774 = vst [vmem:[%s310 + $0x8] sm:$0xff] %v2724
        %2775 = vst [vmem:[%s310 + $0x10] sm:$0xff] %v2765
        %2776 = vst [vmem:[%s310 + $0x18] sm:$0xff] %v2767
        %2777 = vst [vmem:[%s310 + $0x20] sm:$0xff] %v2726
        %2778 = vst [vmem:[%s310 + $0x28] sm:$0xff] %v2728
        %2779 = vst [vmem:[%s310 + $0x30] sm:$0xff] %v2769
        %2780 = vst [vmem:[%s310 + $0x38] sm:$0xff] %v2771
        %s2781 = sand.u32 %s181, 1
        %s2782 = scalar_lea.sflag [#allocation4], %s2781
        %s2783 = sand.u32 %s181, 1
        %s2784 = smul.addr %s2783, 64
        %s2785 = scalar_lea.vmem [#allocation3], %s2784
        // Predicated region
        $region72: #{tpu_custom_call.1} parent=66 // pred_check
          %p2786 = pneg %p191
        $region73: #{tpu_custom_call.1} parent=66 // pred_check_branch
          %2788 = sbr.rel (%p2786) target = $region75
        $region74: #{tpu_custom_call.1} parent=66 // pred_region
          %s2789 = smul.u32 4, %s21
          %s2791 = ssub.s32 1024, 1024
          %2792 = vsyncadd %s2782, %s2791
          %s2793 = smul.addr %s2789, 128
          %s2794 = scalar_lea.hbm %s7, %s2793
          %s2795 = sshll.u32 %s2785, 4
          %s2796 = int_to_ptr.vmem [resolvable:$true] %s2795
          %2801 = dma.vmem_to_hbm [thread:$0]  %s2796, 1024, %s2794, %s2782, 512, 1024, 32
        $region75: #{tpu_custom_call.1} parent=66 // pred_fallthru
          _
      $region67: #{tpu_custom_call.1} parent=5 // pred_fallthru
        _
      %p2802 = scmp.le.s32.totalorder 2, %s16
      // Predicated region
      $region76: #{tpu_custom_call.1} parent=5 // pred_check
        %p2803 = pneg %p2802
      $region77: #{tpu_custom_call.1} parent=5 // pred_check_branch
        %2805 = sbr.rel (%p2803) target = $region79
      $region78: #{tpu_custom_call.1} parent=5 // pred_region
        %s2806 = ssub.s32 %s16, 2
        // Predicated region
        $region80: #{tpu_custom_call.1} parent=78 // pred_check
          %p2807 = pneg %p197
        $region81: #{tpu_custom_call.1} parent=78 // pred_check_branch
          %2809 = sbr.rel (%p2807) target = $region83
        $region82: #{tpu_custom_call.1} parent=78 // pred_region
          %s2810 = sand.u32 %s182, 1
          %s2811 = scalar_lea.sflag [#allocation4], %s2810
          %s2812 = sand.u32 %s182, 1
          %s2813 = smul.addr %s2812, 64
          %s2814 = scalar_lea.vmem [#allocation3], %s2813
          %2815 = dma.done %s2811, 1024
        $region83: #{tpu_custom_call.1} parent=78 // pred_fallthru
          _
      $region79: #{tpu_custom_call.1} parent=5 // pred_fallthru
        _
    $region6: #{tpu_custom_call.1} parent=1 // loop_footer
      %s20 = sadd.s32 1, %s16
    $region7: #{tpu_custom_call.1} parent=1 // loop_footer_branch
      %15 = sbr.rel target = $region3
    $region8: #{tpu_custom_call.1} parent=1 // loop_exit
      _
    %2816 = vsyncpa [#allocation4], 1
    %s2817 = scalar_lea.sflag [#allocation4], 1
    %2818 = vsyncpa %s2817, 1

</llo_original>
